<compile_context>
chip_gen: v6e
topology: v6e:2x2x1
jax: 0.10.0
libtpu: 0.0.40
codegen_flags: <defaults>
</compile_context>

<pallas_src>
import jax
import jax.numpy as jnp
from jax.experimental import pallas as pl
from jax.experimental.pallas import tpu as pltpu


# ----------------------------- Pallas kernels -----------------------------

def _matmul_bias_kernel(x_ref, w_ref, b_ref, o_ref):
    o_ref[...] = (jnp.dot(x_ref[...], w_ref[...],
                          preferred_element_type=jnp.float32) + b_ref[...])


def matmul_bias(x, w, b):
    """y = x @ w + b.  Single VMEM block, except for row-rich operands
    (only conv1 here) which get a 2-way 'parallel' M grid for v7x megacore."""
    M, K = x.shape
    K2, N = w.shape
    assert K == K2 and b.shape == (1, N), (x.shape, w.shape, b.shape)
    if M >= 256 and M % 16 == 0:
        tm = M // 2
        return pl.pallas_call(
            _matmul_bias_kernel,
            out_shape=jax.ShapeDtypeStruct((M, N), jnp.float32),
            grid=(2,),
            in_specs=[pl.BlockSpec((tm, K), lambda i: (i, 0)),
                      pl.BlockSpec((K, N), lambda i: (0, 0)),
                      pl.BlockSpec((1, N), lambda i: (0, 0))],
            out_specs=pl.BlockSpec((tm, N), lambda i: (i, 0)),
            compiler_params=pltpu.CompilerParams(
                dimension_semantics=("parallel",)),
        )(x, w, b)
    vm = pl.BlockSpec(memory_space=pltpu.MemorySpace.VMEM)
    return pl.pallas_call(
        _matmul_bias_kernel,
        out_shape=jax.ShapeDtypeStruct((M, N), jnp.float32),
        in_specs=[vm, vm, vm],
        out_specs=vm,
    )(x, w, b)


def _dense_middle_kernel(enc_ref, hcat_ref, uf_ref, us_ref,
                         l4w_ref, l4b_ref, l5w_ref, l5b_ref,
                         wxf_ref, wrf_ref, bf_ref, wrs_ref, bs_ref,
                         h2vw_ref, h2vb_ref, h2dw_ref, h2db_ref,
                         l7w_ref, l7b_ref, tau_ref,
                         vec_ref, dec_ref, nhf_ref, nhs_ref, nuf_ref, nus_ref):
    """Fused l4 -> l5 -> VMTRNN cell -> heads -> l7 (everything stays in VMEM)."""
    f32 = jnp.float32
    # encoder tail (no activations, matching the PyTorch module)
    h4 = jnp.dot(enc_ref[...], l4w_ref[...], preferred_element_type=f32) + l4b_ref[...]
    x10 = jnp.dot(h4, l5w_ref[...], preferred_element_type=f32) + l5b_ref[...]

    # VMTRNN leaky-integrator cell (see TODO at top of file).
    # hcat = [xv, h_fast, h_slow] (concatenated once at the JAX level);
    # w_rest_* are pre-concatenated with a zero xv-block for the slow pathway.
    hcat = hcat_ref[...]
    zf = (jnp.dot(x10, wxf_ref[...], preferred_element_type=f32)
          + jnp.dot(hcat, wrf_ref[...], preferred_element_type=f32)
          + bf_ref[...])
    zs = jnp.dot(hcat, wrs_ref[...], preferred_element_type=f32) + bs_ref[...]
    inv_f = 1.0 / tau_ref[0]
    inv_s = 1.0 / tau_ref[1]
    new_uf = (1.0 - inv_f) * uf_ref[...] + inv_f * zf
    new_us = (1.0 - inv_s) * us_ref[...] + inv_s * zs
    new_hf = jnp.tanh(new_uf)
    new_hs = jnp.tanh(new_us)
    nuf_ref[...] = new_uf
    nus_ref[...] = new_us
    nhf_ref[...] = new_hf
    nhs_ref[...] = new_hs

    # heads + decoder dense layer
    vec_ref[...] = (jnp.dot(new_hf, h2vw_ref[...], preferred_element_type=f32)
                    + h2vb_ref[...])
    feat = (jnp.dot(new_hf, h2dw_ref[...], preferred_element_type=f32)
            + h2db_ref[...])
    dec_ref[...] = (jnp.dot(feat, l7w_ref[...], preferred_element_type=f32)
                    + l7b_ref[...])


def dense_middle(enc, xv, h_fast, h_slow, u_fast, u_slow, kp, tau_f, tau_s):
    B = enc.shape[0]
    cf = u_fast.shape[1]
    cs = u_slow.shape[1]
    hcat = jnp.concatenate([xv, h_fast, h_slow], axis=1)    # (B, 2+cf+cs)
    tau = jnp.stack([tau_f, tau_s]).astype(jnp.float32)     # (2,) scalars -> SMEM
    vm = pl.BlockSpec(memory_space=pltpu.MemorySpace.VMEM)
    sm = pl.BlockSpec(memory_space=pltpu.MemorySpace.SMEM)
    out_shapes = (
        jax.ShapeDtypeStruct((B, 2), jnp.float32),      # out_vec
        jax.ShapeDtypeStruct((B, 288), jnp.float32),    # decoder features (NHWC order)
        jax.ShapeDtypeStruct((B, cf), jnp.float32),     # new_h_fast
        jax.ShapeDtypeStruct((B, cs), jnp.float32),     # new_h_slow
        jax.ShapeDtypeStruct((B, cf), jnp.float32),     # new_u_fast
        jax.ShapeDtypeStruct((B, cs), jnp.float32),     # new_u_slow
    )
    return pl.pallas_call(
        _dense_middle_kernel,
        out_shape=out_shapes,
        in_specs=[vm] * 19 + [sm],
        out_specs=(vm,) * 6,
    )(enc, hcat, u_fast, u_slow,
      kp["l4_w"], kp["l4_b"], kp["l5_w"], kp["l5_b"],
      kp["w_x2f_im"], kp["w_rest_f"], kp["b_f"], kp["w_rest_s"], kp["b_s"],
      kp["h2v_w"], kp["h2v_b"], kp["h2d_w"], kp["h2d_b"],
      kp["l7_w"], kp["l7_b"], tau)


# ------------------------- conv glue (NHWC, im2col) -------------------------

def _im2col_nhwc(x, k, s, p):
    """x: (B,H,W,C) NHWC -> patches (B*Ho*Wo, k*k*C); feature order (ky,kx,c)."""
    B, H, W, C = x.shape
    xp = jnp.pad(x, ((0, 0), (p, p), (p, p), (0, 0))) if p else x
    Ho = (H + 2 * p - k) // s + 1
    Wo = (W + 2 * p - k) // s + 1
    cols = [xp[:, i:i + (Ho - 1) * s + 1:s, j:j + (Wo - 1) * s + 1:s, :]
            for i in range(k) for j in range(k)]
    patches = jnp.concatenate(cols, axis=-1)                 # (B,Ho,Wo,k*k*C)
    return patches.reshape(B * Ho * Wo, k * k * C), Ho, Wo


def conv2d_nhwc(x, w_packed, b_packed, k, s, p):
    """Conv2d with pre-packed weight (k*k*Cin, Cout); NHWC in / NHWC out."""
    B = x.shape[0]
    Cout = w_packed.shape[1]
    patches, Ho, Wo = _im2col_nhwc(x, k, s, p)
    y = matmul_bias(patches, w_packed, b_packed)             # Pallas matmul
    return y.reshape(B, Ho, Wo, Cout)


def conv_transpose2d_nhwc(x, w_packed, b_packed, out_pad):
    """Stride-2, k=4, pad=1 ConvTranspose2d via polyphase decomposition:
    one k=2 im2col over the 1-padded input, one Pallas matmul producing the
    four output parity planes, then an interleave + crop."""
    B, Hin, Win, Cin = x.shape
    Cout = w_packed.shape[1] // 4
    patches, Hp1, Wp1 = _im2col_nhwc(x, 2, 1, 1)             # Hp1 = Hin+1
    y = matmul_bias(patches, w_packed, b_packed)             # (B*Hp1*Wp1, 4*Cout)
    y = y.reshape(B, Hp1, Wp1, 2, 2, Cout).transpose(0, 1, 3, 2, 4, 5)
    y = y.reshape(B, 2 * Hp1, 2 * Wp1, Cout)
    Hout, Wout = 2 * Hin + out_pad, 2 * Win + out_pad
    return y[:, 1:1 + Hout, 1:1 + Wout, :]


# ------------------------------- parameters -------------------------------

def init_torch_params(key, context_size, init_tau):
    """Parameters in the ORIGINAL PyTorch layouts (pack_params documents the
    exact transformation to the kernel layouts)."""
    cf, cs = context_size["cf"], context_size["cs"]
    input_size = 10 + 2
    keys = iter(jax.random.split(key, 32))

    def u(shape, fan_in):
        bound = 1.0 / (fan_in ** 0.5)
        return jax.random.uniform(next(keys), shape, jnp.float32, -bound, bound)

    p = {}
    # encoder convs: PyTorch Conv2d weight layout (Cout, Cin, k, k)
    p["conv1_w"], p["conv1_b"] = u((8, 3, 4, 4), 3 * 16), u((8,), 3 * 16)
    p["conv2_w"], p["conv2_b"] = u((16, 8, 4, 4), 8 * 16), u((16,), 8 * 16)
    p["conv3_w"], p["conv3_b"] = u((32, 16, 4, 4), 16 * 16), u((32,), 16 * 16)
    # linears (stored directly as (in, out) matrices here)
    p["l4_w"], p["l4_b"] = u((100, 288), 288), u((100,), 288)
    p["l5_w"], p["l5_b"] = u((10, 100), 100), u((10,), 100)
    # VMTRNN cell (assumed MTRNN form; matrices stored (in, out))
    p["w_x2f"], p["b_f"] = u((input_size, cf), input_size), u((cf,), input_size)
    p["w_f2f"] = u((cf, cf), cf)
    p["w_s2f"] = u((cs, cf), cs)
    p["w_f2s"], p["b_s"] = u((cf, cs), cf), u((cs,), cf)
    p["w_s2s"] = u((cs, cs), cs)
    p["fast_tau"] = jnp.asarray(init_tau["cf"], jnp.float32)
    p["slow_tau"] = jnp.asarray(init_tau["cs"], jnp.float32)
    # trainable initial context (trainInitialValue=True) -> init at zero
    p["h0_fast"] = jnp.zeros((cf,), jnp.float32)
    p["h0_slow"] = jnp.zeros((cs,), jnp.float32)
    p["u0_fast"] = jnp.zeros((cf,), jnp.float32)
    p["u0_slow"] = jnp.zeros((cs,), jnp.float32)
    # heads + decoder dense (PyTorch Linear layout (out, in))
    p["h2v_w"], p["h2v_b"] = u((2, cf), cf), u((2,), cf)
    p["h2d_w"], p["h2d_b"] = u((100, cf), cf), u((100,), cf)
    p["l7_w"], p["l7_b"] = u((288, 100), 100), u((288,), 100)
    # decoder transposed convs: PyTorch ConvTranspose2d layout (Cin, Cout, k, k)
    p["conv8_w"], p["conv8_b"] = u((32, 16, 4, 4), 32 * 16), u((16,), 32 * 16)
    p["conv9_w"], p["conv9_b"] = u((16, 8, 4, 4), 16 * 16), u((8,), 16 * 16)
    p["conv10_w"], p["conv10_b"] = u((8, 3, 4, 4), 8 * 16), u((3,), 8 * 16)
    return p


def _pack_tconv(w_t, b_t):
    """PyTorch ConvTranspose2d weight (Cin, Cout, 4, 4) -> polyphase matmul
    weight (4*Cin, 4*Cout) + bias (1, 4*Cout).
    Rows: (ay, ax, ci) taps of the k=2 window over the 1-padded input.
    Cols: (p_y, p_x, co) output parity planes, with p = 1 - r (odd parity
    first) so the interleave + crop in conv_transpose2d_nhwc is direct."""
    Cin, Cout, k, _ = w_t.shape
    assert k == 4
    col_blocks = []
    for p_y in range(2):
        ry = 1 - p_y
        for p_x in range(2):
            rx = 1 - p_x
            rows = []
            for ay in range(2):
                ky = 3 - 2 * ay - ry
                for ax in range(2):
                    kx = 3 - 2 * ax - rx
                    rows.append(w_t[:, :, ky, kx])              # (Cin, Cout)
            col_blocks.append(jnp.concatenate(rows, axis=0))    # (4*Cin, Cout)
    w = jnp.concatenate(col_blocks, axis=1)                     # (4*Cin, 4*Cout)
    b = jnp.tile(b_t, 4).reshape(1, 4 * Cout)
    return w, b


def pack_params(p, context_size):
    """One-time layout packing: conv weights -> (k*k*Cin, Cout), NHWC row/col
    permutations for l4/l7, cell weights pre-concatenated (zero xv->slow
    block), transposed convs -> polyphase.  Nothing is re-packed per forward."""
    cf, cs = context_size["cf"], context_size["cs"]

    def pack_conv(w):                        # (Cout,Cin,k,k) -> (k*k*Cin, Cout)
        Cout, Cin, k, _ = w.shape
        return jnp.transpose(w, (2, 3, 1, 0)).reshape(k * k * Cin, Cout)

    kp = {}
    kp["conv1_w"], kp["conv1_b"] = pack_conv(p["conv1_w"]), p["conv1_b"].reshape(1, -1)
    kp["conv2_w"], kp["conv2_b"] = pack_conv(p["conv2_w"]), p["conv2_b"].reshape(1, -1)
    kp["conv3_w"], kp["conv3_b"] = pack_conv(p["conv3_w"]), p["conv3_b"].reshape(1, -1)

    # l4: rows permuted from NCHW flatten (c,h,w) to NHWC flatten (h,w,c)
    l4wT = p["l4_w"].T.reshape(32, 3, 3, 100)
    kp["l4_w"] = jnp.transpose(l4wT, (1, 2, 0, 3)).reshape(288, 100)
    kp["l4_b"] = p["l4_b"].reshape(1, 100)
    kp["l5_w"], kp["l5_b"] = p["l5_w"].T, p["l5_b"].reshape(1, 10)

    # VMTRNN cell: x-weight split into image part (applied to the l5 output
    # in-kernel) and [xv, h_fast, h_slow] part; slow pathway gets a zero block.
    kp["w_x2f_im"] = p["w_x2f"][:10]
    kp["w_rest_f"] = jnp.concatenate(
        [p["w_x2f"][10:12], p["w_f2f"], p["w_s2f"]], axis=0)
    kp["w_rest_s"] = jnp.concatenate(
        [jnp.zeros((2, cs), jnp.float32), p["w_f2s"], p["w_s2s"]], axis=0)
    kp["b_f"], kp["b_s"] = p["b_f"].reshape(1, cf), p["b_s"].reshape(1, cs)

    kp["h2v_w"], kp["h2v_b"] = p["h2v_w"].T, p["h2v_b"].reshape(1, 2)
    kp["h2d_w"], kp["h2d_b"] = p["h2d_w"].T, p["h2d_b"].reshape(1, 100)

    # l7: columns permuted so the (B,288) output reshapes directly to NHWC
    l7wT = p["l7_w"].T.reshape(100, 32, 3, 3)
    kp["l7_w"] = jnp.transpose(l7wT, (0, 2, 3, 1)).reshape(100, 288)
    kp["l7_b"] = jnp.transpose(p["l7_b"].reshape(32, 3, 3), (1, 2, 0)).reshape(1, 288)

    kp["conv8_w"], kp["conv8_b"] = _pack_tconv(p["conv8_w"], p["conv8_b"])
    kp["conv9_w"], kp["conv9_b"] = _pack_tconv(p["conv9_w"], p["conv9_b"])
    kp["conv10_w"], kp["conv10_b"] = _pack_tconv(p["conv10_w"], p["conv10_b"])

    for name in ("fast_tau", "slow_tau",
                 "h0_fast", "h0_slow", "u0_fast", "u0_slow"):
        kp[name] = p[name]
    return kp


# --------------------------------- forward ---------------------------------

def cnnvmtrnn_forward(kp, xi, xv, fast_tau_range, slow_tau_range, context=None):
    """xi: (B,3,24,24) NCHW (PyTorch convention), xv: (B,2)."""
    B = xi.shape[0]
    cf = kp["h0_fast"].shape[0]
    cs = kp["h0_slow"].shape[0]

    # ---- encoder (NHWC end-to-end) ----
    x = jnp.transpose(xi, (0, 2, 3, 1)).astype(jnp.float32)
    x = conv2d_nhwc(x, kp["conv1_w"], kp["conv1_b"], 4, 2, 1)    # (B,12,12,8)
    x = conv2d_nhwc(x, kp["conv2_w"], kp["conv2_b"], 4, 2, 1)    # (B,6,6,16)
    x = conv2d_nhwc(x, kp["conv3_w"], kp["conv3_b"], 4, 2, 1)    # (B,3,3,32)
    enc = x.reshape(B, 3 * 3 * 32)     # NHWC flatten; l4_w rows pre-permuted

    # ---- recurrent state ----
    if context is None:
        h_fast = jnp.broadcast_to(kp["h0_fast"], (B, cf))
        h_slow = jnp.broadcast_to(kp["h0_slow"], (B, cs))
        u_fast = jnp.broadcast_to(kp["u0_fast"], (B, cf))
        u_slow = jnp.broadcast_to(kp["u0_slow"], (B, cs))
    else:
        h_fast, h_slow, u_fast, u_slow = context

    fast_tau = jnp.clip(kp["fast_tau"],
                        fast_tau_range["min"], fast_tau_range["max"])
    slow_tau = jnp.clip(kp["slow_tau"],
                        slow_tau_range["min"], slow_tau_range["max"])

    # ---- fused dense middle: l4 -> l5 -> cell -> heads -> l7 ----
    out_vec, dec, nhf, nhs, nuf, nus = dense_middle(
        enc, xv.astype(jnp.float32), h_fast, h_slow, u_fast, u_slow,
        kp, fast_tau, slow_tau)

    # ---- decoder (NHWC, polyphase transposed convs) ----
    d = dec.reshape(B, 3, 3, 32)       # l7_w columns pre-permuted to NHWC
    d = conv_transpose2d_nhwc(d, kp["conv8_w"], kp["conv8_b"], out_pad=1)   # (B,7,7,16)
    d = conv_transpose2d_nhwc(d, kp["conv9_w"], kp["conv9_b"], out_pad=0)   # (B,14,14,8)
    d = conv_transpose2d_nhwc(d, kp["conv10_w"], kp["conv10_b"], out_pad=0) # (B,28,28,3)
    out_img = jnp.transpose(d, (0, 3, 1, 2))   # back to NCHW like PyTorch

    return (out_img, out_vec, nhf, nhs, nuf, nus, fast_tau, slow_tau)


# ----------------------------------- main -----------------------------------

if __name__ == "__main__":
    CONTEXT_SIZE = {"cf": 32, "cs": 16}
    INIT_TAU = {"cf": 2.0, "cs": 16.0}
    FAST_TAU_RANGE = {"min": 1.0, "max": 6.0}
    SLOW_TAU_RANGE = {"min": 5.0, "max": 30.0}

    key = jax.random.PRNGKey(0)
    pkey, xkey, vkey = jax.random.split(key, 3)
    torch_params = init_torch_params(pkey, CONTEXT_SIZE, INIT_TAU)
    kparams = pack_params(torch_params, CONTEXT_SIZE)   # packed once, hoisted

    # encoder expects spatial 24 so that 3 stride-2 convs give 3x3x32 = 288
    xi = jax.random.normal(xkey, (2, 3, 24, 24), jnp.float32)
    xv = jax.random.normal(vkey, (2, 2), jnp.float32)

    fwd = jax.jit(lambda p, a, b: cnnvmtrnn_forward(
        p, a, b, FAST_TAU_RANGE, SLOW_TAU_RANGE, context=None))
    outs = jax.block_until_ready(fwd(kparams, xi, xv))

    out_img, out_vec, nhf, nhs, nuf, nus, ft, st = outs
    assert out_img.shape == (2, 3, 28, 28), out_img.shape
    assert out_vec.shape == (2, 2), out_vec.shape
    assert nhf.shape == (2, CONTEXT_SIZE["cf"])
    assert nhs.shape == (2, CONTEXT_SIZE["cs"])
    assert nuf.shape == (2, CONTEXT_SIZE["cf"])
    assert nus.shape == (2, CONTEXT_SIZE["cs"])
    for o in (out_img, out_vec, nhf, nhs, nuf, nus, ft, st):
        assert bool(jnp.all(jnp.isfinite(o)))
    print("KERNEL_OK")
</pallas_src>

<mosaic_0001>
module attributes {stable_mosaic.version = 11 : i64} {
  func.func @_matmul_bias_kernel(%arg0: i32, %arg1: memref<144x48xf32, #tpu.memory_space<vmem>>, %arg2: memref<48x8xf32, #tpu.memory_space<vmem>>, %arg3: memref<1x8xf32, #tpu.memory_space<vmem>>, %arg4: memref<144x8xf32, #tpu.memory_space<vmem>>) attributes {dimension_semantics = [#tpu.dimension_semantics<parallel>], iteration_bounds = array<i64: 2>, scalar_prefetch = 0 : i64, scratch_operands = 0 : i64, tpu.core_type = #tpu.core_type<tc>, window_params = [{transform_indices = @transform_0, window_bounds = array<i64: 144, 48>}, {pipeline_mode = #tpu.pipeline_mode<synchronous>, transform_indices = @transform_1, window_bounds = array<i64: 48, 8>}, {pipeline_mode = #tpu.pipeline_mode<synchronous>, transform_indices = @transform_2, window_bounds = array<i64: 1, 8>}, {transform_indices = @transform_3, window_bounds = array<i64: 144, 8>}]} {
    %c0 = arith.constant 0 : index
    %c0_0 = arith.constant 0 : index
    %0 = vector.load %arg1[%c0, %c0_0] : memref<144x48xf32, #tpu.memory_space<vmem>>, vector<144x48xf32>
    %c0_1 = arith.constant 0 : index
    %c0_2 = arith.constant 0 : index
    %1 = vector.load %arg2[%c0_1, %c0_2] : memref<48x8xf32, #tpu.memory_space<vmem>>, vector<48x8xf32>
    %cst = arith.constant dense<0.000000e+00> : vector<144x8xf32>
    %2 = tpu.matmul %0, %1, %cst {dimension_numbers = #tpu.dot_dimension_numbers<[1], [0], [0], [1], [0, 0, 1, 1], [], []>} : vector<144x48xf32>, vector<48x8xf32>, vector<144x8xf32> -> vector<144x8xf32>
    %c0_3 = arith.constant 0 : index
    %c0_4 = arith.constant 0 : index
    %3 = vector.load %arg3[%c0_3, %c0_4] : memref<1x8xf32, #tpu.memory_space<vmem>>, vector<1x8xf32>
    %4 = vector.broadcast %3 : vector<1x8xf32> to vector<144x8xf32>
    %5 = arith.addf %2, %4 : vector<144x8xf32>
    %c0_5 = arith.constant 0 : index
    %c0_6 = arith.constant 0 : index
    %6 = vector.load %arg4[%c0_5, %c0_6] : memref<144x8xf32, #tpu.memory_space<vmem>>, vector<144x8xf32>
    tpu.vector_store %arg4[%c0_5, %c0_6], %5 {strides = array<i32>} : memref<144x8xf32, #tpu.memory_space<vmem>>, vector<144x8xf32>,
    return
  }
  func.func @transform_0(%arg0: i32) -> (i32, i32) {
    %c0_i32 = arith.constant 0 : i32
    %c0_i32_0 = arith.constant 0 : i32
    return %arg0, %c0_i32 : i32, i32
  }
  func.func @transform_1(%arg0: i32) -> (i32, i32) {
    %c0_i32 = arith.constant 0 : i32
    %c0_i32_0 = arith.constant 0 : i32
    %c0_i32_1 = arith.constant 0 : i32
    return %c0_i32, %c0_i32_0 : i32, i32
  }
  func.func @transform_2(%arg0: i32) -> (i32, i32) {
    %c0_i32 = arith.constant 0 : i32
    %c0_i32_0 = arith.constant 0 : i32
    %c0_i32_1 = arith.constant 0 : i32
    return %c0_i32, %c0_i32_0 : i32, i32
  }
  func.func @transform_3(%arg0: i32) -> (i32, i32) {
    %c0_i32 = arith.constant 0 : i32
    %c0_i32_0 = arith.constant 0 : i32
    return %arg0, %c0_i32 : i32, i32
  }
}

module attributes {stable_mosaic.version = 11 : i64} {
  func.func @_matmul_bias_kernel(%arg0: memref<72x128xf32, #tpu.memory_space<vmem>>, %arg1: memref<128x16xf32, #tpu.memory_space<vmem>>, %arg2: memref<1x16xf32, #tpu.memory_space<vmem>>, %arg3: memref<72x16xf32, #tpu.memory_space<vmem>>) attributes {dimension_semantics = [], scalar_prefetch = 0 : i64, scratch_operands = 0 : i64, tpu.core_type = #tpu.core_type<tc>} {
    %c0 = arith.constant 0 : index
    %c0_0 = arith.constant 0 : index
    %0 = vector.load %arg0[%c0, %c0_0] : memref<72x128xf32, #tpu.memory_space<vmem>>, vector<72x128xf32>
    %c0_1 = arith.constant 0 : index
    %c0_2 = arith.constant 0 : index
    %1 = vector.load %arg1[%c0_1, %c0_2] : memref<128x16xf32, #tpu.memory_space<vmem>>, vector<128x16xf32>
    %cst = arith.constant dense<0.000000e+00> : vector<72x16xf32>
    %2 = tpu.matmul %0, %1, %cst {dimension_numbers = #tpu.dot_dimension_numbers<[1], [0], [0], [1], [0, 0, 1, 1], [], []>} : vector<72x128xf32>, vector<128x16xf32>, vector<72x16xf32> -> vector<72x16xf32>
    %c0_3 = arith.constant 0 : index
    %c0_4 = arith.constant 0 : index
    %3 = vector.load %arg2[%c0_3, %c0_4] : memref<1x16xf32, #tpu.memory_space<vmem>>, vector<1x16xf32>
    %4 = vector.broadcast %3 : vector<1x16xf32> to vector<72x16xf32>
    %5 = arith.addf %2, %4 : vector<72x16xf32>
    %c0_5 = arith.constant 0 : index
    %c0_6 = arith.constant 0 : index
    %6 = vector.load %arg3[%c0_5, %c0_6] : memref<72x16xf32, #tpu.memory_space<vmem>>, vector<72x16xf32>
    tpu.vector_store %arg3[%c0_5, %c0_6], %5 {strides = array<i32>} : memref<72x16xf32, #tpu.memory_space<vmem>>, vector<72x16xf32>,
    return
  }
}

module attributes {stable_mosaic.version = 11 : i64} {
  func.func @_matmul_bias_kernel(%arg0: memref<18x256xf32, #tpu.memory_space<vmem>>, %arg1: memref<256x32xf32, #tpu.memory_space<vmem>>, %arg2: memref<1x32xf32, #tpu.memory_space<vmem>>, %arg3: memref<18x32xf32, #tpu.memory_space<vmem>>) attributes {dimension_semantics = [], scalar_prefetch = 0 : i64, scratch_operands = 0 : i64, tpu.core_type = #tpu.core_type<tc>} {
    %c0 = arith.constant 0 : index
    %c0_0 = arith.constant 0 : index
    %0 = vector.load %arg0[%c0, %c0_0] : memref<18x256xf32, #tpu.memory_space<vmem>>, vector<18x256xf32>
    %c0_1 = arith.constant 0 : index
    %c0_2 = arith.constant 0 : index
    %1 = vector.load %arg1[%c0_1, %c0_2] : memref<256x32xf32, #tpu.memory_space<vmem>>, vector<256x32xf32>
    %cst = arith.constant dense<0.000000e+00> : vector<18x32xf32>
    %2 = tpu.matmul %0, %1, %cst {dimension_numbers = #tpu.dot_dimension_numbers<[1], [0], [0], [1], [0, 0, 1, 1], [], []>} : vector<18x256xf32>, vector<256x32xf32>, vector<18x32xf32> -> vector<18x32xf32>
    %c0_3 = arith.constant 0 : index
    %c0_4 = arith.constant 0 : index
    %3 = vector.load %arg2[%c0_3, %c0_4] : memref<1x32xf32, #tpu.memory_space<vmem>>, vector<1x32xf32>
    %4 = vector.broadcast %3 : vector<1x32xf32> to vector<18x32xf32>
    %5 = arith.addf %2, %4 : vector<18x32xf32>
    %c0_5 = arith.constant 0 : index
    %c0_6 = arith.constant 0 : index
    %6 = vector.load %arg3[%c0_5, %c0_6] : memref<18x32xf32, #tpu.memory_space<vmem>>, vector<18x32xf32>
    tpu.vector_store %arg3[%c0_5, %c0_6], %5 {strides = array<i32>} : memref<18x32xf32, #tpu.memory_space<vmem>>, vector<18x32xf32>,
    return
  }
}

module attributes {stable_mosaic.version = 11 : i64} {
  func.func @_dense_middle_kernel(%arg0: memref<2x288xf32, #tpu.memory_space<vmem>>, %arg1: memref<2x50xf32, #tpu.memory_space<vmem>>, %arg2: memref<2x32xf32, #tpu.memory_space<vmem>>, %arg3: memref<2x16xf32, #tpu.memory_space<vmem>>, %arg4: memref<288x100xf32, #tpu.memory_space<vmem>>, %arg5: memref<1x100xf32, #tpu.memory_space<vmem>>, %arg6: memref<100x10xf32, #tpu.memory_space<vmem>>, %arg7: memref<1x10xf32, #tpu.memory_space<vmem>>, %arg8: memref<10x32xf32, #tpu.memory_space<vmem>>, %arg9: memref<50x32xf32, #tpu.memory_space<vmem>>, %arg10: memref<1x32xf32, #tpu.memory_space<vmem>>, %arg11: memref<50x16xf32, #tpu.memory_space<vmem>>, %arg12: memref<1x16xf32, #tpu.memory_space<vmem>>, %arg13: memref<32x2xf32, #tpu.memory_space<vmem>>, %arg14: memref<1x2xf32, #tpu.memory_space<vmem>>, %arg15: memref<32x100xf32, #tpu.memory_space<vmem>>, %arg16: memref<1x100xf32, #tpu.memory_space<vmem>>, %arg17: memref<100x288xf32, #tpu.memory_space<vmem>>, %arg18: memref<1x288xf32, #tpu.memory_space<vmem>>, %arg19: memref<2xf32, #tpu.memory_space<smem>>, %arg20: memref<2x2xf32, #tpu.memory_space<vmem>>, %arg21: memref<2x288xf32, #tpu.memory_space<vmem>>, %arg22: memref<2x32xf32, #tpu.memory_space<vmem>>, %arg23: memref<2x16xf32, #tpu.memory_space<vmem>>, %arg24: memref<2x32xf32, #tpu.memory_space<vmem>>, %arg25: memref<2x16xf32, #tpu.memory_space<vmem>>) attributes {dimension_semantics = [], scalar_prefetch = 0 : i64, scratch_operands = 0 : i64, tpu.core_type = #tpu.core_type<tc>} {
    %c0 = arith.constant 0 : index
    %c0_0 = arith.constant 0 : index
    %0 = vector.load %arg0[%c0, %c0_0] : memref<2x288xf32, #tpu.memory_space<vmem>>, vector<2x288xf32>
    %c0_1 = arith.constant 0 : index
    %c0_2 = arith.constant 0 : index
    %1 = vector.load %arg4[%c0_1, %c0_2] : memref<288x100xf32, #tpu.memory_space<vmem>>, vector<288x100xf32>
    %cst = arith.constant dense<0.000000e+00> : vector<2x100xf32>
    %2 = tpu.matmul %0, %1, %cst {dimension_numbers = #tpu.dot_dimension_numbers<[1], [0], [0], [1], [0, 0, 1, 1], [], []>} : vector<2x288xf32>, vector<288x100xf32>, vector<2x100xf32> -> vector<2x100xf32>
    %c0_3 = arith.constant 0 : index
    %c0_4 = arith.constant 0 : index
    %3 = vector.load %arg5[%c0_3, %c0_4] : memref<1x100xf32, #tpu.memory_space<vmem>>, vector<1x100xf32>
    %4 = vector.broadcast %3 : vector<1x100xf32> to vector<2x100xf32>
    %5 = arith.addf %2, %4 : vector<2x100xf32>
    %c0_5 = arith.constant 0 : index
    %c0_6 = arith.constant 0 : index
    %6 = vector.load %arg6[%c0_5, %c0_6] : memref<100x10xf32, #tpu.memory_space<vmem>>, vector<100x10xf32>
    %cst_7 = arith.constant dense<0.000000e+00> : vector<2x10xf32>
    %7 = tpu.matmul %5, %6, %cst_7 {dimension_numbers = #tpu.dot_dimension_numbers<[1], [0], [0], [1], [0, 0, 1, 1], [], []>} : vector<2x100xf32>, vector<100x10xf32>, vector<2x10xf32> -> vector<2x10xf32>
    %c0_8 = arith.constant 0 : index
    %c0_9 = arith.constant 0 : index
    %8 = vector.load %arg7[%c0_8, %c0_9] : memref<1x10xf32, #tpu.memory_space<vmem>>, vector<1x10xf32>
    %9 = vector.broadcast %8 : vector<1x10xf32> to vector<2x10xf32>
    %10 = arith.addf %7, %9 : vector<2x10xf32>
    %c0_10 = arith.constant 0 : index
    %c0_11 = arith.constant 0 : index
    %11 = vector.load %arg1[%c0_10, %c0_11] : memref<2x50xf32, #tpu.memory_space<vmem>>, vector<2x50xf32>
    %c0_12 = arith.constant 0 : index
    %c0_13 = arith.constant 0 : index
    %12 = vector.load %arg8[%c0_12, %c0_13] : memref<10x32xf32, #tpu.memory_space<vmem>>, vector<10x32xf32>
    %cst_14 = arith.constant dense<0.000000e+00> : vector<2x32xf32>
    %13 = tpu.matmul %10, %12, %cst_14 {dimension_numbers = #tpu.dot_dimension_numbers<[1], [0], [0], [1], [0, 0, 1, 1], [], []>} : vector<2x10xf32>, vector<10x32xf32>, vector<2x32xf32> -> vector<2x32xf32>
    %c0_15 = arith.constant 0 : index
    %c0_16 = arith.constant 0 : index
    %14 = vector.load %arg9[%c0_15, %c0_16] : memref<50x32xf32, #tpu.memory_space<vmem>>, vector<50x32xf32>
    %cst_17 = arith.constant dense<0.000000e+00> : vector<2x32xf32>
    %15 = tpu.matmul %11, %14, %cst_17 {dimension_numbers = #tpu.dot_dimension_numbers<[1], [0], [0], [1], [0, 0, 1, 1], [], []>} : vector<2x50xf32>, vector<50x32xf32>, vector<2x32xf32> -> vector<2x32xf32>
    %16 = arith.addf %13, %15 : vector<2x32xf32>
    %c0_18 = arith.constant 0 : index
    %c0_19 = arith.constant 0 : index
    %17 = vector.load %arg10[%c0_18, %c0_19] : memref<1x32xf32, #tpu.memory_space<vmem>>, vector<1x32xf32>
    %18 = vector.broadcast %17 : vector<1x32xf32> to vector<2x32xf32>
    %19 = arith.addf %16, %18 : vector<2x32xf32>
    %c0_20 = arith.constant 0 : index
    %c0_21 = arith.constant 0 : index
    %20 = vector.load %arg11[%c0_20, %c0_21] : memref<50x16xf32, #tpu.memory_space<vmem>>, vector<50x16xf32>
    %cst_22 = arith.constant dense<0.000000e+00> : vector<2x16xf32>
    %21 = tpu.matmul %11, %20, %cst_22 {dimension_numbers = #tpu.dot_dimension_numbers<[1], [0], [0], [1], [0, 0, 1, 1], [], []>} : vector<2x50xf32>, vector<50x16xf32>, vector<2x16xf32> -> vector<2x16xf32>
    %c0_23 = arith.constant 0 : index
    %c0_24 = arith.constant 0 : index
    %22 = vector.load %arg12[%c0_23, %c0_24] : memref<1x16xf32, #tpu.memory_space<vmem>>, vector<1x16xf32>
    %23 = vector.broadcast %22 : vector<1x16xf32> to vector<2x16xf32>
    %24 = arith.addf %21, %23 : vector<2x16xf32>
    %c0_25 = arith.constant 0 : index
    %25 = memref.load %arg19[%c0_25] : memref<2xf32, #tpu.memory_space<smem>>
    %cst_26 = arith.constant 1.000000e+00 : f32
    %26 = arith.divf %cst_26, %25 : f32
    %c1 = arith.constant 1 : index
    %27 = memref.load %arg19[%c1] : memref<2xf32, #tpu.memory_space<smem>>
    %cst_27 = arith.constant 1.000000e+00 : f32
    %28 = arith.divf %cst_27, %27 : f32
    %cst_28 = arith.constant 1.000000e+00 : f32
    %29 = arith.subf %cst_28, %26 : f32
    %c0_29 = arith.constant 0 : index
    %c0_30 = arith.constant 0 : index
    %30 = vector.load %arg2[%c0_29, %c0_30] : memref<2x32xf32, #tpu.memory_space<vmem>>, vector<2x32xf32>
    %31 = vector.broadcast %29 : f32 to vector<2x32xf32>
    %32 = arith.mulf %31, %30 : vector<2x32xf32>
    %33 = vector.broadcast %26 : f32 to vector<2x32xf32>
    %34 = arith.mulf %33, %19 : vector<2x32xf32>
    %35 = arith.addf %32, %34 : vector<2x32xf32>
    %cst_31 = arith.constant 1.000000e+00 : f32
    %36 = arith.subf %cst_31, %28 : f32
    %c0_32 = arith.constant 0 : index
    %c0_33 = arith.constant 0 : index
    %37 = vector.load %arg3[%c0_32, %c0_33] : memref<2x16xf32, #tpu.memory_space<vmem>>, vector<2x16xf32>
    %38 = vector.broadcast %36 : f32 to vector<2x16xf32>
    %39 = arith.mulf %38, %37 : vector<2x16xf32>
    %40 = vector.broadcast %28 : f32 to vector<2x16xf32>
    %41 = arith.mulf %40, %24 : vector<2x16xf32>
    %42 = arith.addf %39, %41 : vector<2x16xf32>
    %43 = math.tanh %35 : vector<2x32xf32>
    %44 = math.tanh %42 : vector<2x16xf32>
    %c0_34 = arith.constant 0 : index
    %c0_35 = arith.constant 0 : index
    %45 = vector.load %arg24[%c0_34, %c0_35] : memref<2x32xf32, #tpu.memory_space<vmem>>, vector<2x32xf32>
    tpu.vector_store %arg24[%c0_34, %c0_35], %35 {strides = array<i32>} : memref<2x32xf32, #tpu.memory_space<vmem>>, vector<2x32xf32>,
    %c0_36 = arith.constant 0 : index
    %c0_37 = arith.constant 0 : index
    %46 = vector.load %arg25[%c0_36, %c0_37] : memref<2x16xf32, #tpu.memory_space<vmem>>, vector<2x16xf32>
    tpu.vector_store %arg25[%c0_36, %c0_37], %42 {strides = array<i32>} : memref<2x16xf32, #tpu.memory_space<vmem>>, vector<2x16xf32>,
    %c0_38 = arith.constant 0 : index
    %c0_39 = arith.constant 0 : index
    %47 = vector.load %arg22[%c0_38, %c0_39] : memref<2x32xf32, #tpu.memory_space<vmem>>, vector<2x32xf32>
    tpu.vector_store %arg22[%c0_38, %c0_39], %43 {strides = array<i32>} : memref<2x32xf32, #tpu.memory_space<vmem>>, vector<2x32xf32>,
    %c0_40 = arith.constant 0 : index
    %c0_41 = arith.constant 0 : index
    %48 = vector.load %arg23[%c0_40, %c0_41] : memref<2x16xf32, #tpu.memory_space<vmem>>, vector<2x16xf32>
    tpu.vector_store %arg23[%c0_40, %c0_41], %44 {strides = array<i32>} : memref<2x16xf32, #tpu.memory_space<vmem>>, vector<2x16xf32>,
    %c0_42 = arith.constant 0 : index
    %c0_43 = arith.constant 0 : index
    %49 = vector.load %arg13[%c0_42, %c0_43] : memref<32x2xf32, #tpu.memory_space<vmem>>, vector<32x2xf32>
    %cst_44 = arith.constant dense<0.000000e+00> : vector<2x2xf32>
    %50 = tpu.matmul %43, %49, %cst_44 {dimension_numbers = #tpu.dot_dimension_numbers<[1], [0], [0], [1], [0, 0, 1, 1], [], []>} : vector<2x32xf32>, vector<32x2xf32>, vector<2x2xf32> -> vector<2x2xf32>
    %c0_45 = arith.constant 0 : index
    %c0_46 = arith.constant 0 : index
    %51 = vector.load %arg14[%c0_45, %c0_46] : memref<1x2xf32, #tpu.memory_space<vmem>>, vector<1x2xf32>
    %52 = vector.broadcast %51 : vector<1x2xf32> to vector<2x2xf32>
    %53 = arith.addf %50, %52 : vector<2x2xf32>
    %c0_47 = arith.constant 0 : index
    %c0_48 = arith.constant 0 : index
    %54 = vector.load %arg20[%c0_47, %c0_48] : memref<2x2xf32, #tpu.memory_space<vmem>>, vector<2x2xf32>
    tpu.vector_store %arg20[%c0_47, %c0_48], %53 {strides = array<i32>} : memref<2x2xf32, #tpu.memory_space<vmem>>, vector<2x2xf32>,
    %c0_49 = arith.constant 0 : index
    %c0_50 = arith.constant 0 : index
    %55 = vector.load %arg15[%c0_49, %c0_50] : memref<32x100xf32, #tpu.memory_space<vmem>>, vector<32x100xf32>
    %cst_51 = arith.constant dense<0.000000e+00> : vector<2x100xf32>
    %56 = tpu.matmul %43, %55, %cst_51 {dimension_numbers = #tpu.dot_dimension_numbers<[1], [0], [0], [1], [0, 0, 1, 1], [], []>} : vector<2x32xf32>, vector<32x100xf32>, vector<2x100xf32> -> vector<2x100xf32>
    %c0_52 = arith.constant 0 : index
    %c0_53 = arith.constant 0 : index
    %57 = vector.load %arg16[%c0_52, %c0_53] : memref<1x100xf32, #tpu.memory_space<vmem>>, vector<1x100xf32>
    %58 = vector.broadcast %57 : vector<1x100xf32> to vector<2x100xf32>
    %59 = arith.addf %56, %58 : vector<2x100xf32>
    %c0_54 = arith.constant 0 : index
    %c0_55 = arith.constant 0 : index
    %60 = vector.load %arg17[%c0_54, %c0_55] : memref<100x288xf32, #tpu.memory_space<vmem>>, vector<100x288xf32>
    %cst_56 = arith.constant dense<0.000000e+00> : vector<2x288xf32>
    %61 = tpu.matmul %59, %60, %cst_56 {dimension_numbers = #tpu.dot_dimension_numbers<[1], [0], [0], [1], [0, 0, 1, 1], [], []>} : vector<2x100xf32>, vector<100x288xf32>, vector<2x288xf32> -> vector<2x288xf32>
    %c0_57 = arith.constant 0 : index
    %c0_58 = arith.constant 0 : index
    %62 = vector.load %arg18[%c0_57, %c0_58] : memref<1x288xf32, #tpu.memory_space<vmem>>, vector<1x288xf32>
    %63 = vector.broadcast %62 : vector<1x288xf32> to vector<2x288xf32>
    %64 = arith.addf %61, %63 : vector<2x288xf32>
    %c0_59 = arith.constant 0 : index
    %c0_60 = arith.constant 0 : index
    %65 = vector.load %arg21[%c0_59, %c0_60] : memref<2x288xf32, #tpu.memory_space<vmem>>, vector<2x288xf32>
    tpu.vector_store %arg21[%c0_59, %c0_60], %64 {strides = array<i32>} : memref<2x288xf32, #tpu.memory_space<vmem>>, vector<2x288xf32>,
    return
  }
}

module attributes {stable_mosaic.version = 11 : i64} {
  func.func @_matmul_bias_kernel(%arg0: memref<32x128xf32, #tpu.memory_space<vmem>>, %arg1: memref<128x64xf32, #tpu.memory_space<vmem>>, %arg2: memref<1x64xf32, #tpu.memory_space<vmem>>, %arg3: memref<32x64xf32, #tpu.memory_space<vmem>>) attributes {dimension_semantics = [], scalar_prefetch = 0 : i64, scratch_operands = 0 : i64, tpu.core_type = #tpu.core_type<tc>} {
    %c0 = arith.constant 0 : index
    %c0_0 = arith.constant 0 : index
    %0 = vector.load %arg0[%c0, %c0_0] : memref<32x128xf32, #tpu.memory_space<vmem>>, vector<32x128xf32>
    %c0_1 = arith.constant 0 : index
    %c0_2 = arith.constant 0 : index
    %1 = vector.load %arg1[%c0_1, %c0_2] : memref<128x64xf32, #tpu.memory_space<vmem>>, vector<128x64xf32>
    %cst = arith.constant dense<0.000000e+00> : vector<32x64xf32>
    %2 = tpu.matmul %0, %1, %cst {dimension_numbers = #tpu.dot_dimension_numbers<[1], [0], [0], [1], [0, 0, 1, 1], [], []>} : vector<32x128xf32>, vector<128x64xf32>, vector<32x64xf32> -> vector<32x64xf32>
    %c0_3 = arith.constant 0 : index
    %c0_4 = arith.constant 0 : index
    %3 = vector.load %arg2[%c0_3, %c0_4] : memref<1x64xf32, #tpu.memory_space<vmem>>, vector<1x64xf32>
    %4 = vector.broadcast %3 : vector<1x64xf32> to vector<32x64xf32>
    %5 = arith.addf %2, %4 : vector<32x64xf32>
    %c0_5 = arith.constant 0 : index
    %c0_6 = arith.constant 0 : index
    %6 = vector.load %arg3[%c0_5, %c0_6] : memref<32x64xf32, #tpu.memory_space<vmem>>, vector<32x64xf32>
    tpu.vector_store %arg3[%c0_5, %c0_6], %5 {strides = array<i32>} : memref<32x64xf32, #tpu.memory_space<vmem>>, vector<32x64xf32>,
    return
  }
}

module attributes {stable_mosaic.version = 11 : i64} {
  func.func @_matmul_bias_kernel(%arg0: memref<128x64xf32, #tpu.memory_space<vmem>>, %arg1: memref<64x32xf32, #tpu.memory_space<vmem>>, %arg2: memref<1x32xf32, #tpu.memory_space<vmem>>, %arg3: memref<128x32xf32, #tpu.memory_space<vmem>>) attributes {dimension_semantics = [], scalar_prefetch = 0 : i64, scratch_operands = 0 : i64, tpu.core_type = #tpu.core_type<tc>} {
    %c0 = arith.constant 0 : index
    %c0_0 = arith.constant 0 : index
    %0 = vector.load %arg0[%c0, %c0_0] : memref<128x64xf32, #tpu.memory_space<vmem>>, vector<128x64xf32>
    %c0_1 = arith.constant 0 : index
    %c0_2 = arith.constant 0 : index
    %1 = vector.load %arg1[%c0_1, %c0_2] : memref<64x32xf32, #tpu.memory_space<vmem>>, vector<64x32xf32>
    %cst = arith.constant dense<0.000000e+00> : vector<128x32xf32>
    %2 = tpu.matmul %0, %1, %cst {dimension_numbers = #tpu.dot_dimension_numbers<[1], [0], [0], [1], [0, 0, 1, 1], [], []>} : vector<128x64xf32>, vector<64x32xf32>, vector<128x32xf32> -> vector<128x32xf32>
    %c0_3 = arith.constant 0 : index
    %c0_4 = arith.constant 0 : index
    %3 = vector.load %arg2[%c0_3, %c0_4] : memref<1x32xf32, #tpu.memory_space<vmem>>, vector<1x32xf32>
    %4 = vector.broadcast %3 : vector<1x32xf32> to vector<128x32xf32>
    %5 = arith.addf %2, %4 : vector<128x32xf32>
    %c0_5 = arith.constant 0 : index
    %c0_6 = arith.constant 0 : index
    %6 = vector.load %arg3[%c0_5, %c0_6] : memref<128x32xf32, #tpu.memory_space<vmem>>, vector<128x32xf32>
    tpu.vector_store %arg3[%c0_5, %c0_6], %5 {strides = array<i32>} : memref<128x32xf32, #tpu.memory_space<vmem>>, vector<128x32xf32>,
    return
  }
}

module attributes {stable_mosaic.version = 11 : i64} {
  func.func @_matmul_bias_kernel(%arg0: memref<450x32xf32, #tpu.memory_space<vmem>>, %arg1: memref<32x12xf32, #tpu.memory_space<vmem>>, %arg2: memref<1x12xf32, #tpu.memory_space<vmem>>, %arg3: memref<450x12xf32, #tpu.memory_space<vmem>>) attributes {dimension_semantics = [], scalar_prefetch = 0 : i64, scratch_operands = 0 : i64, tpu.core_type = #tpu.core_type<tc>} {
    %c0 = arith.constant 0 : index
    %c0_0 = arith.constant 0 : index
    %0 = vector.load %arg0[%c0, %c0_0] : memref<450x32xf32, #tpu.memory_space<vmem>>, vector<450x32xf32>
    %c0_1 = arith.constant 0 : index
    %c0_2 = arith.constant 0 : index
    %1 = vector.load %arg1[%c0_1, %c0_2] : memref<32x12xf32, #tpu.memory_space<vmem>>, vector<32x12xf32>
    %cst = arith.constant dense<0.000000e+00> : vector<450x12xf32>
    %2 = tpu.matmul %0, %1, %cst {dimension_numbers = #tpu.dot_dimension_numbers<[1], [0], [0], [1], [0, 0, 1, 1], [], []>} : vector<450x32xf32>, vector<32x12xf32>, vector<450x12xf32> -> vector<450x12xf32>
    %c0_3 = arith.constant 0 : index
    %c0_4 = arith.constant 0 : index
    %3 = vector.load %arg2[%c0_3, %c0_4] : memref<1x12xf32, #tpu.memory_space<vmem>>, vector<1x12xf32>
    %4 = vector.broadcast %3 : vector<1x12xf32> to vector<450x12xf32>
    %5 = arith.addf %2, %4 : vector<450x12xf32>
    %c0_5 = arith.constant 0 : index
    %c0_6 = arith.constant 0 : index
    %6 = vector.load %arg3[%c0_5, %c0_6] : memref<450x12xf32, #tpu.memory_space<vmem>>, vector<450x12xf32>
    tpu.vector_store %arg3[%c0_5, %c0_6], %5 {strides = array<i32>} : memref<450x12xf32, #tpu.memory_space<vmem>>, vector<450x12xf32>,
    return
  }
}

</mosaic_0001>

<llo_original>
// kernel: _lambda_.7
$region0: #{_lambda_.7}
  #allocation0 [shape = 'u32[]', space=smem, size = 0x4, offset = 0x4, fixed_abs, tag = 'smem constant byte address 0x4 - core index']
  #allocation1 [shape = 'u32[144,128]{1,0:T(1,128)}', space=vmem, size = 0x12000, scoped, tag = 'internal scratch']
  %s0 = inlined_call_operand.vmem [shape: f32[288,48], index: 0, kind: input, shape index: {}]
  %s1 = inlined_call_operand.vmem [shape: f32[48,8], index: 1, kind: input, shape index: {}]
  %s2 = inlined_call_operand.vmem [shape: f32[1,8], index: 2, kind: input, shape index: {}]
  %s3 = inlined_call_operand.vmem [shape: f32[288,8], index: 3, kind: output, shape index: {}]
  %s4 = sld [smem:[#allocation0]]
  $region45: #{_lambda_.7} parent=0
    _
  %s6 = ssub.s32 1, %s4
  %s7 = scalar_select 0, %s6, %s4
  loop: start=0, step=1, limit=4
  $region2: #{_lambda_.7} parent=0 // loop_pre_header
    _
  $region3: #{_lambda_.7} parent=0 // loop_header
    %s9 = sphi 0, %s13
    %p10 = scmp.ge.s32.totalorder %s9, 4
    %s19 = sphi 0, %s21
    %s22 = sphi 0, %s19
    %s23 = sphi 0, %s22
    %s39 = sphi 0, %s23
    %s43 = sphi 0, %s43
    %s45 = sphi 0, %s43
    %s46 = sphi 0, %s45
    %s60 = sphi 0, %s46
    %s64 = sphi 0, %s64
    %s66 = sphi 0, %s64
    %s67 = sphi 0, %s66
    %s81 = sphi 0, %s67
    %s87 = sphi 0, %s89
    %s90 = sphi 0, %s87
    %s91 = sphi 0, %s90
    %s107 = sphi 0, %s91
  $region4: #{_lambda_.7} parent=0 // loop_header_branch
    %12 = sbr.rel (%p10) target = $region8
  $region5: #{_lambda_.7} parent=0 // loop_body
    %s14 = ssub.s32 %s9, 1
    %s15 = ssub.s32 %s9, 2
    %s16 = sadd.s32 %s9, 1
    %s17 = ssub.s32 %s9, %s16
    %p18 = scmp.eq.s32.totalorder %s17, 0
    %s20 = sadd.s32 %s19, 1
    %s21 = scalar_select %p18, %s19, %s20
    %p24 = pneg %p18
    %p25 = scmp.eq.s32.totalorder %s9, 1
    %p26 = por %p24, %p25
    %p27 = scmp.ne.s32.totalorder %s19, %s22
    %p28 = scmp.eq.s32.totalorder %s9, 0
    %p29 = por %p27, %p28
    %p30 = scmp.ne.s32.totalorder %s19, %s22
    %p31 = scmp.eq.s32.totalorder %s14, 1
    %p32 = por %p30, %p31
    %p33 = scmp.ne.s32.totalorder %s22, %s23
    %p34 = scmp.eq.s32.totalorder %s14, 0
    %p35 = por %p33, %p34
    %p36 = scmp.ne.s32.totalorder %s22, %s23
    %p37 = scmp.eq.s32.totalorder %s15, 1
    %p38 = por %p36, %p37
    %p40 = scmp.ne.s32.totalorder %s23, %s39
    %p41 = scmp.eq.s32.totalorder %s15, 0
    %p42 = por %p40, %p41
    %s44 = sadd.s32 %s43, 1
    %p47 = scmp.eq.s32.totalorder %s9, 1
    %p48 = scmp.ne.s32.totalorder %s43, %s45
    %p49 = scmp.eq.s32.totalorder %s9, 0
    %p50 = por %p48, %p49
    %p51 = scmp.ne.s32.totalorder %s43, %s45
    %p52 = scmp.eq.s32.totalorder %s14, 1
    %p53 = por %p51, %p52
    %p54 = scmp.ne.s32.totalorder %s45, %s46
    %p55 = scmp.eq.s32.totalorder %s14, 0
    %p56 = por %p54, %p55
    %p57 = scmp.ne.s32.totalorder %s45, %s46
    %p58 = scmp.eq.s32.totalorder %s15, 1
    %p59 = por %p57, %p58
    %p61 = scmp.ne.s32.totalorder %s46, %s60
    %p62 = scmp.eq.s32.totalorder %s15, 0
    %p63 = por %p61, %p62
    %s65 = sadd.s32 %s64, 1
    %p68 = scmp.eq.s32.totalorder %s9, 1
    %p69 = scmp.ne.s32.totalorder %s64, %s66
    %p70 = scmp.eq.s32.totalorder %s9, 0
    %p71 = por %p69, %p70
    %p72 = scmp.ne.s32.totalorder %s64, %s66
    %p73 = scmp.eq.s32.totalorder %s14, 1
    %p74 = por %p72, %p73
    %p75 = scmp.ne.s32.totalorder %s66, %s67
    %p76 = scmp.eq.s32.totalorder %s14, 0
    %p77 = por %p75, %p76
    %p78 = scmp.ne.s32.totalorder %s66, %s67
    %p79 = scmp.eq.s32.totalorder %s15, 1
    %p80 = por %p78, %p79
    %p82 = scmp.ne.s32.totalorder %s67, %s81
    %p83 = scmp.eq.s32.totalorder %s15, 0
    %p84 = por %p82, %p83
    %s85 = ssub.s32 %s9, %s16
    %p86 = scmp.eq.s32.totalorder %s85, 0
    %s88 = sadd.s32 %s87, 1
    %s89 = scalar_select %p86, %s87, %s88
    %p92 = pneg %p86
    %p93 = scmp.eq.s32.totalorder %s9, 1
    %p94 = por %p92, %p93
    %p95 = scmp.ne.s32.totalorder %s87, %s90
    %p96 = scmp.eq.s32.totalorder %s9, 0
    %p97 = por %p95, %p96
    %p98 = scmp.ne.s32.totalorder %s87, %s90
    %p99 = scmp.eq.s32.totalorder %s14, 1
    %p100 = por %p98, %p99
    %p101 = scmp.ne.s32.totalorder %s90, %s91
    %p102 = scmp.eq.s32.totalorder %s14, 0
    %p103 = por %p101, %p102
    %p104 = scmp.ne.s32.totalorder %s90, %s91
    %p105 = scmp.eq.s32.totalorder %s15, 1
    %p106 = por %p104, %p105
    %p108 = scmp.ne.s32.totalorder %s91, %s107
    %p109 = scmp.eq.s32.totalorder %s15, 0
    %p110 = por %p108, %p109
    %p111 = scmp.le.s32.totalorder 1, %s9
    %p112 = scmp.lt.s32.totalorder %s9, 3
    %p113 = pnand %p111, %p112
    %p114 = pneg %p113
    // Predicated region
    $region9: #{_lambda_.7} parent=5 // pred_check
      _
    $region10: #{_lambda_.7} parent=5 // pred_check_branch
      %116 = sbr.rel (%p113) target = $region12
    $region11: #{_lambda_.7} parent=5 // pred_region
      %s117 = ssub.s32 %s9, 1
      // Predicated region
      $region13: #{_lambda_.7} parent=11 // pred_check
        %p118 = pneg %p56
      $region14: #{_lambda_.7} parent=11 // pred_check_branch
        %120 = sbr.rel (%p118) target = $region16
      $region15: #{_lambda_.7} parent=11 // pred_region
        _
      $region16: #{_lambda_.7} parent=11 // pred_fallthru
        _
      // Predicated region
      $region17: #{_lambda_.7} parent=11 // pred_check
        %p121 = pneg %p77
      $region18: #{_lambda_.7} parent=11 // pred_check_branch
        %123 = sbr.rel (%p121) target = $region20
      $region19: #{_lambda_.7} parent=11 // pred_region
        _
      $region20: #{_lambda_.7} parent=11 // pred_fallthru
        _
    $region12: #{_lambda_.7} parent=5 // pred_fallthru
      _
    %p124 = scmp.lt.s32.totalorder %s9, 2
    // Predicated region
    $region21: #{_lambda_.7} parent=5 // pred_check
      %p125 = pneg %p124
    $region22: #{_lambda_.7} parent=5 // pred_check_branch
      %127 = sbr.rel (%p125) target = $region24
    $region23: #{_lambda_.7} parent=5 // pred_region
      // Predicated region
      $region25: #{_lambda_.7} parent=23 // pred_check
        %p128 = pneg %p29
      $region26: #{_lambda_.7} parent=23 // pred_check_branch
        %130 = sbr.rel (%p128) target = $region28
      $region27: #{_lambda_.7} parent=23 // pred_region
        %s131 = smul.u32 18, %s9
        %p132 = scmp.lt.s32.totalorder %s131, 35
        %s133 = scalar_select %p132, %s131, 35
        %s134 = smul.addr %s133, 8
        %s135 = scalar_lea.vmem %s0, %s134
        %s136 = smul.u32 18, %s9
      $region28: #{_lambda_.7} parent=23 // pred_fallthru
        _
    $region24: #{_lambda_.7} parent=5 // pred_fallthru
      _
    %p137 = scmp.le.s32.totalorder 1, %s9
    %p138 = scmp.lt.s32.totalorder %s9, 3
    %p139 = pnand %p137, %p138
    %p140 = pneg %p139
    // Predicated region
    $region29: #{_lambda_.7} parent=5 // pred_check
      _
    $region30: #{_lambda_.7} parent=5 // pred_check_branch
      %142 = sbr.rel (%p139) target = $region32
    $region31: #{_lambda_.7} parent=5 // pred_region
      %s143 = ssub.s32 %s9, 1
      %s144 = smul.u32 18, %s14
      %p145 = scmp.lt.s32.totalorder %s144, 35
      %s146 = scalar_select %p145, %s144, 35
      %s147 = smul.addr %s146, 8
      %s148 = scalar_lea.vmem %s0, %s147
      %p149 = pneg %p35
      %p150 = pneg %p32
      %p151 = pneg %p56
      %p152 = pneg %p53
      %p153 = pneg %p77
      %p154 = pneg %p74
      %p155 = pneg %p103
      %p156 = pneg %p100
      %s157 = smul.u32 18, %s14
      %p158 = scmp.lt.s32.totalorder %s157, 35
      %s159 = scalar_select %p158, %s157, 35
      %s160 = smul.addr %s159, 8
      %s161 = scalar_lea.vmem %s3, %s160
      %s162 = smul.u32 18, %s14
      %p163 = scmp.lt.s32.totalorder %s162, 35
      %s164 = scalar_select %p163, %s162, 35
      %s165 = smul.addr %s164, 8
      %s166 = scalar_lea.vmem %s0, %s165
      %s167 = smul.u32 18, %s14
      %s168 = smul.u32 18, %s14
      %p169 = scmp.lt.s32.totalorder %s168, 35
      %s170 = scalar_select %p169, %s168, 35
      %s171 = smul.addr %s170, 8
      %s172 = scalar_lea.vmem %s3, %s171
      %s173 = smul.u32 18, %s14
      %v174 = vld [vmem:[%s166] sm:$0xff]
      %v175 = vld [vmem:[%s166 + $0x8] sm:$0xff]
      %v176 = vld [vmem:[%s166 + $0x10] sm:$0xff]
      %v177 = vld [vmem:[%s166 + $0x18] sm:$0xff]
      %v178 = vld [vmem:[%s166 + $0x20] sm:$0xff]
      %v179 = vld [vmem:[%s166 + $0x28] sm:$0xff]
      %v180 = vld [vmem:[%s166 + $0x30] sm:$0xff]
      %v181 = vld [vmem:[%s166 + $0x38] sm:$0xff]
      %v182 = vld [vmem:[%s166 + $0x40] sm:$0xff]
      %v183 = vld [vmem:[%s166 + $0x48] sm:$0xff]
      %v184 = vld [vmem:[%s166 + $0x50] sm:$0xff]
      %v185 = vld [vmem:[%s166 + $0x58] sm:$0xff]
      %v186 = vld [vmem:[%s166 + $0x60] sm:$0xff]
      %v187 = vld [vmem:[%s166 + $0x68] sm:$0xff]
      %v188 = vld [vmem:[%s166 + $0x70] sm:$0xff]
      %v189 = vld [vmem:[%s166 + $0x78] sm:$0xff]
      %v190 = vld [vmem:[%s166 + $0x80] sm:$0xff]
      %v191 = vld [vmem:[%s166 + $0x88] sm:$0xff]
      %v192 = vld [vmem:[%s1] sm:$0xff]
      %v193 = vld [vmem:[%s1 + $0x8] sm:$0xff]
      %v194 = vld [vmem:[%s1 + $0x10] sm:$0xff]
      %v195 = vld [vmem:[%s1 + $0x18] sm:$0xff]
      %v196 = vld [vmem:[%s1 + $0x20] sm:$0xff]
      %v197 = vld [vmem:[%s1 + $0x28] sm:$0xff]
      %v198 = vld [vmem:[%s2] sm:$0x1]
      %v200 = vlaneseq
      %v201 = vshrl.u32 %v200, 7
      %v202 = vsub.s32 0, %v201
      %v203 = vrot.slane %v198, %v202
      %vm205 = vcmask 392192
      %v207 = vsel %vm205, %v174, 0
      %v210 = vsel %vm205, %v175, 0
      %v213 = vsel %vm205, %v176, 0
      %v216 = vsel %vm205, %v177, 0
      %v219 = vsel %vm205, %v178, 0
      %v222 = vsel %vm205, %v179, 0
      %v225 = vsel %vm205, %v180, 0
      %v228 = vsel %vm205, %v181, 0
      %v231 = vsel %vm205, %v182, 0
      %v234 = vsel %vm205, %v183, 0
      %v237 = vsel %vm205, %v184, 0
      %v240 = vsel %vm205, %v185, 0
      %v243 = vsel %vm205, %v186, 0
      %v246 = vsel %vm205, %v187, 0
      %v249 = vsel %vm205, %v188, 0
      %v252 = vsel %vm205, %v189, 0
      %v255 = vsel %vm205, %v190, 0
      %v258 = vsel %vm205, %v191, 0
      %260 = vmatprep.subr.mxu0 0.0
      %261 = vmatpush1.msra.mxu0 0.0
      %262 = vmatprep.subr.mxu0 0.0
      %263 = vmatpush1.msra.mxu0 0.0
      %264 = vmatprep.subr.mxu0 0.0
      %265 = vmatpush1.msra.mxu0 0.0
      %266 = vmatprep.subr.mxu0 0.0
      %267 = vmatpush1.msra.mxu0 0.0
      %268 = vmatprep.subr.mxu0 0.0
      %269 = vmatpush1.msra.mxu0 0.0
      %270 = vmatprep.subr.mxu0 0.0
      %271 = vmatpush1.msra.mxu0 0.0
      %272 = vmatprep.subr.mxu0 0.0
      %273 = vmatpush1.msra.mxu0 0.0
      %274 = vmatprep.subr.mxu0 0.0
      %275 = vmatpush1.msra.mxu0 0.0
      %276 = vmatprep.subr.mxu0 0.0
      %277 = vmatpush1.msra.mxu0 0.0
      %278 = vmatprep.subr.mxu0 0.0
      %279 = vmatpush1.msra.mxu0 0.0
      %280 = vmatprep.subr.mxu0 0.0
      %281 = vmatpush1.msra.mxu0 %v197
      %282 = vmatprep.subr.mxu0 0.0
      %283 = vmatpush1.msra.mxu0 %v196
      %284 = vmatprep.subr.mxu0 0.0
      %285 = vmatpush1.msra.mxu0 %v195
      %286 = vmatprep.subr.mxu0 0.0
      %287 = vmatpush1.msra.mxu0 %v194
      %288 = vmatprep.subr.mxu0 0.0
      %289 = vmatpush1.msra.mxu0 %v193
      %290 = vmatprep.subr.mxu0 0.0
      %291 = vmatpush1.msra.mxu0 %v192
      %292 = vmatprep.subr.mxu0 0.0
      %293 = vmatpush2.msra.mxu0 0.0
      %294 = vmatprep.subr.mxu0 0.0
      %295 = vmatpush2.msra.mxu0 0.0
      %296 = vmatprep.subr.mxu0 0.0
      %297 = vmatpush2.msra.mxu0 0.0
      %298 = vmatprep.subr.mxu0 0.0
      %299 = vmatpush2.msra.mxu0 0.0
      %300 = vmatprep.subr.mxu0 0.0
      %301 = vmatpush2.msra.mxu0 0.0
      %302 = vmatprep.subr.mxu0 0.0
      %303 = vmatpush2.msra.mxu0 0.0
      %304 = vmatprep.subr.mxu0 0.0
      %305 = vmatpush2.msra.mxu0 0.0
      %306 = vmatprep.subr.mxu0 0.0
      %307 = vmatpush2.msra.mxu0 0.0
      %308 = vmatprep.subr.mxu0 0.0
      %309 = vmatpush2.msra.mxu0 0.0
      %310 = vmatprep.subr.mxu0 0.0
      %311 = vmatpush2.msra.mxu0 0.0
      %312 = vmatprep.subr.mxu0 0.0
      %313 = vmatpush2.msra.mxu0 0.0
      %314 = vmatprep.subr.mxu0 0.0
      %315 = vmatpush2.msra.mxu0 0.0
      %316 = vmatprep.subr.mxu0 0.0
      %317 = vmatpush2.msra.mxu0 0.0
      %318 = vmatprep.subr.mxu0 0.0
      %319 = vmatpush2.msra.mxu0 0.0
      %320 = vmatprep.subr.mxu0 0.0
      %321 = vmatpush2.msra.mxu0 0.0
      %322 = vmatprep.subr.mxu0 0.0
      %323 = vmatpush2.msra.mxu0 0.0
      %324 = vmatprep.mubr.f32.mxu0 0.0
      %325 = vmatmul.mubr.f32.gmra.mxu0 %v207
      %v326 = vpop.f32.mrf.mxu0
      %v327 = vadd.f32 %v203, %v326
      %v328 = vpop.f32.mrf.mxu0
      %329 = vmatprep.mubr.f32.mxu0 0.0
      %330 = vmatmul.mubr.f32.gmra.mxu0 %v210
      %v331 = vpop.f32.mrf.mxu0
      %v332 = vadd.f32 %v203, %v331
      %v333 = vpop.f32.mrf.mxu0
      %334 = vmatprep.mubr.f32.mxu0 0.0
      %335 = vmatmul.mubr.f32.gmra.mxu0 %v213
      %v336 = vpop.f32.mrf.mxu0
      %v337 = vadd.f32 %v203, %v336
      %v338 = vpop.f32.mrf.mxu0
      %339 = vmatprep.mubr.f32.mxu0 0.0
      %340 = vmatmul.mubr.f32.gmra.mxu0 %v216
      %v341 = vpop.f32.mrf.mxu0
      %v342 = vadd.f32 %v203, %v341
      %v343 = vpop.f32.mrf.mxu0
      %344 = vmatprep.mubr.f32.mxu0 0.0
      %345 = vmatmul.mubr.f32.gmra.mxu0 %v219
      %v346 = vpop.f32.mrf.mxu0
      %v347 = vadd.f32 %v203, %v346
      %v348 = vpop.f32.mrf.mxu0
      %349 = vmatprep.mubr.f32.mxu0 0.0
      %350 = vmatmul.mubr.f32.gmra.mxu0 %v222
      %v351 = vpop.f32.mrf.mxu0
      %v352 = vadd.f32 %v203, %v351
      %v353 = vpop.f32.mrf.mxu0
      %354 = vmatprep.mubr.f32.mxu0 0.0
      %355 = vmatmul.mubr.f32.gmra.mxu0 %v225
      %v356 = vpop.f32.mrf.mxu0
      %v357 = vadd.f32 %v203, %v356
      %v358 = vpop.f32.mrf.mxu0
      %359 = vmatprep.mubr.f32.mxu0 0.0
      %360 = vmatmul.mubr.f32.gmra.mxu0 %v228
      %v361 = vpop.f32.mrf.mxu0
      %v362 = vadd.f32 %v203, %v361
      %v363 = vpop.f32.mrf.mxu0
      %364 = vmatprep.mubr.f32.mxu0 0.0
      %365 = vmatmul.mubr.f32.gmra.mxu0 %v231
      %v366 = vpop.f32.mrf.mxu0
      %v367 = vadd.f32 %v203, %v366
      %v368 = vpop.f32.mrf.mxu0
      %369 = vmatprep.mubr.f32.mxu0 0.0
      %370 = vmatmul.mubr.f32.gmra.mxu0 %v234
      %v371 = vpop.f32.mrf.mxu0
      %v372 = vadd.f32 %v203, %v371
      %v373 = vpop.f32.mrf.mxu0
      %374 = vmatprep.mubr.f32.mxu0 0.0
      %375 = vmatmul.mubr.f32.gmra.mxu0 %v237
      %v376 = vpop.f32.mrf.mxu0
      %v377 = vadd.f32 %v203, %v376
      %v378 = vpop.f32.mrf.mxu0
      %379 = vmatprep.mubr.f32.mxu0 0.0
      %380 = vmatmul.mubr.f32.gmra.mxu0 %v240
      %v381 = vpop.f32.mrf.mxu0
      %v382 = vadd.f32 %v203, %v381
      %v383 = vpop.f32.mrf.mxu0
      %384 = vmatprep.mubr.f32.mxu0 0.0
      %385 = vmatmul.mubr.f32.gmra.mxu0 %v243
      %v386 = vpop.f32.mrf.mxu0
      %v387 = vadd.f32 %v203, %v386
      %v388 = vpop.f32.mrf.mxu0
      %389 = vmatprep.mubr.f32.mxu0 0.0
      %390 = vmatmul.mubr.f32.gmra.mxu0 %v246
      %v391 = vpop.f32.mrf.mxu0
      %v392 = vadd.f32 %v203, %v391
      %v393 = vpop.f32.mrf.mxu0
      %394 = vmatprep.mubr.f32.mxu0 0.0
      %395 = vmatmul.mubr.f32.gmra.mxu0 %v249
      %v396 = vpop.f32.mrf.mxu0
      %v397 = vadd.f32 %v203, %v396
      %v398 = vpop.f32.mrf.mxu0
      %399 = vmatprep.mubr.f32.mxu0 0.0
      %400 = vmatmul.mubr.f32.gmra.mxu0 %v252
      %v401 = vpop.f32.mrf.mxu0
      %v402 = vadd.f32 %v203, %v401
      %v403 = vpop.f32.mrf.mxu0
      %404 = vmatprep.mubr.f32.mxu0 0.0
      %405 = vmatmul.mubr.f32.gmra.mxu0 %v255
      %v406 = vpop.f32.mrf.mxu0
      %v407 = vadd.f32 %v203, %v406
      %v408 = vpop.f32.mrf.mxu0
      %409 = vmatprep.mubr.f32.mxu0 0.0
      %410 = vmatmul.mubr.f32.gmra.mxu0 %v258
      %v411 = vpop.f32.mrf.mxu0
      %v412 = vadd.f32 %v203, %v411
      %v413 = vpop.f32.mrf.mxu0
      %414 = vdwg.mxu0
      %vm415 = vcmask 64512
      %416 = vst.msk [vmem:[%s172] sm:$0xff] %vm415, %v327
      %417 = vst.msk [vmem:[%s172 + $0x8] sm:$0xff] %vm415, %v332
      %418 = vst.msk [vmem:[%s172 + $0x10] sm:$0xff] %vm415, %v337
      %419 = vst.msk [vmem:[%s172 + $0x18] sm:$0xff] %vm415, %v342
      %420 = vst.msk [vmem:[%s172 + $0x20] sm:$0xff] %vm415, %v347
      %421 = vst.msk [vmem:[%s172 + $0x28] sm:$0xff] %vm415, %v352
      %422 = vst.msk [vmem:[%s172 + $0x30] sm:$0xff] %vm415, %v357
      %423 = vst.msk [vmem:[%s172 + $0x38] sm:$0xff] %vm415, %v362
      %424 = vst.msk [vmem:[%s172 + $0x40] sm:$0xff] %vm415, %v367
      %425 = vst.msk [vmem:[%s172 + $0x48] sm:$0xff] %vm415, %v372
      %426 = vst.msk [vmem:[%s172 + $0x50] sm:$0xff] %vm415, %v377
      %427 = vst.msk [vmem:[%s172 + $0x58] sm:$0xff] %vm415, %v382
      %428 = vst.msk [vmem:[%s172 + $0x60] sm:$0xff] %vm415, %v387
      %429 = vst.msk [vmem:[%s172 + $0x68] sm:$0xff] %vm415, %v392
      %430 = vst.msk [vmem:[%s172 + $0x70] sm:$0xff] %vm415, %v397
      %431 = vst.msk [vmem:[%s172 + $0x78] sm:$0xff] %vm415, %v402
      %432 = vst.msk [vmem:[%s172 + $0x80] sm:$0xff] %vm415, %v407
      %433 = vst.msk [vmem:[%s172 + $0x88] sm:$0xff] %vm415, %v412
      %s434 = smul.u32 18, %s14
      %p435 = scmp.lt.s32.totalorder %s434, 35
      %s436 = scalar_select %p435, %s434, 35
      %s437 = smul.addr %s436, 8
      %s438 = scalar_lea.vmem %s3, %s437
      // Predicated region
      $region33: #{_lambda_.7} parent=31 // pred_check
        %p439 = pneg %p100
      $region34: #{_lambda_.7} parent=31 // pred_check_branch
        %441 = sbr.rel (%p439) target = $region36
      $region35: #{_lambda_.7} parent=31 // pred_region
        %s442 = smul.u32 18, %s14
      $region36: #{_lambda_.7} parent=31 // pred_fallthru
        _
    $region32: #{_lambda_.7} parent=5 // pred_fallthru
      _
    %p443 = scmp.le.s32.totalorder 2, %s9
    // Predicated region
    $region37: #{_lambda_.7} parent=5 // pred_check
      %p444 = pneg %p443
    $region38: #{_lambda_.7} parent=5 // pred_check_branch
      %446 = sbr.rel (%p444) target = $region40
    $region39: #{_lambda_.7} parent=5 // pred_region
      %s447 = ssub.s32 %s9, 2
      // Predicated region
      $region41: #{_lambda_.7} parent=39 // pred_check
        %p448 = pneg %p106
      $region42: #{_lambda_.7} parent=39 // pred_check_branch
        %450 = sbr.rel (%p448) target = $region44
      $region43: #{_lambda_.7} parent=39 // pred_region
        %s451 = smul.u32 18, %s15
        %p452 = scmp.lt.s32.totalorder %s451, 35
        %s453 = scalar_select %p452, %s451, 35
        %s454 = smul.addr %s453, 8
        %s455 = scalar_lea.vmem %s3, %s454
      $region44: #{_lambda_.7} parent=39 // pred_fallthru
        _
    $region40: #{_lambda_.7} parent=5 // pred_fallthru
      _
  $region6: #{_lambda_.7} parent=0 // loop_footer
    %s13 = sadd.s32 1, %s9
  $region7: #{_lambda_.7} parent=0 // loop_footer_branch
    %8 = sbr.rel target = $region3
  $region8: #{_lambda_.7} parent=0 // loop_exit
    _

// kernel: _lambda_.8
$region0: #{_lambda_.8}
  #allocation0 [shape = 'u32[]', space=smem, size = 0x4, offset = 0x4, fixed_abs, tag = 'smem constant byte address 0x4 - core index']
  #allocation1 [shape = 'u32[144,128]{1,0:T(1,128)}', space=vmem, size = 0x12000, scoped, tag = 'internal scratch']
  %s0 = inlined_call_operand.vmem [shape: f32[72,128], index: 0, kind: input, shape index: {}]
  %s1 = inlined_call_operand.vmem [shape: f32[128,16], index: 1, kind: input, shape index: {}]
  %s2 = inlined_call_operand.vmem [shape: f32[1,16], index: 2, kind: input, shape index: {}]
  %s3 = inlined_call_operand.vmem [shape: f32[72,16], index: 3, kind: output, shape index: {}]
  %s4 = sld [smem:[#allocation0]]
  $region22: #{_lambda_.8} parent=0
    _
  %s6 = ssub.s32 1, %s4
  %s7 = scalar_select 0, %s6, %s4
  // Predicated region
  $region2: #{_lambda_.8} parent=0 // pred_check
    _
  $region3: #{_lambda_.8} parent=0 // pred_check_branch
    %9 = sbr.rel (0) target = $region5
  $region4: #{_lambda_.8} parent=0 // pred_region
    _
  $region5: #{_lambda_.8} parent=0 // pred_fallthru
    _
  // Predicated region
  $region6: #{_lambda_.8} parent=0 // pred_check
    _
  $region7: #{_lambda_.8} parent=0 // pred_check_branch
    %11 = sbr.rel (0) target = $region9
  $region8: #{_lambda_.8} parent=0 // pred_region
    _
  $region9: #{_lambda_.8} parent=0 // pred_fallthru
    _
  // Predicated region
  $region10: #{_lambda_.8} parent=0 // pred_check
    _
  $region11: #{_lambda_.8} parent=0 // pred_check_branch
    %13 = sbr.rel (0) target = $region13
  $region12: #{_lambda_.8} parent=0 // pred_region
    _
  $region13: #{_lambda_.8} parent=0 // pred_fallthru
    _
  %v14 = vld [vmem:[%s0] sm:$0xff]
  %v15 = vld [vmem:[%s0 + $0x8] sm:$0xff]
  %v16 = vld [vmem:[%s0 + $0x10] sm:$0xff]
  %v17 = vld [vmem:[%s0 + $0x18] sm:$0xff]
  %v18 = vld [vmem:[%s0 + $0x20] sm:$0xff]
  %v19 = vld [vmem:[%s0 + $0x28] sm:$0xff]
  %v20 = vld [vmem:[%s0 + $0x30] sm:$0xff]
  %v21 = vld [vmem:[%s0 + $0x38] sm:$0xff]
  %v22 = vld [vmem:[%s0 + $0x40] sm:$0xff]
  %v23 = vld [vmem:[%s1] sm:$0xff]
  %v24 = vld [vmem:[%s1 + $0x8] sm:$0xff]
  %v25 = vld [vmem:[%s1 + $0x10] sm:$0xff]
  %v26 = vld [vmem:[%s1 + $0x18] sm:$0xff]
  %v27 = vld [vmem:[%s1 + $0x20] sm:$0xff]
  %v28 = vld [vmem:[%s1 + $0x28] sm:$0xff]
  %v29 = vld [vmem:[%s1 + $0x30] sm:$0xff]
  %v30 = vld [vmem:[%s1 + $0x38] sm:$0xff]
  %v31 = vld [vmem:[%s1 + $0x40] sm:$0xff]
  %v32 = vld [vmem:[%s1 + $0x48] sm:$0xff]
  %v33 = vld [vmem:[%s1 + $0x50] sm:$0xff]
  %v34 = vld [vmem:[%s1 + $0x58] sm:$0xff]
  %v35 = vld [vmem:[%s1 + $0x60] sm:$0xff]
  %v36 = vld [vmem:[%s1 + $0x68] sm:$0xff]
  %v37 = vld [vmem:[%s1 + $0x70] sm:$0xff]
  %v38 = vld [vmem:[%s1 + $0x78] sm:$0xff]
  %v39 = vld [vmem:[%s2] sm:$0x1]
  %v41 = vlaneseq
  %v42 = vshrl.u32 %v41, 7
  %v43 = vsub.s32 0, %v42
  %v44 = vrot.slane %v39, %v43
  %46 = vmatprep.subr.mxu0 0.0
  %47 = vmatpush1.msra.mxu0 %v38
  %48 = vmatprep.subr.mxu0 0.0
  %49 = vmatpush1.msra.mxu0 %v37
  %50 = vmatprep.subr.mxu0 0.0
  %51 = vmatpush1.msra.mxu0 %v36
  %52 = vmatprep.subr.mxu0 0.0
  %53 = vmatpush1.msra.mxu0 %v35
  %54 = vmatprep.subr.mxu0 0.0
  %55 = vmatpush1.msra.mxu0 %v34
  %56 = vmatprep.subr.mxu0 0.0
  %57 = vmatpush1.msra.mxu0 %v33
  %58 = vmatprep.subr.mxu0 0.0
  %59 = vmatpush1.msra.mxu0 %v32
  %60 = vmatprep.subr.mxu0 0.0
  %61 = vmatpush1.msra.mxu0 %v31
  %62 = vmatprep.subr.mxu0 0.0
  %63 = vmatpush1.msra.mxu0 %v30
  %64 = vmatprep.subr.mxu0 0.0
  %65 = vmatpush1.msra.mxu0 %v29
  %66 = vmatprep.subr.mxu0 0.0
  %67 = vmatpush1.msra.mxu0 %v28
  %68 = vmatprep.subr.mxu0 0.0
  %69 = vmatpush1.msra.mxu0 %v27
  %70 = vmatprep.subr.mxu0 0.0
  %71 = vmatpush1.msra.mxu0 %v26
  %72 = vmatprep.subr.mxu0 0.0
  %73 = vmatpush1.msra.mxu0 %v25
  %74 = vmatprep.subr.mxu0 0.0
  %75 = vmatpush1.msra.mxu0 %v24
  %76 = vmatprep.subr.mxu0 0.0
  %77 = vmatpush1.msra.mxu0 %v23
  %78 = vmatprep.subr.mxu0 0.0
  %79 = vmatpush2.msra.mxu0 0.0
  %80 = vmatprep.subr.mxu0 0.0
  %81 = vmatpush2.msra.mxu0 0.0
  %82 = vmatprep.subr.mxu0 0.0
  %83 = vmatpush2.msra.mxu0 0.0
  %84 = vmatprep.subr.mxu0 0.0
  %85 = vmatpush2.msra.mxu0 0.0
  %86 = vmatprep.subr.mxu0 0.0
  %87 = vmatpush2.msra.mxu0 0.0
  %88 = vmatprep.subr.mxu0 0.0
  %89 = vmatpush2.msra.mxu0 0.0
  %90 = vmatprep.subr.mxu0 0.0
  %91 = vmatpush2.msra.mxu0 0.0
  %92 = vmatprep.subr.mxu0 0.0
  %93 = vmatpush2.msra.mxu0 0.0
  %94 = vmatprep.subr.mxu0 0.0
  %95 = vmatpush2.msra.mxu0 0.0
  %96 = vmatprep.subr.mxu0 0.0
  %97 = vmatpush2.msra.mxu0 0.0
  %98 = vmatprep.subr.mxu0 0.0
  %99 = vmatpush2.msra.mxu0 0.0
  %100 = vmatprep.subr.mxu0 0.0
  %101 = vmatpush2.msra.mxu0 0.0
  %102 = vmatprep.subr.mxu0 0.0
  %103 = vmatpush2.msra.mxu0 0.0
  %104 = vmatprep.subr.mxu0 0.0
  %105 = vmatpush2.msra.mxu0 0.0
  %106 = vmatprep.subr.mxu0 0.0
  %107 = vmatpush2.msra.mxu0 0.0
  %108 = vmatprep.subr.mxu0 0.0
  %109 = vmatpush2.msra.mxu0 0.0
  %110 = vmatprep.mubr.f32.mxu0 0.0
  %111 = vmatmul.mubr.f32.gmra.mxu0 %v14
  %v112 = vpop.f32.mrf.mxu0
  %v113 = vadd.f32 %v44, %v112
  %v114 = vpop.f32.mrf.mxu0
  %115 = vmatprep.mubr.f32.mxu0 0.0
  %116 = vmatmul.mubr.f32.gmra.mxu0 %v15
  %v117 = vpop.f32.mrf.mxu0
  %v118 = vadd.f32 %v44, %v117
  %v119 = vpop.f32.mrf.mxu0
  %120 = vmatprep.mubr.f32.mxu0 0.0
  %121 = vmatmul.mubr.f32.gmra.mxu0 %v16
  %v122 = vpop.f32.mrf.mxu0
  %v123 = vadd.f32 %v44, %v122
  %v124 = vpop.f32.mrf.mxu0
  %125 = vmatprep.mubr.f32.mxu0 0.0
  %126 = vmatmul.mubr.f32.gmra.mxu0 %v17
  %v127 = vpop.f32.mrf.mxu0
  %v128 = vadd.f32 %v44, %v127
  %v129 = vpop.f32.mrf.mxu0
  %130 = vmatprep.mubr.f32.mxu0 0.0
  %131 = vmatmul.mubr.f32.gmra.mxu0 %v18
  %v132 = vpop.f32.mrf.mxu0
  %v133 = vadd.f32 %v44, %v132
  %v134 = vpop.f32.mrf.mxu0
  %135 = vmatprep.mubr.f32.mxu0 0.0
  %136 = vmatmul.mubr.f32.gmra.mxu0 %v19
  %v137 = vpop.f32.mrf.mxu0
  %v138 = vadd.f32 %v44, %v137
  %v139 = vpop.f32.mrf.mxu0
  %140 = vmatprep.mubr.f32.mxu0 0.0
  %141 = vmatmul.mubr.f32.gmra.mxu0 %v20
  %v142 = vpop.f32.mrf.mxu0
  %v143 = vadd.f32 %v44, %v142
  %v144 = vpop.f32.mrf.mxu0
  %145 = vmatprep.mubr.f32.mxu0 0.0
  %146 = vmatmul.mubr.f32.gmra.mxu0 %v21
  %v147 = vpop.f32.mrf.mxu0
  %v148 = vadd.f32 %v44, %v147
  %v149 = vpop.f32.mrf.mxu0
  %150 = vmatprep.mubr.f32.mxu0 0.0
  %151 = vmatmul.mubr.f32.gmra.mxu0 %v22
  %v152 = vpop.f32.mrf.mxu0
  %v153 = vadd.f32 %v44, %v152
  %v154 = vpop.f32.mrf.mxu0
  %155 = vdwg.mxu0
  %vm156 = vcmask 130048
  %157 = vst.msk [vmem:[%s3] sm:$0xff] %vm156, %v113
  %158 = vst.msk [vmem:[%s3 + $0x8] sm:$0xff] %vm156, %v118
  %159 = vst.msk [vmem:[%s3 + $0x10] sm:$0xff] %vm156, %v123
  %160 = vst.msk [vmem:[%s3 + $0x18] sm:$0xff] %vm156, %v128
  %161 = vst.msk [vmem:[%s3 + $0x20] sm:$0xff] %vm156, %v133
  %162 = vst.msk [vmem:[%s3 + $0x28] sm:$0xff] %vm156, %v138
  %163 = vst.msk [vmem:[%s3 + $0x30] sm:$0xff] %vm156, %v143
  %164 = vst.msk [vmem:[%s3 + $0x38] sm:$0xff] %vm156, %v148
  %165 = vst.msk [vmem:[%s3 + $0x40] sm:$0xff] %vm156, %v153
  // Predicated region
  $region14: #{_lambda_.8} parent=0 // pred_check
    _
  $region15: #{_lambda_.8} parent=0 // pred_check_branch
    %167 = sbr.rel (0) target = $region17
  $region16: #{_lambda_.8} parent=0 // pred_region
    _
  $region17: #{_lambda_.8} parent=0 // pred_fallthru
    _
  // Predicated region
  $region18: #{_lambda_.8} parent=0 // pred_check
    _
  $region19: #{_lambda_.8} parent=0 // pred_check_branch
    %169 = sbr.rel (0) target = $region21
  $region20: #{_lambda_.8} parent=0 // pred_region
    _
  $region21: #{_lambda_.8} parent=0 // pred_fallthru
    _

// kernel: _lambda_.9
$region0: #{_lambda_.9}
  #allocation0 [shape = 'u32[]', space=smem, size = 0x4, offset = 0x4, fixed_abs, tag = 'smem constant byte address 0x4 - core index']
  #allocation1 [shape = 'u32[144,128]{1,0:T(1,128)}', space=vmem, size = 0x12000, scoped, tag = 'internal scratch']
  %s0 = inlined_call_operand.vmem [shape: f32[18,256], index: 0, kind: input, shape index: {}]
  %s1 = inlined_call_operand.vmem [shape: f32[256,32], index: 1, kind: input, shape index: {}]
  %s2 = inlined_call_operand.vmem [shape: f32[1,32], index: 2, kind: input, shape index: {}]
  %s3 = inlined_call_operand.vmem [shape: f32[18,32], index: 3, kind: output, shape index: {}]
  %s4 = sld [smem:[#allocation0]]
  $region22: #{_lambda_.9} parent=0
    _
  %s6 = ssub.s32 1, %s4
  %s7 = scalar_select 0, %s6, %s4
  // Predicated region
  $region2: #{_lambda_.9} parent=0 // pred_check
    _
  $region3: #{_lambda_.9} parent=0 // pred_check_branch
    %9 = sbr.rel (0) target = $region5
  $region4: #{_lambda_.9} parent=0 // pred_region
    _
  $region5: #{_lambda_.9} parent=0 // pred_fallthru
    _
  // Predicated region
  $region6: #{_lambda_.9} parent=0 // pred_check
    _
  $region7: #{_lambda_.9} parent=0 // pred_check_branch
    %11 = sbr.rel (0) target = $region9
  $region8: #{_lambda_.9} parent=0 // pred_region
    _
  $region9: #{_lambda_.9} parent=0 // pred_fallthru
    _
  // Predicated region
  $region10: #{_lambda_.9} parent=0 // pred_check
    _
  $region11: #{_lambda_.9} parent=0 // pred_check_branch
    %13 = sbr.rel (0) target = $region13
  $region12: #{_lambda_.9} parent=0 // pred_region
    _
  $region13: #{_lambda_.9} parent=0 // pred_fallthru
    _
  %v14 = vld [vmem:[%s0] sm:$0xff]
  %v15 = vld [vmem:[%s0 + $0x8] sm:$0xff]
  %v16 = vld [vmem:[%s0 + $0x10] sm:$0xff]
  %v17 = vld [vmem:[%s0 + $0x18] sm:$0xff]
  %v18 = vld [vmem:[%s0 + $0x20] sm:$0x3]
  %v19 = vld [vmem:[%s0 + $0x28] sm:$0x3]
  %v20 = vld [vmem:[%s1] sm:$0xff]
  %v21 = vld [vmem:[%s1 + $0x8] sm:$0xff]
  %v22 = vld [vmem:[%s1 + $0x10] sm:$0xff]
  %v23 = vld [vmem:[%s1 + $0x18] sm:$0xff]
  %v24 = vld [vmem:[%s1 + $0x20] sm:$0xff]
  %v25 = vld [vmem:[%s1 + $0x28] sm:$0xff]
  %v26 = vld [vmem:[%s1 + $0x30] sm:$0xff]
  %v27 = vld [vmem:[%s1 + $0x38] sm:$0xff]
  %v28 = vld [vmem:[%s1 + $0x40] sm:$0xff]
  %v29 = vld [vmem:[%s1 + $0x48] sm:$0xff]
  %v30 = vld [vmem:[%s1 + $0x50] sm:$0xff]
  %v31 = vld [vmem:[%s1 + $0x58] sm:$0xff]
  %v32 = vld [vmem:[%s1 + $0x60] sm:$0xff]
  %v33 = vld [vmem:[%s1 + $0x68] sm:$0xff]
  %v34 = vld [vmem:[%s1 + $0x70] sm:$0xff]
  %v35 = vld [vmem:[%s1 + $0x78] sm:$0xff]
  %v36 = vld [vmem:[%s1 + $0x80] sm:$0xff]
  %v37 = vld [vmem:[%s1 + $0x88] sm:$0xff]
  %v38 = vld [vmem:[%s1 + $0x90] sm:$0xff]
  %v39 = vld [vmem:[%s1 + $0x98] sm:$0xff]
  %v40 = vld [vmem:[%s1 + $0xa0] sm:$0xff]
  %v41 = vld [vmem:[%s1 + $0xa8] sm:$0xff]
  %v42 = vld [vmem:[%s1 + $0xb0] sm:$0xff]
  %v43 = vld [vmem:[%s1 + $0xb8] sm:$0xff]
  %v44 = vld [vmem:[%s1 + $0xc0] sm:$0xff]
  %v45 = vld [vmem:[%s1 + $0xc8] sm:$0xff]
  %v46 = vld [vmem:[%s1 + $0xd0] sm:$0xff]
  %v47 = vld [vmem:[%s1 + $0xd8] sm:$0xff]
  %v48 = vld [vmem:[%s1 + $0xe0] sm:$0xff]
  %v49 = vld [vmem:[%s1 + $0xe8] sm:$0xff]
  %v50 = vld [vmem:[%s1 + $0xf0] sm:$0xff]
  %v51 = vld [vmem:[%s1 + $0xf8] sm:$0xff]
  %v52 = vld [vmem:[%s2] sm:$0x1]
  %v54 = vlaneseq
  %v55 = vshrl.u32 %v54, 7
  %v56 = vsub.s32 0, %v55
  %v57 = vrot.slane %v52, %v56
  %59 = vmatprep.subr.mxu0 0.0
  %60 = vmatpush1.msra.mxu0 %v35
  %61 = vmatprep.subr.mxu0 0.0
  %62 = vmatpush1.msra.mxu0 %v34
  %63 = vmatprep.subr.mxu0 0.0
  %64 = vmatpush1.msra.mxu0 %v33
  %65 = vmatprep.subr.mxu0 0.0
  %66 = vmatpush1.msra.mxu0 %v32
  %67 = vmatprep.subr.mxu0 0.0
  %68 = vmatpush1.msra.mxu0 %v31
  %69 = vmatprep.subr.mxu0 0.0
  %70 = vmatpush1.msra.mxu0 %v30
  %71 = vmatprep.subr.mxu0 0.0
  %72 = vmatpush1.msra.mxu0 %v29
  %73 = vmatprep.subr.mxu0 0.0
  %74 = vmatpush1.msra.mxu0 %v28
  %75 = vmatprep.subr.mxu0 0.0
  %76 = vmatpush1.msra.mxu0 %v27
  %77 = vmatprep.subr.mxu0 0.0
  %78 = vmatpush1.msra.mxu0 %v26
  %79 = vmatprep.subr.mxu0 0.0
  %80 = vmatpush1.msra.mxu0 %v25
  %81 = vmatprep.subr.mxu0 0.0
  %82 = vmatpush1.msra.mxu0 %v24
  %83 = vmatprep.subr.mxu0 0.0
  %84 = vmatpush1.msra.mxu0 %v23
  %85 = vmatprep.subr.mxu0 0.0
  %86 = vmatpush1.msra.mxu0 %v22
  %87 = vmatprep.subr.mxu0 0.0
  %88 = vmatpush1.msra.mxu0 %v21
  %89 = vmatprep.subr.mxu0 0.0
  %90 = vmatpush1.msra.mxu0 %v20
  %91 = vmatprep.subr.mxu0 0.0
  %92 = vmatpush2.msra.mxu0 %v51
  %93 = vmatprep.subr.mxu0 0.0
  %94 = vmatpush2.msra.mxu0 %v50
  %95 = vmatprep.subr.mxu0 0.0
  %96 = vmatpush2.msra.mxu0 %v49
  %97 = vmatprep.subr.mxu0 0.0
  %98 = vmatpush2.msra.mxu0 %v48
  %99 = vmatprep.subr.mxu0 0.0
  %100 = vmatpush2.msra.mxu0 %v47
  %101 = vmatprep.subr.mxu0 0.0
  %102 = vmatpush2.msra.mxu0 %v46
  %103 = vmatprep.subr.mxu0 0.0
  %104 = vmatpush2.msra.mxu0 %v45
  %105 = vmatprep.subr.mxu0 0.0
  %106 = vmatpush2.msra.mxu0 %v44
  %107 = vmatprep.subr.mxu0 0.0
  %108 = vmatpush2.msra.mxu0 %v43
  %109 = vmatprep.subr.mxu0 0.0
  %110 = vmatpush2.msra.mxu0 %v42
  %111 = vmatprep.subr.mxu0 0.0
  %112 = vmatpush2.msra.mxu0 %v41
  %113 = vmatprep.subr.mxu0 0.0
  %114 = vmatpush2.msra.mxu0 %v40
  %115 = vmatprep.subr.mxu0 0.0
  %116 = vmatpush2.msra.mxu0 %v39
  %117 = vmatprep.subr.mxu0 0.0
  %118 = vmatpush2.msra.mxu0 %v38
  %119 = vmatprep.subr.mxu0 0.0
  %120 = vmatpush2.msra.mxu0 %v37
  %121 = vmatprep.subr.mxu0 0.0
  %122 = vmatpush2.msra.mxu0 %v36
  %123 = vmatprep.mubr.f32.mxu0 %v15
  %124 = vmatmul.mubr.f32.gmra.mxu0 %v14
  %v125 = vpop.f32.mrf.mxu0
  %v126 = vadd.f32 %v57, %v125
  %v127 = vpop.f32.mrf.mxu0
  %128 = vmatprep.mubr.f32.mxu0 %v17
  %129 = vmatmul.mubr.f32.gmra.mxu0 %v16
  %v130 = vpop.f32.mrf.mxu0
  %v131 = vadd.f32 %v57, %v130
  %v132 = vpop.f32.mrf.mxu0
  %133 = vmatprep.mubr.f32.mxu0 %v19
  %134 = vmatmul.mubr.f32.gmra.mxu0 %v18
  %v135 = vpop.f32.mrf.mxu0
  %v136 = vadd.f32 %v57, %v135
  %v137 = vpop.f32.mrf.mxu0
  %138 = vdwg.mxu0
  %vm139 = vcmask 261120
  %140 = vst.msk [vmem:[%s3] sm:$0xff] %vm139, %v126
  %141 = vst.msk [vmem:[%s3 + $0x8] sm:$0xff] %vm139, %v131
  %vm142 = vcmask 254976
  %143 = vst.msk [vmem:[%s3 + $0x10] sm:$0x3] %vm142, %v136
  // Predicated region
  $region14: #{_lambda_.9} parent=0 // pred_check
    _
  $region15: #{_lambda_.9} parent=0 // pred_check_branch
    %145 = sbr.rel (0) target = $region17
  $region16: #{_lambda_.9} parent=0 // pred_region
    _
  $region17: #{_lambda_.9} parent=0 // pred_fallthru
    _
  // Predicated region
  $region18: #{_lambda_.9} parent=0 // pred_check
    _
  $region19: #{_lambda_.9} parent=0 // pred_check_branch
    %147 = sbr.rel (0) target = $region21
  $region20: #{_lambda_.9} parent=0 // pred_region
    _
  $region21: #{_lambda_.9} parent=0 // pred_fallthru
    _

// kernel: _lambda_.11
$region0: #{_lambda_.11}
  #allocation0 [shape = 'u32[]', space=smem, size = 0x4, offset = 0x4, fixed_abs, tag = 'smem constant byte address 0x4 - core index']
  #allocation1 [shape = 'u32[144,128]{1,0:T(1,128)}', space=vmem, size = 0x12000, scoped, tag = 'internal scratch']
  %s0 = inlined_call_operand.vmem [shape: f32[32,128], index: 0, kind: input, shape index: {}]
  %s1 = inlined_call_operand.vmem [shape: f32[128,64], index: 1, kind: input, shape index: {}]
  %s2 = inlined_call_operand.vmem [shape: f32[1,64], index: 2, kind: input, shape index: {}]
  %s3 = inlined_call_operand.vmem [shape: f32[32,64], index: 3, kind: output, shape index: {}]
  %s4 = sld [smem:[#allocation0]]
  $region22: #{_lambda_.11} parent=0
    _
  %s6 = ssub.s32 1, %s4
  %s7 = scalar_select 0, %s6, %s4
  // Predicated region
  $region2: #{_lambda_.11} parent=0 // pred_check
    _
  $region3: #{_lambda_.11} parent=0 // pred_check_branch
    %9 = sbr.rel (0) target = $region5
  $region4: #{_lambda_.11} parent=0 // pred_region
    _
  $region5: #{_lambda_.11} parent=0 // pred_fallthru
    _
  // Predicated region
  $region6: #{_lambda_.11} parent=0 // pred_check
    _
  $region7: #{_lambda_.11} parent=0 // pred_check_branch
    %11 = sbr.rel (0) target = $region9
  $region8: #{_lambda_.11} parent=0 // pred_region
    _
  $region9: #{_lambda_.11} parent=0 // pred_fallthru
    _
  // Predicated region
  $region10: #{_lambda_.11} parent=0 // pred_check
    _
  $region11: #{_lambda_.11} parent=0 // pred_check_branch
    %13 = sbr.rel (0) target = $region13
  $region12: #{_lambda_.11} parent=0 // pred_region
    _
  $region13: #{_lambda_.11} parent=0 // pred_fallthru
    _
  %v14 = vld [vmem:[%s0] sm:$0xff]
  %v15 = vld [vmem:[%s0 + $0x8] sm:$0xff]
  %v16 = vld [vmem:[%s0 + $0x10] sm:$0xff]
  %v17 = vld [vmem:[%s0 + $0x18] sm:$0xff]
  %v18 = vld [vmem:[%s1] sm:$0xff]
  %v19 = vld [vmem:[%s1 + $0x8] sm:$0xff]
  %v20 = vld [vmem:[%s1 + $0x10] sm:$0xff]
  %v21 = vld [vmem:[%s1 + $0x18] sm:$0xff]
  %v22 = vld [vmem:[%s1 + $0x20] sm:$0xff]
  %v23 = vld [vmem:[%s1 + $0x28] sm:$0xff]
  %v24 = vld [vmem:[%s1 + $0x30] sm:$0xff]
  %v25 = vld [vmem:[%s1 + $0x38] sm:$0xff]
  %v26 = vld [vmem:[%s1 + $0x40] sm:$0xff]
  %v27 = vld [vmem:[%s1 + $0x48] sm:$0xff]
  %v28 = vld [vmem:[%s1 + $0x50] sm:$0xff]
  %v29 = vld [vmem:[%s1 + $0x58] sm:$0xff]
  %v30 = vld [vmem:[%s1 + $0x60] sm:$0xff]
  %v31 = vld [vmem:[%s1 + $0x68] sm:$0xff]
  %v32 = vld [vmem:[%s1 + $0x70] sm:$0xff]
  %v33 = vld [vmem:[%s1 + $0x78] sm:$0xff]
  %v34 = vld [vmem:[%s2] sm:$0x1]
  %v36 = vlaneseq
  %v37 = vshrl.u32 %v36, 7
  %v38 = vsub.s32 0, %v37
  %v39 = vrot.slane %v34, %v38
  %41 = vmatprep.subr.mxu0 0.0
  %42 = vmatpush1.msra.mxu0 %v33
  %43 = vmatprep.subr.mxu0 0.0
  %44 = vmatpush1.msra.mxu0 %v32
  %45 = vmatprep.subr.mxu0 0.0
  %46 = vmatpush1.msra.mxu0 %v31
  %47 = vmatprep.subr.mxu0 0.0
  %48 = vmatpush1.msra.mxu0 %v30
  %49 = vmatprep.subr.mxu0 0.0
  %50 = vmatpush1.msra.mxu0 %v29
  %51 = vmatprep.subr.mxu0 0.0
  %52 = vmatpush1.msra.mxu0 %v28
  %53 = vmatprep.subr.mxu0 0.0
  %54 = vmatpush1.msra.mxu0 %v27
  %55 = vmatprep.subr.mxu0 0.0
  %56 = vmatpush1.msra.mxu0 %v26
  %57 = vmatprep.subr.mxu0 0.0
  %58 = vmatpush1.msra.mxu0 %v25
  %59 = vmatprep.subr.mxu0 0.0
  %60 = vmatpush1.msra.mxu0 %v24
  %61 = vmatprep.subr.mxu0 0.0
  %62 = vmatpush1.msra.mxu0 %v23
  %63 = vmatprep.subr.mxu0 0.0
  %64 = vmatpush1.msra.mxu0 %v22
  %65 = vmatprep.subr.mxu0 0.0
  %66 = vmatpush1.msra.mxu0 %v21
  %67 = vmatprep.subr.mxu0 0.0
  %68 = vmatpush1.msra.mxu0 %v20
  %69 = vmatprep.subr.mxu0 0.0
  %70 = vmatpush1.msra.mxu0 %v19
  %71 = vmatprep.subr.mxu0 0.0
  %72 = vmatpush1.msra.mxu0 %v18
  %73 = vmatprep.subr.mxu0 0.0
  %74 = vmatpush2.msra.mxu0 0.0
  %75 = vmatprep.subr.mxu0 0.0
  %76 = vmatpush2.msra.mxu0 0.0
  %77 = vmatprep.subr.mxu0 0.0
  %78 = vmatpush2.msra.mxu0 0.0
  %79 = vmatprep.subr.mxu0 0.0
  %80 = vmatpush2.msra.mxu0 0.0
  %81 = vmatprep.subr.mxu0 0.0
  %82 = vmatpush2.msra.mxu0 0.0
  %83 = vmatprep.subr.mxu0 0.0
  %84 = vmatpush2.msra.mxu0 0.0
  %85 = vmatprep.subr.mxu0 0.0
  %86 = vmatpush2.msra.mxu0 0.0
  %87 = vmatprep.subr.mxu0 0.0
  %88 = vmatpush2.msra.mxu0 0.0
  %89 = vmatprep.subr.mxu0 0.0
  %90 = vmatpush2.msra.mxu0 0.0
  %91 = vmatprep.subr.mxu0 0.0
  %92 = vmatpush2.msra.mxu0 0.0
  %93 = vmatprep.subr.mxu0 0.0
  %94 = vmatpush2.msra.mxu0 0.0
  %95 = vmatprep.subr.mxu0 0.0
  %96 = vmatpush2.msra.mxu0 0.0
  %97 = vmatprep.subr.mxu0 0.0
  %98 = vmatpush2.msra.mxu0 0.0
  %99 = vmatprep.subr.mxu0 0.0
  %100 = vmatpush2.msra.mxu0 0.0
  %101 = vmatprep.subr.mxu0 0.0
  %102 = vmatpush2.msra.mxu0 0.0
  %103 = vmatprep.subr.mxu0 0.0
  %104 = vmatpush2.msra.mxu0 0.0
  %105 = vmatprep.mubr.f32.mxu0 0.0
  %106 = vmatmul.mubr.f32.gmra.mxu0 %v14
  %v107 = vpop.f32.mrf.mxu0
  %v108 = vadd.f32 %v39, %v107
  %v109 = vpop.f32.mrf.mxu0
  %110 = vmatprep.mubr.f32.mxu0 0.0
  %111 = vmatmul.mubr.f32.gmra.mxu0 %v15
  %v112 = vpop.f32.mrf.mxu0
  %v113 = vadd.f32 %v39, %v112
  %v114 = vpop.f32.mrf.mxu0
  %115 = vmatprep.mubr.f32.mxu0 0.0
  %116 = vmatmul.mubr.f32.gmra.mxu0 %v16
  %v117 = vpop.f32.mrf.mxu0
  %v118 = vadd.f32 %v39, %v117
  %v119 = vpop.f32.mrf.mxu0
  %120 = vmatprep.mubr.f32.mxu0 0.0
  %121 = vmatmul.mubr.f32.gmra.mxu0 %v17
  %v122 = vpop.f32.mrf.mxu0
  %v123 = vadd.f32 %v39, %v122
  %v124 = vpop.f32.mrf.mxu0
  %125 = vdwg.mxu0
  %vm126 = vcmask 523264
  %127 = vst.msk [vmem:[%s3] sm:$0xff] %vm126, %v108
  %128 = vst.msk [vmem:[%s3 + $0x8] sm:$0xff] %vm126, %v113
  %129 = vst.msk [vmem:[%s3 + $0x10] sm:$0xff] %vm126, %v118
  %130 = vst.msk [vmem:[%s3 + $0x18] sm:$0xff] %vm126, %v123
  // Predicated region
  $region14: #{_lambda_.11} parent=0 // pred_check
    _
  $region15: #{_lambda_.11} parent=0 // pred_check_branch
    %132 = sbr.rel (0) target = $region17
  $region16: #{_lambda_.11} parent=0 // pred_region
    _
  $region17: #{_lambda_.11} parent=0 // pred_fallthru
    _
  // Predicated region
  $region18: #{_lambda_.11} parent=0 // pred_check
    _
  $region19: #{_lambda_.11} parent=0 // pred_check_branch
    %134 = sbr.rel (0) target = $region21
  $region20: #{_lambda_.11} parent=0 // pred_region
    _
  $region21: #{_lambda_.11} parent=0 // pred_fallthru
    _

// kernel: _lambda_.10
$region0: #{_lambda_.10}
  #allocation0 [shape = 'u32[]', space=smem, size = 0x4, offset = 0x4, fixed_abs, tag = 'smem constant byte address 0x4 - core index']
  #allocation1 [shape = 'u32[144,128]{1,0:T(1,128)}', space=vmem, size = 0x12000, scoped, tag = 'internal scratch']
  %s0 = inlined_call_operand.vmem [shape: f32[2,288], index: 0, kind: input, shape index: {}]
  %s1 = inlined_call_operand.vmem [shape: f32[2,50], index: 1, kind: input, shape index: {}]
  %s2 = inlined_call_operand.vmem [shape: f32[2,32], index: 2, kind: input, shape index: {}]
  %s3 = inlined_call_operand.vmem [shape: f32[2,16], index: 3, kind: input, shape index: {}]
  %s4 = inlined_call_operand.vmem [shape: f32[288,100], index: 4, kind: input, shape index: {}]
  %s5 = inlined_call_operand.vmem [shape: f32[1,100], index: 5, kind: input, shape index: {}]
  %s6 = inlined_call_operand.vmem [shape: f32[100,10], index: 6, kind: input, shape index: {}]
  %s7 = inlined_call_operand.vmem [shape: f32[1,10], index: 7, kind: input, shape index: {}]
  %s8 = inlined_call_operand.vmem [shape: f32[10,32], index: 8, kind: input, shape index: {}]
  %s9 = inlined_call_operand.vmem [shape: f32[50,32], index: 9, kind: input, shape index: {}]
  %s10 = inlined_call_operand.vmem [shape: f32[1,32], index: 10, kind: input, shape index: {}]
  %s11 = inlined_call_operand.vmem [shape: f32[50,16], index: 11, kind: input, shape index: {}]
  %s12 = inlined_call_operand.vmem [shape: f32[1,16], index: 12, kind: input, shape index: {}]
  %s13 = inlined_call_operand.vmem [shape: f32[32,2], index: 13, kind: input, shape index: {}]
  %s14 = inlined_call_operand.vmem [shape: f32[1,2], index: 14, kind: input, shape index: {}]
  %s15 = inlined_call_operand.vmem [shape: f32[32,100], index: 15, kind: input, shape index: {}]
  %s16 = inlined_call_operand.vmem [shape: f32[1,100], index: 16, kind: input, shape index: {}]
  %s17 = inlined_call_operand.vmem [shape: f32[100,288], index: 17, kind: input, shape index: {}]
  %s18 = inlined_call_operand.vmem [shape: f32[1,288], index: 18, kind: input, shape index: {}]
  %s19 = inlined_call_operand.vmem [shape: f32[2], index: 19, kind: input, shape index: {}]
  %s20 = inlined_call_operand.hbm [shape: f32[2,2], index: 20, kind: output, shape index: {0}]
  %s21 = inlined_call_operand.vmem [shape: f32[2,288], index: 21, kind: output, shape index: {1}]
  %s22 = inlined_call_operand.hbm [shape: f32[2,32], index: 22, kind: output, shape index: {2}]
  %s23 = inlined_call_operand.hbm [shape: f32[2,16], index: 23, kind: output, shape index: {3}]
  %s24 = inlined_call_operand.hbm [shape: f32[2,32], index: 24, kind: output, shape index: {4}]
  %s25 = inlined_call_operand.hbm [shape: f32[2,16], index: 25, kind: output, shape index: {5}]
  %26 = xla_tuple %s20, %s21, %s22, %s23, %s24, %s25
  %s27 = sld [smem:[#allocation0]]
  $region134: #{_lambda_.10} parent=0
    _
  %s29 = ssub.s32 1, %s27
  %s30 = scalar_select 0, %s29, %s27
  $region1: #{_lambda_.10} parent=0
    #allocation2 [shape = 'u8[512]{0}', space=smem, size = 0x200, scoped, tag = 'input window, operand 19, single buffered']
    #allocation3 [shape = 's32[1]{0}', space=sflag, size = 0x4, scoped, tag = 'scoped memory for _lambda_.10']
    #allocation4 [shape = 's32[1]{0}', space=sflag, size = 0x4, scoped, tag = 'scoped memory for _lambda_.10']
    #allocation5 [shape = 'u8[1024]{0}', space=vmem, size = 0x400, scoped, tag = 'output window, operand 0, single buffered']
    #allocation6 [shape = 'u8[1024]{0}', space=vmem, size = 0x400, scoped, tag = 'output window, operand 2, single buffered']
    #allocation7 [shape = 's32[1]{0}', space=sflag, size = 0x4, scoped, tag = 'scoped memory for _lambda_.10']
    #allocation8 [shape = 'u8[1024]{0}', space=vmem, size = 0x400, scoped, tag = 'output window, operand 3, single buffered']
    #allocation9 [shape = 'u8[1024]{0}', space=vmem, size = 0x400, scoped, tag = 'output window, operand 4, single buffered']
    #allocation10 [shape = 's32[1]{0}', space=sflag, size = 0x4, scoped, tag = 'scoped memory for _lambda_.10']
    #allocation11 [shape = 'u8[1024]{0}', space=vmem, size = 0x400, scoped, tag = 'output window, operand 5, single buffered']
    %31 = vsyncpa [#allocation4], 0
    %32 = vsyncpa [#allocation3], 0
    %33 = vsyncpa [#allocation7], 0
    %34 = vsyncpa [#allocation10], 0
    // Predicated region
    $region2: #{_lambda_.10} parent=1 // pred_check
      _
    $region3: #{_lambda_.10} parent=1 // pred_check_branch
      %36 = sbr.rel (0) target = $region5
    $region4: #{_lambda_.10} parent=1 // pred_region
      _
    $region5: #{_lambda_.10} parent=1 // pred_fallthru
      _
    // Predicated region
    $region6: #{_lambda_.10} parent=1 // pred_check
      _
    $region7: #{_lambda_.10} parent=1 // pred_check_branch
      %38 = sbr.rel (0) target = $region9
    $region8: #{_lambda_.10} parent=1 // pred_region
      _
    $region9: #{_lambda_.10} parent=1 // pred_fallthru
      _
    // Predicated region
    $region10: #{_lambda_.10} parent=1 // pred_check
      _
    $region11: #{_lambda_.10} parent=1 // pred_check_branch
      %40 = sbr.rel (0) target = $region13
    $region12: #{_lambda_.10} parent=1 // pred_region
      _
    $region13: #{_lambda_.10} parent=1 // pred_fallthru
      _
    // Predicated region
    $region14: #{_lambda_.10} parent=1 // pred_check
      _
    $region15: #{_lambda_.10} parent=1 // pred_check_branch
      %42 = sbr.rel (0) target = $region17
    $region16: #{_lambda_.10} parent=1 // pred_region
      _
    $region17: #{_lambda_.10} parent=1 // pred_fallthru
      _
    // Predicated region
    $region18: #{_lambda_.10} parent=1 // pred_check
      _
    $region19: #{_lambda_.10} parent=1 // pred_check_branch
      %44 = sbr.rel (0) target = $region21
    $region20: #{_lambda_.10} parent=1 // pred_region
      _
    $region21: #{_lambda_.10} parent=1 // pred_fallthru
      _
    // Predicated region
    $region22: #{_lambda_.10} parent=1 // pred_check
      _
    $region23: #{_lambda_.10} parent=1 // pred_check_branch
      %46 = sbr.rel (0) target = $region25
    $region24: #{_lambda_.10} parent=1 // pred_region
      _
    $region25: #{_lambda_.10} parent=1 // pred_fallthru
      _
    // Predicated region
    $region26: #{_lambda_.10} parent=1 // pred_check
      _
    $region27: #{_lambda_.10} parent=1 // pred_check_branch
      %48 = sbr.rel (0) target = $region29
    $region28: #{_lambda_.10} parent=1 // pred_region
      _
    $region29: #{_lambda_.10} parent=1 // pred_fallthru
      _
    // Predicated region
    $region30: #{_lambda_.10} parent=1 // pred_check
      _
    $region31: #{_lambda_.10} parent=1 // pred_check_branch
      %50 = sbr.rel (0) target = $region33
    $region32: #{_lambda_.10} parent=1 // pred_region
      _
    $region33: #{_lambda_.10} parent=1 // pred_fallthru
      _
    // Predicated region
    $region34: #{_lambda_.10} parent=1 // pred_check
      _
    $region35: #{_lambda_.10} parent=1 // pred_check_branch
      %52 = sbr.rel (0) target = $region37
    $region36: #{_lambda_.10} parent=1 // pred_region
      _
    $region37: #{_lambda_.10} parent=1 // pred_fallthru
      _
    // Predicated region
    $region38: #{_lambda_.10} parent=1 // pred_check
      _
    $region39: #{_lambda_.10} parent=1 // pred_check_branch
      %54 = sbr.rel (0) target = $region41
    $region40: #{_lambda_.10} parent=1 // pred_region
      _
    $region41: #{_lambda_.10} parent=1 // pred_fallthru
      _
    // Predicated region
    $region42: #{_lambda_.10} parent=1 // pred_check
      _
    $region43: #{_lambda_.10} parent=1 // pred_check_branch
      %56 = sbr.rel (0) target = $region45
    $region44: #{_lambda_.10} parent=1 // pred_region
      _
    $region45: #{_lambda_.10} parent=1 // pred_fallthru
      _
    // Predicated region
    $region46: #{_lambda_.10} parent=1 // pred_check
      _
    $region47: #{_lambda_.10} parent=1 // pred_check_branch
      %58 = sbr.rel (0) target = $region49
    $region48: #{_lambda_.10} parent=1 // pred_region
      _
    $region49: #{_lambda_.10} parent=1 // pred_fallthru
      _
    // Predicated region
    $region50: #{_lambda_.10} parent=1 // pred_check
      _
    $region51: #{_lambda_.10} parent=1 // pred_check_branch
      %60 = sbr.rel (0) target = $region53
    $region52: #{_lambda_.10} parent=1 // pred_region
      _
    $region53: #{_lambda_.10} parent=1 // pred_fallthru
      _
    // Predicated region
    $region54: #{_lambda_.10} parent=1 // pred_check
      _
    $region55: #{_lambda_.10} parent=1 // pred_check_branch
      %62 = sbr.rel (0) target = $region57
    $region56: #{_lambda_.10} parent=1 // pred_region
      _
    $region57: #{_lambda_.10} parent=1 // pred_fallthru
      _
    // Predicated region
    $region58: #{_lambda_.10} parent=1 // pred_check
      _
    $region59: #{_lambda_.10} parent=1 // pred_check_branch
      %64 = sbr.rel (0) target = $region61
    $region60: #{_lambda_.10} parent=1 // pred_region
      _
    $region61: #{_lambda_.10} parent=1 // pred_fallthru
      _
    // Predicated region
    $region62: #{_lambda_.10} parent=1 // pred_check
      _
    $region63: #{_lambda_.10} parent=1 // pred_check_branch
      %66 = sbr.rel (0) target = $region65
    $region64: #{_lambda_.10} parent=1 // pred_region
      _
    $region65: #{_lambda_.10} parent=1 // pred_fallthru
      _
    // Predicated region
    $region66: #{_lambda_.10} parent=1 // pred_check
      _
    $region67: #{_lambda_.10} parent=1 // pred_check_branch
      %68 = sbr.rel (0) target = $region69
    $region68: #{_lambda_.10} parent=1 // pred_region
      _
    $region69: #{_lambda_.10} parent=1 // pred_fallthru
      _
    // Predicated region
    $region70: #{_lambda_.10} parent=1 // pred_check
      _
    $region71: #{_lambda_.10} parent=1 // pred_check_branch
      %70 = sbr.rel (0) target = $region73
    $region72: #{_lambda_.10} parent=1 // pred_region
      _
    $region73: #{_lambda_.10} parent=1 // pred_fallthru
      _
    // Predicated region
    $region74: #{_lambda_.10} parent=1 // pred_check
      _
    $region75: #{_lambda_.10} parent=1 // pred_check_branch
      %72 = sbr.rel (0) target = $region77
    $region76: #{_lambda_.10} parent=1 // pred_region
      _
    $region77: #{_lambda_.10} parent=1 // pred_fallthru
      _
    // Predicated region
    $region78: #{_lambda_.10} parent=1 // pred_check
      _
    $region79: #{_lambda_.10} parent=1 // pred_check_branch
      %74 = sbr.rel (0) target = $region81
    $region80: #{_lambda_.10} parent=1 // pred_region
      %s76 = ssub.s32 16, 16
      %77 = vsyncadd [#allocation4], %s76
      %s79 = sshll.u32 %s19, 4
      %s80 = int_to_ptr.vmem [resolvable:$true] %s79
      %82 = dma.vmem_to_smem %s80, 16, [#allocation2], [#allocation4]
    $region81: #{_lambda_.10} parent=1 // pred_fallthru
      _
    // Predicated region
    $region82: #{_lambda_.10} parent=1 // pred_check
      _
    $region83: #{_lambda_.10} parent=1 // pred_check_branch
      %84 = sbr.rel (0) target = $region85
    $region84: #{_lambda_.10} parent=1 // pred_region
      %85 = dma.done [#allocation4], 16
    $region85: #{_lambda_.10} parent=1 // pred_fallthru
      _
    %86 = sfence
    %v87 = vld [vmem:[%s0] sm:$0x3f]
    %v88 = vld [vmem:[%s4] sm:$0xff]
    %v89 = vld [vmem:[%s4 + $0x8] sm:$0xff]
    %v90 = vld [vmem:[%s4 + $0x10] sm:$0xff]
    %v91 = vld [vmem:[%s4 + $0x18] sm:$0xff]
    %v92 = vld [vmem:[%s4 + $0x20] sm:$0xff]
    %v93 = vld [vmem:[%s4 + $0x28] sm:$0xff]
    %v94 = vld [vmem:[%s4 + $0x30] sm:$0xff]
    %v95 = vld [vmem:[%s4 + $0x38] sm:$0xff]
    %v96 = vld [vmem:[%s4 + $0x40] sm:$0xff]
    %v97 = vld [vmem:[%s4 + $0x48] sm:$0xff]
    %v98 = vld [vmem:[%s4 + $0x50] sm:$0xff]
    %v99 = vld [vmem:[%s4 + $0x58] sm:$0xff]
    %v100 = vld [vmem:[%s4 + $0x60] sm:$0xff]
    %v101 = vld [vmem:[%s4 + $0x68] sm:$0xff]
    %v102 = vld [vmem:[%s4 + $0x70] sm:$0xff]
    %v103 = vld [vmem:[%s4 + $0x78] sm:$0xff]
    %v104 = vld [vmem:[%s4 + $0x80] sm:$0xff]
    %v105 = vld [vmem:[%s4 + $0x88] sm:$0xff]
    %v106 = vld [vmem:[%s4 + $0x90] sm:$0xff]
    %v107 = vld [vmem:[%s4 + $0x98] sm:$0xff]
    %v108 = vld [vmem:[%s4 + $0xa0] sm:$0xff]
    %v109 = vld [vmem:[%s4 + $0xa8] sm:$0xff]
    %v110 = vld [vmem:[%s4 + $0xb0] sm:$0xff]
    %v111 = vld [vmem:[%s4 + $0xb8] sm:$0xff]
    %v112 = vld [vmem:[%s4 + $0xc0] sm:$0xff]
    %v113 = vld [vmem:[%s4 + $0xc8] sm:$0xff]
    %v114 = vld [vmem:[%s4 + $0xd0] sm:$0xff]
    %v115 = vld [vmem:[%s4 + $0xd8] sm:$0xff]
    %v116 = vld [vmem:[%s4 + $0xe0] sm:$0xff]
    %v117 = vld [vmem:[%s4 + $0xe8] sm:$0xff]
    %v118 = vld [vmem:[%s4 + $0xf0] sm:$0xff]
    %v119 = vld [vmem:[%s4 + $0xf8] sm:$0xff]
    %v120 = vld [vmem:[%s4 + $0x100] sm:$0xff]
    %v121 = vld [vmem:[%s4 + $0x108] sm:$0xff]
    %v122 = vld [vmem:[%s4 + $0x110] sm:$0xff]
    %v123 = vld [vmem:[%s4 + $0x118] sm:$0xff]
    %v124 = vld [vmem:[%s5] sm:$0x1]
    %v126 = vlaneseq
    %v127 = vshrl.u32 %v126, 7
    %v128 = vsub.s32 0, %v127
    %v129 = vrot.slane %v124, %v128
    %v132 = vcombine.high %v87, %v87
    %v134 = vunpack.c.l.s4 1983009808
    %v135 = vunpack.c.0.s8 %v134
    %v136 = vlaneseq
    %v137 = vshrl.u32 %v136, 7
    %v138 = vsub.s32 %v135, %v137
    %v139 = vrot.slane %v87, %v138
    %v141 = vunpack.c.l.s4 1983009808
    %v142 = vunpack.c.0.s8 %v141
    %v143 = vlaneseq
    %v144 = vshrl.u32 %v143, 7
    %v145 = vsub.s32 %v142, %v144
    %v146 = vrot.slane %v132, %v145
    %v147 = vcombine.high %v139, %v139
    %vm150 = vcmask 261120
    %v151 = vsel %vm150, %v146, 0
    %153 = vmatprep.subr.mxu0 0.0
    %154 = vmatpush1.msra.mxu0 %v103
    %155 = vmatprep.subr.mxu0 0.0
    %156 = vmatpush1.msra.mxu0 %v102
    %157 = vmatprep.subr.mxu0 0.0
    %158 = vmatpush1.msra.mxu0 %v101
    %159 = vmatprep.subr.mxu0 0.0
    %160 = vmatpush1.msra.mxu0 %v100
    %161 = vmatprep.subr.mxu0 0.0
    %162 = vmatpush1.msra.mxu0 %v99
    %163 = vmatprep.subr.mxu0 0.0
    %164 = vmatpush1.msra.mxu0 %v98
    %165 = vmatprep.subr.mxu0 0.0
    %166 = vmatpush1.msra.mxu0 %v97
    %167 = vmatprep.subr.mxu0 0.0
    %168 = vmatpush1.msra.mxu0 %v96
    %169 = vmatprep.subr.mxu0 0.0
    %170 = vmatpush1.msra.mxu0 %v95
    %171 = vmatprep.subr.mxu0 0.0
    %172 = vmatpush1.msra.mxu0 %v94
    %173 = vmatprep.subr.mxu0 0.0
    %174 = vmatpush1.msra.mxu0 %v93
    %175 = vmatprep.subr.mxu0 0.0
    %176 = vmatpush1.msra.mxu0 %v92
    %177 = vmatprep.subr.mxu0 0.0
    %178 = vmatpush1.msra.mxu0 %v91
    %179 = vmatprep.subr.mxu0 0.0
    %180 = vmatpush1.msra.mxu0 %v90
    %181 = vmatprep.subr.mxu0 0.0
    %182 = vmatpush1.msra.mxu0 %v89
    %183 = vmatprep.subr.mxu0 0.0
    %184 = vmatpush1.msra.mxu0 %v88
    %185 = vmatprep.subr.mxu0 0.0
    %186 = vmatpush2.msra.mxu0 %v119
    %187 = vmatprep.subr.mxu0 0.0
    %188 = vmatpush2.msra.mxu0 %v118
    %189 = vmatprep.subr.mxu0 0.0
    %190 = vmatpush2.msra.mxu0 %v117
    %191 = vmatprep.subr.mxu0 0.0
    %192 = vmatpush2.msra.mxu0 %v116
    %193 = vmatprep.subr.mxu0 0.0
    %194 = vmatpush2.msra.mxu0 %v115
    %195 = vmatprep.subr.mxu0 0.0
    %196 = vmatpush2.msra.mxu0 %v114
    %197 = vmatprep.subr.mxu0 0.0
    %198 = vmatpush2.msra.mxu0 %v113
    %199 = vmatprep.subr.mxu0 0.0
    %200 = vmatpush2.msra.mxu0 %v112
    %201 = vmatprep.subr.mxu0 0.0
    %202 = vmatpush2.msra.mxu0 %v111
    %203 = vmatprep.subr.mxu0 0.0
    %204 = vmatpush2.msra.mxu0 %v110
    %205 = vmatprep.subr.mxu0 0.0
    %206 = vmatpush2.msra.mxu0 %v109
    %207 = vmatprep.subr.mxu0 0.0
    %208 = vmatpush2.msra.mxu0 %v108
    %209 = vmatprep.subr.mxu0 0.0
    %210 = vmatpush2.msra.mxu0 %v107
    %211 = vmatprep.subr.mxu0 0.0
    %212 = vmatpush2.msra.mxu0 %v106
    %213 = vmatprep.subr.mxu0 0.0
    %214 = vmatpush2.msra.mxu0 %v105
    %215 = vmatprep.subr.mxu0 0.0
    %216 = vmatpush2.msra.mxu0 %v104
    %217 = vmatprep.mubr.f32.mxu0 %v147
    %218 = vmatmul.mubr.f32.gmra.mxu0 %v139
    %v219 = vpop.f32.mrf.mxu0
    %v220 = vadd.f32 %v129, %v219
    %v221 = vpop.f32.mrf.mxu0
    %222 = vdwg.mxu0
    %223 = vmatprep.subr.mxu0 0.0
    %224 = vmatpush1.msra.mxu0 0.0
    %225 = vmatprep.subr.mxu0 0.0
    %226 = vmatpush1.msra.mxu0 0.0
    %227 = vmatprep.subr.mxu0 0.0
    %228 = vmatpush1.msra.mxu0 0.0
    %229 = vmatprep.subr.mxu0 0.0
    %230 = vmatpush1.msra.mxu0 0.0
    %231 = vmatprep.subr.mxu0 0.0
    %232 = vmatpush1.msra.mxu0 0.0
    %233 = vmatprep.subr.mxu0 0.0
    %234 = vmatpush1.msra.mxu0 0.0
    %235 = vmatprep.subr.mxu0 0.0
    %236 = vmatpush1.msra.mxu0 0.0
    %237 = vmatprep.subr.mxu0 0.0
    %238 = vmatpush1.msra.mxu0 0.0
    %239 = vmatprep.subr.mxu0 0.0
    %240 = vmatpush1.msra.mxu0 0.0
    %241 = vmatprep.subr.mxu0 0.0
    %242 = vmatpush1.msra.mxu0 0.0
    %243 = vmatprep.subr.mxu0 0.0
    %244 = vmatpush1.msra.mxu0 0.0
    %245 = vmatprep.subr.mxu0 0.0
    %246 = vmatpush1.msra.mxu0 0.0
    %247 = vmatprep.subr.mxu0 0.0
    %248 = vmatpush1.msra.mxu0 %v123
    %249 = vmatprep.subr.mxu0 0.0
    %250 = vmatpush1.msra.mxu0 %v122
    %251 = vmatprep.subr.mxu0 0.0
    %252 = vmatpush1.msra.mxu0 %v121
    %253 = vmatprep.subr.mxu0 0.0
    %254 = vmatpush1.msra.mxu0 %v120
    %255 = vmatprep.subr.mxu0 0.0
    %256 = vmatpush2.msra.mxu0 0.0
    %257 = vmatprep.subr.mxu0 0.0
    %258 = vmatpush2.msra.mxu0 0.0
    %259 = vmatprep.subr.mxu0 0.0
    %260 = vmatpush2.msra.mxu0 0.0
    %261 = vmatprep.subr.mxu0 0.0
    %262 = vmatpush2.msra.mxu0 0.0
    %263 = vmatprep.subr.mxu0 0.0
    %264 = vmatpush2.msra.mxu0 0.0
    %265 = vmatprep.subr.mxu0 0.0
    %266 = vmatpush2.msra.mxu0 0.0
    %267 = vmatprep.subr.mxu0 0.0
    %268 = vmatpush2.msra.mxu0 0.0
    %269 = vmatprep.subr.mxu0 0.0
    %270 = vmatpush2.msra.mxu0 0.0
    %271 = vmatprep.subr.mxu0 0.0
    %272 = vmatpush2.msra.mxu0 0.0
    %273 = vmatprep.subr.mxu0 0.0
    %274 = vmatpush2.msra.mxu0 0.0
    %275 = vmatprep.subr.mxu0 0.0
    %276 = vmatpush2.msra.mxu0 0.0
    %277 = vmatprep.subr.mxu0 0.0
    %278 = vmatpush2.msra.mxu0 0.0
    %279 = vmatprep.subr.mxu0 0.0
    %280 = vmatpush2.msra.mxu0 0.0
    %281 = vmatprep.subr.mxu0 0.0
    %282 = vmatpush2.msra.mxu0 0.0
    %283 = vmatprep.subr.mxu0 0.0
    %284 = vmatpush2.msra.mxu0 0.0
    %285 = vmatprep.subr.mxu0 0.0
    %286 = vmatpush2.msra.mxu0 0.0
    %287 = vmatprep.mubr.f32.mxu0 0.0
    %288 = vmatmul.mubr.f32.gmra.mxu0 %v151
    %v289 = vpop.f32.mrf.mxu0
    %v290 = vadd.f32 %v220, %v289
    %v291 = vpop.f32.mrf.mxu0
    %292 = vdwg.mxu0
    %v293 = vld [vmem:[%s6] sm:$0xff]
    %v294 = vld [vmem:[%s6 + $0x8] sm:$0xff]
    %v295 = vld [vmem:[%s6 + $0x10] sm:$0xff]
    %v296 = vld [vmem:[%s6 + $0x18] sm:$0xff]
    %v297 = vld [vmem:[%s6 + $0x20] sm:$0xff]
    %v298 = vld [vmem:[%s6 + $0x28] sm:$0xff]
    %v299 = vld [vmem:[%s6 + $0x30] sm:$0xff]
    %v300 = vld [vmem:[%s6 + $0x38] sm:$0xff]
    %v301 = vld [vmem:[%s6 + $0x40] sm:$0xff]
    %v302 = vld [vmem:[%s6 + $0x48] sm:$0xff]
    %v303 = vld [vmem:[%s6 + $0x50] sm:$0xff]
    %v304 = vld [vmem:[%s6 + $0x58] sm:$0xff]
    %v305 = vld [vmem:[%s6 + $0x60] sm:$0xf]
    %v306 = vld [vmem:[%s7] sm:$0x1]
    %v308 = vlaneseq
    %v309 = vshrl.u32 %v308, 7
    %v310 = vsub.s32 0, %v309
    %v311 = vrot.slane %v306, %v310
    %vm313 = vcmask 818176
    %v315 = vsel %vm313, %v290, 0
    %vm317 = vcmask 1043456
    %v319 = vsel %vm317, %v305, 0
    %321 = vmatprep.subr.mxu0 0.0
    %322 = vmatpush1.msra.mxu0 0.0
    %323 = vmatprep.subr.mxu0 0.0
    %324 = vmatpush1.msra.mxu0 0.0
    %325 = vmatprep.subr.mxu0 0.0
    %326 = vmatpush1.msra.mxu0 0.0
    %327 = vmatprep.subr.mxu0 0.0
    %328 = vmatpush1.msra.mxu0 %v319
    %329 = vmatprep.subr.mxu0 0.0
    %330 = vmatpush1.msra.mxu0 %v304
    %331 = vmatprep.subr.mxu0 0.0
    %332 = vmatpush1.msra.mxu0 %v303
    %333 = vmatprep.subr.mxu0 0.0
    %334 = vmatpush1.msra.mxu0 %v302
    %335 = vmatprep.subr.mxu0 0.0
    %336 = vmatpush1.msra.mxu0 %v301
    %337 = vmatprep.subr.mxu0 0.0
    %338 = vmatpush1.msra.mxu0 %v300
    %339 = vmatprep.subr.mxu0 0.0
    %340 = vmatpush1.msra.mxu0 %v299
    %341 = vmatprep.subr.mxu0 0.0
    %342 = vmatpush1.msra.mxu0 %v298
    %343 = vmatprep.subr.mxu0 0.0
    %344 = vmatpush1.msra.mxu0 %v297
    %345 = vmatprep.subr.mxu0 0.0
    %346 = vmatpush1.msra.mxu0 %v296
    %347 = vmatprep.subr.mxu0 0.0
    %348 = vmatpush1.msra.mxu0 %v295
    %349 = vmatprep.subr.mxu0 0.0
    %350 = vmatpush1.msra.mxu0 %v294
    %351 = vmatprep.subr.mxu0 0.0
    %352 = vmatpush1.msra.mxu0 %v293
    %353 = vmatprep.subr.mxu0 0.0
    %354 = vmatpush2.msra.mxu0 0.0
    %355 = vmatprep.subr.mxu0 0.0
    %356 = vmatpush2.msra.mxu0 0.0
    %357 = vmatprep.subr.mxu0 0.0
    %358 = vmatpush2.msra.mxu0 0.0
    %359 = vmatprep.subr.mxu0 0.0
    %360 = vmatpush2.msra.mxu0 0.0
    %361 = vmatprep.subr.mxu0 0.0
    %362 = vmatpush2.msra.mxu0 0.0
    %363 = vmatprep.subr.mxu0 0.0
    %364 = vmatpush2.msra.mxu0 0.0
    %365 = vmatprep.subr.mxu0 0.0
    %366 = vmatpush2.msra.mxu0 0.0
    %367 = vmatprep.subr.mxu0 0.0
    %368 = vmatpush2.msra.mxu0 0.0
    %369 = vmatprep.subr.mxu0 0.0
    %370 = vmatpush2.msra.mxu0 0.0
    %371 = vmatprep.subr.mxu0 0.0
    %372 = vmatpush2.msra.mxu0 0.0
    %373 = vmatprep.subr.mxu0 0.0
    %374 = vmatpush2.msra.mxu0 0.0
    %375 = vmatprep.subr.mxu0 0.0
    %376 = vmatpush2.msra.mxu0 0.0
    %377 = vmatprep.subr.mxu0 0.0
    %378 = vmatpush2.msra.mxu0 0.0
    %379 = vmatprep.subr.mxu0 0.0
    %380 = vmatpush2.msra.mxu0 0.0
    %381 = vmatprep.subr.mxu0 0.0
    %382 = vmatpush2.msra.mxu0 0.0
    %383 = vmatprep.subr.mxu0 0.0
    %384 = vmatpush2.msra.mxu0 0.0
    %385 = vmatprep.mubr.f32.mxu0 0.0
    %386 = vmatmul.mubr.f32.gmra.mxu0 %v315
    %v387 = vpop.f32.mrf.mxu0
    %v388 = vadd.f32 %v311, %v387
    %v389 = vpop.f32.mrf.mxu0
    %390 = vdwg.mxu0
    %v391 = vld [vmem:[%s1] sm:$0x3]
    %v392 = vld [vmem:[%s8] sm:$0xff]
    %v393 = vld [vmem:[%s8 + $0x8] sm:$0x3]
    %v394 = vld [vmem:[%s9] sm:$0xff]
    %v395 = vld [vmem:[%s9 + $0x8] sm:$0xff]
    %v396 = vld [vmem:[%s9 + $0x10] sm:$0xff]
    %v397 = vld [vmem:[%s9 + $0x18] sm:$0xff]
    %v398 = vld [vmem:[%s9 + $0x20] sm:$0xff]
    %v399 = vld [vmem:[%s9 + $0x28] sm:$0xff]
    %v400 = vld [vmem:[%s9 + $0x30] sm:$0x3]
    %vm401 = vcmask 408576
    %v403 = vsel %vm401, %v391, 0
    %vm405 = vcmask 1041408
    %v407 = vsel %vm405, %v400, 0
    %409 = vmatprep.subr.mxu0 0.0
    %410 = vmatpush1.msra.mxu0 0.0
    %411 = vmatprep.subr.mxu0 0.0
    %412 = vmatpush1.msra.mxu0 0.0
    %413 = vmatprep.subr.mxu0 0.0
    %414 = vmatpush1.msra.mxu0 0.0
    %415 = vmatprep.subr.mxu0 0.0
    %416 = vmatpush1.msra.mxu0 0.0
    %417 = vmatprep.subr.mxu0 0.0
    %418 = vmatpush1.msra.mxu0 0.0
    %419 = vmatprep.subr.mxu0 0.0
    %420 = vmatpush1.msra.mxu0 0.0
    %421 = vmatprep.subr.mxu0 0.0
    %422 = vmatpush1.msra.mxu0 0.0
    %423 = vmatprep.subr.mxu0 0.0
    %424 = vmatpush1.msra.mxu0 0.0
    %425 = vmatprep.subr.mxu0 0.0
    %426 = vmatpush1.msra.mxu0 0.0
    %427 = vmatprep.subr.mxu0 0.0
    %428 = vmatpush1.msra.mxu0 %v407
    %429 = vmatprep.subr.mxu0 0.0
    %430 = vmatpush1.msra.mxu0 %v399
    %431 = vmatprep.subr.mxu0 0.0
    %432 = vmatpush1.msra.mxu0 %v398
    %433 = vmatprep.subr.mxu0 0.0
    %434 = vmatpush1.msra.mxu0 %v397
    %435 = vmatprep.subr.mxu0 0.0
    %436 = vmatpush1.msra.mxu0 %v396
    %437 = vmatprep.subr.mxu0 0.0
    %438 = vmatpush1.msra.mxu0 %v395
    %439 = vmatprep.subr.mxu0 0.0
    %440 = vmatpush1.msra.mxu0 %v394
    %441 = vmatprep.subr.mxu0 0.0
    %442 = vmatpush2.msra.mxu0 0.0
    %443 = vmatprep.subr.mxu0 0.0
    %444 = vmatpush2.msra.mxu0 0.0
    %445 = vmatprep.subr.mxu0 0.0
    %446 = vmatpush2.msra.mxu0 0.0
    %447 = vmatprep.subr.mxu0 0.0
    %448 = vmatpush2.msra.mxu0 0.0
    %449 = vmatprep.subr.mxu0 0.0
    %450 = vmatpush2.msra.mxu0 0.0
    %451 = vmatprep.subr.mxu0 0.0
    %452 = vmatpush2.msra.mxu0 0.0
    %453 = vmatprep.subr.mxu0 0.0
    %454 = vmatpush2.msra.mxu0 0.0
    %455 = vmatprep.subr.mxu0 0.0
    %456 = vmatpush2.msra.mxu0 0.0
    %457 = vmatprep.subr.mxu0 0.0
    %458 = vmatpush2.msra.mxu0 0.0
    %459 = vmatprep.subr.mxu0 0.0
    %460 = vmatpush2.msra.mxu0 0.0
    %461 = vmatprep.subr.mxu0 0.0
    %462 = vmatpush2.msra.mxu0 0.0
    %463 = vmatprep.subr.mxu0 0.0
    %464 = vmatpush2.msra.mxu0 0.0
    %465 = vmatprep.subr.mxu0 0.0
    %466 = vmatpush2.msra.mxu0 0.0
    %467 = vmatprep.subr.mxu0 0.0
    %468 = vmatpush2.msra.mxu0 0.0
    %469 = vmatprep.subr.mxu0 0.0
    %470 = vmatpush2.msra.mxu0 0.0
    %471 = vmatprep.subr.mxu0 0.0
    %472 = vmatpush2.msra.mxu0 0.0
    %473 = vmatprep.mubr.f32.mxu0 0.0
    %474 = vmatmul.mubr.f32.gmra.mxu0 %v403
    %v475 = vpop.f32.mrf.mxu0
    %v476 = vadd.f32 0.0, %v475
    %v477 = vpop.f32.mrf.mxu0
    %478 = vdwg.mxu0
    %vm479 = vcmask 80896
    %v481 = vsel %vm479, %v388, 0
    %v484 = vsel %vm405, %v393, 0
    %486 = vmatprep.subr.mxu0 0.0
    %487 = vmatpush1.msra.mxu0 0.0
    %488 = vmatprep.subr.mxu0 0.0
    %489 = vmatpush1.msra.mxu0 0.0
    %490 = vmatprep.subr.mxu0 0.0
    %491 = vmatpush1.msra.mxu0 0.0
    %492 = vmatprep.subr.mxu0 0.0
    %493 = vmatpush1.msra.mxu0 0.0
    %494 = vmatprep.subr.mxu0 0.0
    %495 = vmatpush1.msra.mxu0 0.0
    %496 = vmatprep.subr.mxu0 0.0
    %497 = vmatpush1.msra.mxu0 0.0
    %498 = vmatprep.subr.mxu0 0.0
    %499 = vmatpush1.msra.mxu0 0.0
    %500 = vmatprep.subr.mxu0 0.0
    %501 = vmatpush1.msra.mxu0 0.0
    %502 = vmatprep.subr.mxu0 0.0
    %503 = vmatpush1.msra.mxu0 0.0
    %504 = vmatprep.subr.mxu0 0.0
    %505 = vmatpush1.msra.mxu0 0.0
    %506 = vmatprep.subr.mxu0 0.0
    %507 = vmatpush1.msra.mxu0 0.0
    %508 = vmatprep.subr.mxu0 0.0
    %509 = vmatpush1.msra.mxu0 0.0
    %510 = vmatprep.subr.mxu0 0.0
    %511 = vmatpush1.msra.mxu0 0.0
    %512 = vmatprep.subr.mxu0 0.0
    %513 = vmatpush1.msra.mxu0 0.0
    %514 = vmatprep.subr.mxu0 0.0
    %515 = vmatpush1.msra.mxu0 %v484
    %516 = vmatprep.subr.mxu0 0.0
    %517 = vmatpush1.msra.mxu0 %v392
    %518 = vmatprep.subr.mxu0 0.0
    %519 = vmatpush2.msra.mxu0 0.0
    %520 = vmatprep.subr.mxu0 0.0
    %521 = vmatpush2.msra.mxu0 0.0
    %522 = vmatprep.subr.mxu0 0.0
    %523 = vmatpush2.msra.mxu0 0.0
    %524 = vmatprep.subr.mxu0 0.0
    %525 = vmatpush2.msra.mxu0 0.0
    %526 = vmatprep.subr.mxu0 0.0
    %527 = vmatpush2.msra.mxu0 0.0
    %528 = vmatprep.subr.mxu0 0.0
    %529 = vmatpush2.msra.mxu0 0.0
    %530 = vmatprep.subr.mxu0 0.0
    %531 = vmatpush2.msra.mxu0 0.0
    %532 = vmatprep.subr.mxu0 0.0
    %533 = vmatpush2.msra.mxu0 0.0
    %534 = vmatprep.subr.mxu0 0.0
    %535 = vmatpush2.msra.mxu0 0.0
    %536 = vmatprep.subr.mxu0 0.0
    %537 = vmatpush2.msra.mxu0 0.0
    %538 = vmatprep.subr.mxu0 0.0
    %539 = vmatpush2.msra.mxu0 0.0
    %540 = vmatprep.subr.mxu0 0.0
    %541 = vmatpush2.msra.mxu0 0.0
    %542 = vmatprep.subr.mxu0 0.0
    %543 = vmatpush2.msra.mxu0 0.0
    %544 = vmatprep.subr.mxu0 0.0
    %545 = vmatpush2.msra.mxu0 0.0
    %546 = vmatprep.subr.mxu0 0.0
    %547 = vmatpush2.msra.mxu0 0.0
    %548 = vmatprep.subr.mxu0 0.0
    %549 = vmatpush2.msra.mxu0 0.0
    %550 = vmatprep.mubr.f32.mxu0 0.0
    %551 = vmatmul.mubr.f32.gmra.mxu0 %v481
    %v552 = vpop.f32.mrf.mxu0
    %v553 = vadd.f32 %v476, %v552
    %v554 = vpop.f32.mrf.mxu0
    %555 = vdwg.mxu0
    %v556 = vld [vmem:[%s10] sm:$0x1]
    %v558 = vlaneseq
    %v559 = vshrl.u32 %v558, 7
    %v560 = vsub.s32 0, %v559
    %v561 = vrot.slane %v556, %v560
    %v563 = vadd.f32 %v553, %v561
    %v564 = vld [vmem:[%s11] sm:$0xff]
    %v565 = vld [vmem:[%s11 + $0x8] sm:$0xff]
    %v566 = vld [vmem:[%s11 + $0x10] sm:$0xff]
    %v567 = vld [vmem:[%s11 + $0x18] sm:$0xff]
    %v568 = vld [vmem:[%s11 + $0x20] sm:$0xff]
    %v569 = vld [vmem:[%s11 + $0x28] sm:$0xff]
    %v570 = vld [vmem:[%s11 + $0x30] sm:$0x3]
    %v571 = vld [vmem:[%s12] sm:$0x1]
    %v573 = vlaneseq
    %v574 = vshrl.u32 %v573, 7
    %v575 = vsub.s32 0, %v574
    %v576 = vrot.slane %v571, %v575
    %v579 = vsel %vm405, %v570, 0
    %581 = vmatprep.subr.mxu0 0.0
    %582 = vmatpush1.msra.mxu0 0.0
    %583 = vmatprep.subr.mxu0 0.0
    %584 = vmatpush1.msra.mxu0 0.0
    %585 = vmatprep.subr.mxu0 0.0
    %586 = vmatpush1.msra.mxu0 0.0
    %587 = vmatprep.subr.mxu0 0.0
    %588 = vmatpush1.msra.mxu0 0.0
    %589 = vmatprep.subr.mxu0 0.0
    %590 = vmatpush1.msra.mxu0 0.0
    %591 = vmatprep.subr.mxu0 0.0
    %592 = vmatpush1.msra.mxu0 0.0
    %593 = vmatprep.subr.mxu0 0.0
    %594 = vmatpush1.msra.mxu0 0.0
    %595 = vmatprep.subr.mxu0 0.0
    %596 = vmatpush1.msra.mxu0 0.0
    %597 = vmatprep.subr.mxu0 0.0
    %598 = vmatpush1.msra.mxu0 0.0
    %599 = vmatprep.subr.mxu0 0.0
    %600 = vmatpush1.msra.mxu0 %v579
    %601 = vmatprep.subr.mxu0 0.0
    %602 = vmatpush1.msra.mxu0 %v569
    %603 = vmatprep.subr.mxu0 0.0
    %604 = vmatpush1.msra.mxu0 %v568
    %605 = vmatprep.subr.mxu0 0.0
    %606 = vmatpush1.msra.mxu0 %v567
    %607 = vmatprep.subr.mxu0 0.0
    %608 = vmatpush1.msra.mxu0 %v566
    %609 = vmatprep.subr.mxu0 0.0
    %610 = vmatpush1.msra.mxu0 %v565
    %611 = vmatprep.subr.mxu0 0.0
    %612 = vmatpush1.msra.mxu0 %v564
    %613 = vmatprep.subr.mxu0 0.0
    %614 = vmatpush2.msra.mxu0 0.0
    %615 = vmatprep.subr.mxu0 0.0
    %616 = vmatpush2.msra.mxu0 0.0
    %617 = vmatprep.subr.mxu0 0.0
    %618 = vmatpush2.msra.mxu0 0.0
    %619 = vmatprep.subr.mxu0 0.0
    %620 = vmatpush2.msra.mxu0 0.0
    %621 = vmatprep.subr.mxu0 0.0
    %622 = vmatpush2.msra.mxu0 0.0
    %623 = vmatprep.subr.mxu0 0.0
    %624 = vmatpush2.msra.mxu0 0.0
    %625 = vmatprep.subr.mxu0 0.0
    %626 = vmatpush2.msra.mxu0 0.0
    %627 = vmatprep.subr.mxu0 0.0
    %628 = vmatpush2.msra.mxu0 0.0
    %629 = vmatprep.subr.mxu0 0.0
    %630 = vmatpush2.msra.mxu0 0.0
    %631 = vmatprep.subr.mxu0 0.0
    %632 = vmatpush2.msra.mxu0 0.0
    %633 = vmatprep.subr.mxu0 0.0
    %634 = vmatpush2.msra.mxu0 0.0
    %635 = vmatprep.subr.mxu0 0.0
    %636 = vmatpush2.msra.mxu0 0.0
    %637 = vmatprep.subr.mxu0 0.0
    %638 = vmatpush2.msra.mxu0 0.0
    %639 = vmatprep.subr.mxu0 0.0
    %640 = vmatpush2.msra.mxu0 0.0
    %641 = vmatprep.subr.mxu0 0.0
    %642 = vmatpush2.msra.mxu0 0.0
    %643 = vmatprep.subr.mxu0 0.0
    %644 = vmatpush2.msra.mxu0 0.0
    %645 = vmatprep.mubr.f32.mxu0 0.0
    %646 = vmatmul.mubr.f32.gmra.mxu0 %v403
    %v647 = vpop.f32.mrf.mxu0
    %v648 = vadd.f32 %v576, %v647
    %v649 = vpop.f32.mrf.mxu0
    %650 = vdwg.mxu0
    %s651 = sld [smem:[#allocation2]]
    %v652 = vstv %s651
    %v653 = vrcp.pop %v652
    %s654 = vtos %v653
    %s655 = sld [smem:[#allocation2 + $0x1]]
    %v656 = vstv %s655
    %v657 = vrcp.pop %v656
    %s658 = vtos %v657
    %s659 = ssub.f32 1.0, %s654
    %v660 = vld [vmem:[%s2] sm:$0x3]
    %v661 = vstv %s659
    %v662 = vmul.f32 %v661, %v660
    %v663 = vstv %s654
    %v664 = vmul.f32 %v663, %v563
    %v665 = vadd.f32 %v662, %v664
    %s666 = ssub.f32 1.0, %s658
    %v667 = vld [vmem:[%s3] sm:$0x3]
    %v668 = vstv %s666
    %v669 = vmul.f32 %v668, %v667
    %v670 = vstv %s658
    %v671 = vmul.f32 %v670, %v648
    %v672 = vadd.f32 %v669, %v671
    %v673 = vtanh.pop %v665
    %v674 = vtanh.pop %v672
    %vm675 = vcmask 254976
    %676 = vst.msk [vmem:[#allocation9] sm:$0x3] %vm675, %v665
    %vm677 = vcmask 123904
    %678 = vst.msk [vmem:[#allocation11] sm:$0x3] %vm677, %v672
    %679 = vst.msk [vmem:[#allocation6] sm:$0x3] %vm675, %v673
    %680 = vst.msk [vmem:[#allocation8] sm:$0x3] %vm677, %v674
    %v681 = vld [vmem:[%s13] sm:$0xff]
    %v682 = vld [vmem:[%s13 + $0x8] sm:$0xff]
    %v683 = vld [vmem:[%s13 + $0x10] sm:$0xff]
    %v684 = vld [vmem:[%s13 + $0x18] sm:$0xff]
    %v685 = vld [vmem:[%s14] sm:$0x1]
    %v687 = vlaneseq
    %v688 = vshrl.u32 %v687, 7
    %v689 = vsub.s32 0, %v688
    %v690 = vrot.slane %v685, %v689
    %v693 = vsel %vm150, %v673, 0
    %695 = vmatprep.subr.mxu0 0.0
    %696 = vmatpush1.msra.mxu0 0.0
    %697 = vmatprep.subr.mxu0 0.0
    %698 = vmatpush1.msra.mxu0 0.0
    %699 = vmatprep.subr.mxu0 0.0
    %700 = vmatpush1.msra.mxu0 0.0
    %701 = vmatprep.subr.mxu0 0.0
    %702 = vmatpush1.msra.mxu0 0.0
    %703 = vmatprep.subr.mxu0 0.0
    %704 = vmatpush1.msra.mxu0 0.0
    %705 = vmatprep.subr.mxu0 0.0
    %706 = vmatpush1.msra.mxu0 0.0
    %707 = vmatprep.subr.mxu0 0.0
    %708 = vmatpush1.msra.mxu0 0.0
    %709 = vmatprep.subr.mxu0 0.0
    %710 = vmatpush1.msra.mxu0 0.0
    %711 = vmatprep.subr.mxu0 0.0
    %712 = vmatpush1.msra.mxu0 0.0
    %713 = vmatprep.subr.mxu0 0.0
    %714 = vmatpush1.msra.mxu0 0.0
    %715 = vmatprep.subr.mxu0 0.0
    %716 = vmatpush1.msra.mxu0 0.0
    %717 = vmatprep.subr.mxu0 0.0
    %718 = vmatpush1.msra.mxu0 0.0
    %719 = vmatprep.subr.mxu0 0.0
    %720 = vmatpush1.msra.mxu0 %v684
    %721 = vmatprep.subr.mxu0 0.0
    %722 = vmatpush1.msra.mxu0 %v683
    %723 = vmatprep.subr.mxu0 0.0
    %724 = vmatpush1.msra.mxu0 %v682
    %725 = vmatprep.subr.mxu0 0.0
    %726 = vmatpush1.msra.mxu0 %v681
    %727 = vmatprep.subr.mxu0 0.0
    %728 = vmatpush2.msra.mxu0 0.0
    %729 = vmatprep.subr.mxu0 0.0
    %730 = vmatpush2.msra.mxu0 0.0
    %731 = vmatprep.subr.mxu0 0.0
    %732 = vmatpush2.msra.mxu0 0.0
    %733 = vmatprep.subr.mxu0 0.0
    %734 = vmatpush2.msra.mxu0 0.0
    %735 = vmatprep.subr.mxu0 0.0
    %736 = vmatpush2.msra.mxu0 0.0
    %737 = vmatprep.subr.mxu0 0.0
    %738 = vmatpush2.msra.mxu0 0.0
    %739 = vmatprep.subr.mxu0 0.0
    %740 = vmatpush2.msra.mxu0 0.0
    %741 = vmatprep.subr.mxu0 0.0
    %742 = vmatpush2.msra.mxu0 0.0
    %743 = vmatprep.subr.mxu0 0.0
    %744 = vmatpush2.msra.mxu0 0.0
    %745 = vmatprep.subr.mxu0 0.0
    %746 = vmatpush2.msra.mxu0 0.0
    %747 = vmatprep.subr.mxu0 0.0
    %748 = vmatpush2.msra.mxu0 0.0
    %749 = vmatprep.subr.mxu0 0.0
    %750 = vmatpush2.msra.mxu0 0.0
    %751 = vmatprep.subr.mxu0 0.0
    %752 = vmatpush2.msra.mxu0 0.0
    %753 = vmatprep.subr.mxu0 0.0
    %754 = vmatpush2.msra.mxu0 0.0
    %755 = vmatprep.subr.mxu0 0.0
    %756 = vmatpush2.msra.mxu0 0.0
    %757 = vmatprep.subr.mxu0 0.0
    %758 = vmatpush2.msra.mxu0 0.0
    %759 = vmatprep.mubr.f32.mxu0 0.0
    %760 = vmatmul.mubr.f32.gmra.mxu0 %v693
    %v761 = vpop.f32.mrf.mxu0
    %v762 = vadd.f32 %v690, %v761
    %v763 = vpop.f32.mrf.mxu0
    %764 = vdwg.mxu0
    %vm765 = vcmask 9216
    %766 = vst.msk [vmem:[#allocation5] sm:$0x3] %vm765, %v762
    %v767 = vld [vmem:[%s15] sm:$0xff]
    %v768 = vld [vmem:[%s15 + $0x8] sm:$0xff]
    %v769 = vld [vmem:[%s15 + $0x10] sm:$0xff]
    %v770 = vld [vmem:[%s15 + $0x18] sm:$0xff]
    %v771 = vld [vmem:[%s16] sm:$0x1]
    %v773 = vlaneseq
    %v774 = vshrl.u32 %v773, 7
    %v775 = vsub.s32 0, %v774
    %v776 = vrot.slane %v771, %v775
    %778 = vmatprep.subr.mxu0 0.0
    %779 = vmatpush1.msra.mxu0 0.0
    %780 = vmatprep.subr.mxu0 0.0
    %781 = vmatpush1.msra.mxu0 0.0
    %782 = vmatprep.subr.mxu0 0.0
    %783 = vmatpush1.msra.mxu0 0.0
    %784 = vmatprep.subr.mxu0 0.0
    %785 = vmatpush1.msra.mxu0 0.0
    %786 = vmatprep.subr.mxu0 0.0
    %787 = vmatpush1.msra.mxu0 0.0
    %788 = vmatprep.subr.mxu0 0.0
    %789 = vmatpush1.msra.mxu0 0.0
    %790 = vmatprep.subr.mxu0 0.0
    %791 = vmatpush1.msra.mxu0 0.0
    %792 = vmatprep.subr.mxu0 0.0
    %793 = vmatpush1.msra.mxu0 0.0
    %794 = vmatprep.subr.mxu0 0.0
    %795 = vmatpush1.msra.mxu0 0.0
    %796 = vmatprep.subr.mxu0 0.0
    %797 = vmatpush1.msra.mxu0 0.0
    %798 = vmatprep.subr.mxu0 0.0
    %799 = vmatpush1.msra.mxu0 0.0
    %800 = vmatprep.subr.mxu0 0.0
    %801 = vmatpush1.msra.mxu0 0.0
    %802 = vmatprep.subr.mxu0 0.0
    %803 = vmatpush1.msra.mxu0 %v770
    %804 = vmatprep.subr.mxu0 0.0
    %805 = vmatpush1.msra.mxu0 %v769
    %806 = vmatprep.subr.mxu0 0.0
    %807 = vmatpush1.msra.mxu0 %v768
    %808 = vmatprep.subr.mxu0 0.0
    %809 = vmatpush1.msra.mxu0 %v767
    %810 = vmatprep.subr.mxu0 0.0
    %811 = vmatpush2.msra.mxu0 0.0
    %812 = vmatprep.subr.mxu0 0.0
    %813 = vmatpush2.msra.mxu0 0.0
    %814 = vmatprep.subr.mxu0 0.0
    %815 = vmatpush2.msra.mxu0 0.0
    %816 = vmatprep.subr.mxu0 0.0
    %817 = vmatpush2.msra.mxu0 0.0
    %818 = vmatprep.subr.mxu0 0.0
    %819 = vmatpush2.msra.mxu0 0.0
    %820 = vmatprep.subr.mxu0 0.0
    %821 = vmatpush2.msra.mxu0 0.0
    %822 = vmatprep.subr.mxu0 0.0
    %823 = vmatpush2.msra.mxu0 0.0
    %824 = vmatprep.subr.mxu0 0.0
    %825 = vmatpush2.msra.mxu0 0.0
    %826 = vmatprep.subr.mxu0 0.0
    %827 = vmatpush2.msra.mxu0 0.0
    %828 = vmatprep.subr.mxu0 0.0
    %829 = vmatpush2.msra.mxu0 0.0
    %830 = vmatprep.subr.mxu0 0.0
    %831 = vmatpush2.msra.mxu0 0.0
    %832 = vmatprep.subr.mxu0 0.0
    %833 = vmatpush2.msra.mxu0 0.0
    %834 = vmatprep.subr.mxu0 0.0
    %835 = vmatpush2.msra.mxu0 0.0
    %836 = vmatprep.subr.mxu0 0.0
    %837 = vmatpush2.msra.mxu0 0.0
    %838 = vmatprep.subr.mxu0 0.0
    %839 = vmatpush2.msra.mxu0 0.0
    %840 = vmatprep.subr.mxu0 0.0
    %841 = vmatpush2.msra.mxu0 0.0
    %842 = vmatprep.mubr.f32.mxu0 0.0
    %843 = vmatmul.mubr.f32.gmra.mxu0 %v693
    %v844 = vpop.f32.mrf.mxu0
    %v845 = vadd.f32 %v776, %v844
    %v846 = vpop.f32.mrf.mxu0
    %847 = vdwg.mxu0
    %v848 = vld [vmem:[%s17] sm:$0xff]
    %v849 = vld [vmem:[%s17 + $0x8] sm:$0xff]
    %v850 = vld [vmem:[%s17 + $0x10] sm:$0xff]
    %v851 = vld [vmem:[%s17 + $0x18] sm:$0xff]
    %v852 = vld [vmem:[%s17 + $0x20] sm:$0xff]
    %v853 = vld [vmem:[%s17 + $0x28] sm:$0xff]
    %v854 = vld [vmem:[%s17 + $0x30] sm:$0xff]
    %v855 = vld [vmem:[%s17 + $0x38] sm:$0xff]
    %v856 = vld [vmem:[%s17 + $0x40] sm:$0xff]
    %v857 = vld [vmem:[%s17 + $0x48] sm:$0xff]
    %v858 = vld [vmem:[%s17 + $0x50] sm:$0xff]
    %v859 = vld [vmem:[%s17 + $0x58] sm:$0xff]
    %v860 = vld [vmem:[%s17 + $0x60] sm:$0xff]
    %v861 = vld [vmem:[%s17 + $0x68] sm:$0xff]
    %v862 = vld [vmem:[%s17 + $0x70] sm:$0xff]
    %v863 = vld [vmem:[%s17 + $0x78] sm:$0xff]
    %v864 = vld [vmem:[%s17 + $0x80] sm:$0xff]
    %v865 = vld [vmem:[%s17 + $0x88] sm:$0xff]
    %v866 = vld [vmem:[%s17 + $0x90] sm:$0xff]
    %v867 = vld [vmem:[%s17 + $0x98] sm:$0xff]
    %v868 = vld [vmem:[%s17 + $0xa0] sm:$0xff]
    %v869 = vld [vmem:[%s17 + $0xa8] sm:$0xff]
    %v870 = vld [vmem:[%s17 + $0xb0] sm:$0xff]
    %v871 = vld [vmem:[%s17 + $0xb8] sm:$0xff]
    %v872 = vld [vmem:[%s17 + $0xc0] sm:$0xff]
    %v873 = vld [vmem:[%s17 + $0xc8] sm:$0xff]
    %v874 = vld [vmem:[%s17 + $0xd0] sm:$0xff]
    %v875 = vld [vmem:[%s17 + $0xd8] sm:$0xff]
    %v876 = vld [vmem:[%s17 + $0xe0] sm:$0xff]
    %v877 = vld [vmem:[%s17 + $0xe8] sm:$0xff]
    %v878 = vld [vmem:[%s17 + $0xf0] sm:$0xff]
    %v879 = vld [vmem:[%s17 + $0xf8] sm:$0xff]
    %v880 = vld [vmem:[%s17 + $0x100] sm:$0xff]
    %v881 = vld [vmem:[%s17 + $0x108] sm:$0xff]
    %v882 = vld [vmem:[%s17 + $0x110] sm:$0xff]
    %v883 = vld [vmem:[%s17 + $0x118] sm:$0xff]
    %v884 = vld [vmem:[%s17 + $0x120] sm:$0xf]
    %v885 = vld [vmem:[%s17 + $0x128] sm:$0xf]
    %v886 = vld [vmem:[%s17 + $0x130] sm:$0xf]
    %v887 = vld [vmem:[%s18] sm:$0x7]
    %v889 = vlaneseq
    %v890 = vshrl.u32 %v889, 7
    %v891 = vsub.s32 0, %v890
    %v892 = vrot.slane %v887, %v891
    %v893 = vlaneseq
    %v894 = vshrl.u32 %v893, 7
    %v895 = vsub.s32 1, %v894
    %v896 = vrot.slane %v887, %v895
    %v897 = vlaneseq
    %v898 = vshrl.u32 %v897, 7
    %v899 = vsub.s32 2, %v898
    %v900 = vrot.slane %v887, %v899
    %v905 = vsel %vm313, %v845, 0
    %v908 = vsel %vm317, %v884, 0
    %v911 = vsel %vm317, %v885, 0
    %v914 = vsel %vm317, %v886, 0
    %916 = vmatprep.subr.mxu0 0.0
    %917 = vmatpush1.msra.mxu0 0.0
    %918 = vmatprep.subr.mxu0 0.0
    %919 = vmatpush1.msra.mxu0 0.0
    %920 = vmatprep.subr.mxu0 0.0
    %921 = vmatpush1.msra.mxu0 0.0
    %922 = vmatprep.subr.mxu0 %v911
    %923 = vmatpush1.msra.mxu0 %v908
    %924 = vmatprep.subr.mxu0 %v882
    %925 = vmatpush1.msra.mxu0 %v881
    %926 = vmatprep.subr.mxu0 %v879
    %927 = vmatpush1.msra.mxu0 %v878
    %928 = vmatprep.subr.mxu0 %v876
    %929 = vmatpush1.msra.mxu0 %v875
    %930 = vmatprep.subr.mxu0 %v873
    %931 = vmatpush1.msra.mxu0 %v872
    %932 = vmatprep.subr.mxu0 %v870
    %933 = vmatpush1.msra.mxu0 %v869
    %934 = vmatprep.subr.mxu0 %v867
    %935 = vmatpush1.msra.mxu0 %v866
    %936 = vmatprep.subr.mxu0 %v864
    %937 = vmatpush1.msra.mxu0 %v863
    %938 = vmatprep.subr.mxu0 %v861
    %939 = vmatpush1.msra.mxu0 %v860
    %940 = vmatprep.subr.mxu0 %v858
    %941 = vmatpush1.msra.mxu0 %v857
    %942 = vmatprep.subr.mxu0 %v855
    %943 = vmatpush1.msra.mxu0 %v854
    %944 = vmatprep.subr.mxu0 %v852
    %945 = vmatpush1.msra.mxu0 %v851
    %946 = vmatprep.subr.mxu0 %v849
    %947 = vmatpush1.msra.mxu0 %v848
    %948 = vmatprep.subr.mxu0 0.0
    %949 = vmatpush2.msra.mxu0 0.0
    %950 = vmatprep.subr.mxu0 0.0
    %951 = vmatpush2.msra.mxu0 0.0
    %952 = vmatprep.subr.mxu0 0.0
    %953 = vmatpush2.msra.mxu0 0.0
    %954 = vmatprep.subr.mxu0 0.0
    %955 = vmatpush2.msra.mxu0 0.0
    %956 = vmatprep.subr.mxu0 0.0
    %957 = vmatpush2.msra.mxu0 0.0
    %958 = vmatprep.subr.mxu0 0.0
    %959 = vmatpush2.msra.mxu0 0.0
    %960 = vmatprep.subr.mxu0 0.0
    %961 = vmatpush2.msra.mxu0 0.0
    %962 = vmatprep.subr.mxu0 0.0
    %963 = vmatpush2.msra.mxu0 0.0
    %964 = vmatprep.subr.mxu0 0.0
    %965 = vmatpush2.msra.mxu0 0.0
    %966 = vmatprep.subr.mxu0 0.0
    %967 = vmatpush2.msra.mxu0 0.0
    %968 = vmatprep.subr.mxu0 0.0
    %969 = vmatpush2.msra.mxu0 0.0
    %970 = vmatprep.subr.mxu0 0.0
    %971 = vmatpush2.msra.mxu0 0.0
    %972 = vmatprep.subr.mxu0 0.0
    %973 = vmatpush2.msra.mxu0 0.0
    %974 = vmatprep.subr.mxu0 0.0
    %975 = vmatpush2.msra.mxu0 0.0
    %976 = vmatprep.subr.mxu0 0.0
    %977 = vmatpush2.msra.mxu0 0.0
    %978 = vmatprep.subr.mxu0 0.0
    %979 = vmatpush2.msra.mxu0 0.0
    %980 = vmatprep.mubr.f32.mxu0 0.0
    %981 = vmatmul.mubr.f32.gmra.mxu0 %v905
    %v982 = vpop.f32.mrf.mxu0
    %v983 = vadd.f32 %v892, %v982
    %v984 = vpop.f32.mrf.mxu0
    %v985 = vadd.f32 %v896, %v984
    %986 = vdwg.mxu0
    %987 = vmatprep.subr.mxu0 0.0
    %988 = vmatpush1.msra.mxu0 0.0
    %989 = vmatprep.subr.mxu0 0.0
    %990 = vmatpush1.msra.mxu0 0.0
    %991 = vmatprep.subr.mxu0 0.0
    %992 = vmatpush1.msra.mxu0 0.0
    %993 = vmatprep.subr.mxu0 0.0
    %994 = vmatpush1.msra.mxu0 %v914
    %995 = vmatprep.subr.mxu0 0.0
    %996 = vmatpush1.msra.mxu0 %v883
    %997 = vmatprep.subr.mxu0 0.0
    %998 = vmatpush1.msra.mxu0 %v880
    %999 = vmatprep.subr.mxu0 0.0
    %1000 = vmatpush1.msra.mxu0 %v877
    %1001 = vmatprep.subr.mxu0 0.0
    %1002 = vmatpush1.msra.mxu0 %v874
    %1003 = vmatprep.subr.mxu0 0.0
    %1004 = vmatpush1.msra.mxu0 %v871
    %1005 = vmatprep.subr.mxu0 0.0
    %1006 = vmatpush1.msra.mxu0 %v868
    %1007 = vmatprep.subr.mxu0 0.0
    %1008 = vmatpush1.msra.mxu0 %v865
    %1009 = vmatprep.subr.mxu0 0.0
    %1010 = vmatpush1.msra.mxu0 %v862
    %1011 = vmatprep.subr.mxu0 0.0
    %1012 = vmatpush1.msra.mxu0 %v859
    %1013 = vmatprep.subr.mxu0 0.0
    %1014 = vmatpush1.msra.mxu0 %v856
    %1015 = vmatprep.subr.mxu0 0.0
    %1016 = vmatpush1.msra.mxu0 %v853
    %1017 = vmatprep.subr.mxu0 0.0
    %1018 = vmatpush1.msra.mxu0 %v850
    %1019 = vmatprep.subr.mxu0 0.0
    %1020 = vmatpush2.msra.mxu0 0.0
    %1021 = vmatprep.subr.mxu0 0.0
    %1022 = vmatpush2.msra.mxu0 0.0
    %1023 = vmatprep.subr.mxu0 0.0
    %1024 = vmatpush2.msra.mxu0 0.0
    %1025 = vmatprep.subr.mxu0 0.0
    %1026 = vmatpush2.msra.mxu0 0.0
    %1027 = vmatprep.subr.mxu0 0.0
    %1028 = vmatpush2.msra.mxu0 0.0
    %1029 = vmatprep.subr.mxu0 0.0
    %1030 = vmatpush2.msra.mxu0 0.0
    %1031 = vmatprep.subr.mxu0 0.0
    %1032 = vmatpush2.msra.mxu0 0.0
    %1033 = vmatprep.subr.mxu0 0.0
    %1034 = vmatpush2.msra.mxu0 0.0
    %1035 = vmatprep.subr.mxu0 0.0
    %1036 = vmatpush2.msra.mxu0 0.0
    %1037 = vmatprep.subr.mxu0 0.0
    %1038 = vmatpush2.msra.mxu0 0.0
    %1039 = vmatprep.subr.mxu0 0.0
    %1040 = vmatpush2.msra.mxu0 0.0
    %1041 = vmatprep.subr.mxu0 0.0
    %1042 = vmatpush2.msra.mxu0 0.0
    %1043 = vmatprep.subr.mxu0 0.0
    %1044 = vmatpush2.msra.mxu0 0.0
    %1045 = vmatprep.subr.mxu0 0.0
    %1046 = vmatpush2.msra.mxu0 0.0
    %1047 = vmatprep.subr.mxu0 0.0
    %1048 = vmatpush2.msra.mxu0 0.0
    %1049 = vmatprep.subr.mxu0 0.0
    %1050 = vmatpush2.msra.mxu0 0.0
    %1051 = vmatprep.mubr.f32.mxu0 0.0
    %1052 = vmatmul.mubr.f32.gmra.mxu0 %v905
    %v1053 = vpop.f32.mrf.mxu0
    %v1054 = vadd.f32 %v900, %v1053
    %v1055 = vpop.f32.mrf.mxu0
    %1056 = vdwg.mxu0
    %v1060 = vcombine.low %v983, %v985
    %v1062 = vunpack.c.l.s4 1983009808
    %v1063 = vunpack.c.0.s8 %v1062
    %v1064 = vlaneseq
    %v1065 = vshrl.u32 %v1064, 7
    %v1066 = vsub.s32 %v1063, %v1065
    %v1067 = vrot.slane %v1060, %v1066
    %v1069 = vunpack.c.l.s4 1983009808
    %v1070 = vunpack.c.0.s8 %v1069
    %v1071 = vlaneseq
    %v1072 = vshrl.u32 %v1071, 7
    %v1073 = vsub.s32 %v1070, %v1072
    %v1074 = vrot.slane %v1054, %v1073
    %v1075 = vcombine.low %v1067, %v1074
    %vm1077 = vcmask 1043458
    %vm1078 = vmor %vm1077, %vm405
    %vm1079 = vcmask 259076
    %vm1080 = vmor %vm1079, %vm1078
    %1081 = vst.msk [vmem:[%s21] sm:$0x3f] %vm1080, %v1075
    // Predicated region
    $region86: #{_lambda_.10} parent=1 // pred_check
      _
    $region87: #{_lambda_.10} parent=1 // pred_check_branch
      %1083 = sbr.rel (0) target = $region89
    $region88: #{_lambda_.10} parent=1 // pred_region
      %s1085 = ssub.s32 32, 32
      %1086 = vsyncadd [#allocation3], %s1085
      %s1088 = sshll.u32 [#allocation5], 4
      %s1089 = int_to_ptr.vmem [resolvable:$true] %s1088
      %1091 = dma.vmem_to_hbm [thread:$0]  %s1089, 32, %s20, [#allocation3]
    $region89: #{_lambda_.10} parent=1 // pred_fallthru
      _
    // Predicated region
    $region90: #{_lambda_.10} parent=1 // pred_check
      _
    $region91: #{_lambda_.10} parent=1 // pred_check_branch
      %1093 = sbr.rel (0) target = $region93
    $region92: #{_lambda_.10} parent=1 // pred_region
      _
    $region93: #{_lambda_.10} parent=1 // pred_fallthru
      _
    // Predicated region
    $region94: #{_lambda_.10} parent=1 // pred_check
      _
    $region95: #{_lambda_.10} parent=1 // pred_check_branch
      %1095 = sbr.rel (0) target = $region97
    $region96: #{_lambda_.10} parent=1 // pred_region
      %s1097 = ssub.s32 32, 32
      %1098 = vsyncadd [#allocation7], %s1097
      %s1100 = sshll.u32 [#allocation6], 4
      %s1101 = int_to_ptr.vmem [resolvable:$true] %s1100
      %1103 = dma.vmem_to_hbm [thread:$0]  %s1101, 32, %s22, [#allocation7]
    $region97: #{_lambda_.10} parent=1 // pred_fallthru
      _
    // Predicated region
    $region98: #{_lambda_.10} parent=1 // pred_check
      _
    $region99: #{_lambda_.10} parent=1 // pred_check_branch
      %1105 = sbr.rel (0) target = $region101
    $region100: #{_lambda_.10} parent=1 // pred_region
      %s1107 = ssub.s32 32, 32
      %1108 = vsyncadd [#allocation7], %s1107
      %s1110 = sshll.u32 [#allocation8], 4
      %s1111 = int_to_ptr.vmem [resolvable:$true] %s1110
      %1113 = dma.vmem_to_hbm [thread:$0]  %s1111, 32, %s23, [#allocation7]
    $region101: #{_lambda_.10} parent=1 // pred_fallthru
      _
    // Predicated region
    $region102: #{_lambda_.10} parent=1 // pred_check
      _
    $region103: #{_lambda_.10} parent=1 // pred_check_branch
      %1115 = sbr.rel (0) target = $region105
    $region104: #{_lambda_.10} parent=1 // pred_region
      %s1117 = ssub.s32 32, 32
      %1118 = vsyncadd [#allocation10], %s1117
      %s1120 = sshll.u32 [#allocation9], 4
      %s1121 = int_to_ptr.vmem [resolvable:$true] %s1120
      %1123 = dma.vmem_to_hbm [thread:$0]  %s1121, 32, %s24, [#allocation10]
    $region105: #{_lambda_.10} parent=1 // pred_fallthru
      _
    // Predicated region
    $region106: #{_lambda_.10} parent=1 // pred_check
      _
    $region107: #{_lambda_.10} parent=1 // pred_check_branch
      %1125 = sbr.rel (0) target = $region109
    $region108: #{_lambda_.10} parent=1 // pred_region
      %s1127 = ssub.s32 32, 32
      %1128 = vsyncadd [#allocation10], %s1127
      %s1130 = sshll.u32 [#allocation11], 4
      %s1131 = int_to_ptr.vmem [resolvable:$true] %s1130
      %1133 = dma.vmem_to_hbm [thread:$0]  %s1131, 32, %s25, [#allocation10]
    $region109: #{_lambda_.10} parent=1 // pred_fallthru
      _
    // Predicated region
    $region110: #{_lambda_.10} parent=1 // pred_check
      _
    $region111: #{_lambda_.10} parent=1 // pred_check_branch
      %1135 = sbr.rel (0) target = $region113
    $region112: #{_lambda_.10} parent=1 // pred_region
      %1136 = dma.done [#allocation3], 32
    $region113: #{_lambda_.10} parent=1 // pred_fallthru
      _
    // Predicated region
    $region114: #{_lambda_.10} parent=1 // pred_check
      _
    $region115: #{_lambda_.10} parent=1 // pred_check_branch
      %1138 = sbr.rel (0) target = $region117
    $region116: #{_lambda_.10} parent=1 // pred_region
      _
    $region117: #{_lambda_.10} parent=1 // pred_fallthru
      _
    // Predicated region
    $region118: #{_lambda_.10} parent=1 // pred_check
      _
    $region119: #{_lambda_.10} parent=1 // pred_check_branch
      %1140 = sbr.rel (0) target = $region121
    $region120: #{_lambda_.10} parent=1 // pred_region
      %1141 = dma.done [#allocation7], 32
    $region121: #{_lambda_.10} parent=1 // pred_fallthru
      _
    // Predicated region
    $region122: #{_lambda_.10} parent=1 // pred_check
      _
    $region123: #{_lambda_.10} parent=1 // pred_check_branch
      %1143 = sbr.rel (0) target = $region125
    $region124: #{_lambda_.10} parent=1 // pred_region
      %1144 = dma.done [#allocation7], 32
    $region125: #{_lambda_.10} parent=1 // pred_fallthru
      _
    // Predicated region
    $region126: #{_lambda_.10} parent=1 // pred_check
      _
    $region127: #{_lambda_.10} parent=1 // pred_check_branch
      %1146 = sbr.rel (0) target = $region129
    $region128: #{_lambda_.10} parent=1 // pred_region
      %1147 = dma.done [#allocation10], 32
    $region129: #{_lambda_.10} parent=1 // pred_fallthru
      _
    // Predicated region
    $region130: #{_lambda_.10} parent=1 // pred_check
      _
    $region131: #{_lambda_.10} parent=1 // pred_check_branch
      %1149 = sbr.rel (0) target = $region133
    $region132: #{_lambda_.10} parent=1 // pred_region
      %1150 = dma.done [#allocation10], 32
    $region133: #{_lambda_.10} parent=1 // pred_fallthru
      _
    %1151 = vsyncpa [#allocation3], 1
    %1152 = vsyncpa [#allocation7], 1
    %1153 = vsyncpa [#allocation10], 1
    %1154 = vsyncpa [#allocation4], 1

// kernel: _lambda_.12
$region0: #{_lambda_.12}
  #allocation0 [shape = 'u32[]', space=smem, size = 0x4, offset = 0x4, fixed_abs, tag = 'smem constant byte address 0x4 - core index']
  #allocation1 [shape = 'u32[144,128]{1,0:T(1,128)}', space=vmem, size = 0x12000, scoped, tag = 'internal scratch']
  %s0 = inlined_call_operand.vmem [shape: f32[128,64], index: 0, kind: input, shape index: {}]
  %s1 = inlined_call_operand.vmem [shape: f32[64,32], index: 1, kind: input, shape index: {}]
  %s2 = inlined_call_operand.vmem [shape: f32[1,32], index: 2, kind: input, shape index: {}]
  %s3 = inlined_call_operand.vmem [shape: f32[128,32], index: 3, kind: output, shape index: {}]
  %s4 = sld [smem:[#allocation0]]
  $region22: #{_lambda_.12} parent=0
    _
  %s6 = ssub.s32 1, %s4
  %s7 = scalar_select 0, %s6, %s4
  // Predicated region
  $region2: #{_lambda_.12} parent=0 // pred_check
    _
  $region3: #{_lambda_.12} parent=0 // pred_check_branch
    %9 = sbr.rel (0) target = $region5
  $region4: #{_lambda_.12} parent=0 // pred_region
    _
  $region5: #{_lambda_.12} parent=0 // pred_fallthru
    _
  // Predicated region
  $region6: #{_lambda_.12} parent=0 // pred_check
    _
  $region7: #{_lambda_.12} parent=0 // pred_check_branch
    %11 = sbr.rel (0) target = $region9
  $region8: #{_lambda_.12} parent=0 // pred_region
    _
  $region9: #{_lambda_.12} parent=0 // pred_fallthru
    _
  // Predicated region
  $region10: #{_lambda_.12} parent=0 // pred_check
    _
  $region11: #{_lambda_.12} parent=0 // pred_check_branch
    %13 = sbr.rel (0) target = $region13
  $region12: #{_lambda_.12} parent=0 // pred_region
    _
  $region13: #{_lambda_.12} parent=0 // pred_fallthru
    _
  %v14 = vld [vmem:[%s0] sm:$0xff]
  %v15 = vld [vmem:[%s0 + $0x8] sm:$0xff]
  %v16 = vld [vmem:[%s0 + $0x10] sm:$0xff]
  %v17 = vld [vmem:[%s0 + $0x18] sm:$0xff]
  %v18 = vld [vmem:[%s0 + $0x20] sm:$0xff]
  %v19 = vld [vmem:[%s0 + $0x28] sm:$0xff]
  %v20 = vld [vmem:[%s0 + $0x30] sm:$0xff]
  %v21 = vld [vmem:[%s0 + $0x38] sm:$0xff]
  %v22 = vld [vmem:[%s0 + $0x40] sm:$0xff]
  %v23 = vld [vmem:[%s0 + $0x48] sm:$0xff]
  %v24 = vld [vmem:[%s0 + $0x50] sm:$0xff]
  %v25 = vld [vmem:[%s0 + $0x58] sm:$0xff]
  %v26 = vld [vmem:[%s0 + $0x60] sm:$0xff]
  %v27 = vld [vmem:[%s0 + $0x68] sm:$0xff]
  %v28 = vld [vmem:[%s0 + $0x70] sm:$0xff]
  %v29 = vld [vmem:[%s0 + $0x78] sm:$0xff]
  %v30 = vld [vmem:[%s1] sm:$0xff]
  %v31 = vld [vmem:[%s1 + $0x8] sm:$0xff]
  %v32 = vld [vmem:[%s1 + $0x10] sm:$0xff]
  %v33 = vld [vmem:[%s1 + $0x18] sm:$0xff]
  %v34 = vld [vmem:[%s1 + $0x20] sm:$0xff]
  %v35 = vld [vmem:[%s1 + $0x28] sm:$0xff]
  %v36 = vld [vmem:[%s1 + $0x30] sm:$0xff]
  %v37 = vld [vmem:[%s1 + $0x38] sm:$0xff]
  %v38 = vld [vmem:[%s2] sm:$0x1]
  %v40 = vlaneseq
  %v41 = vshrl.u32 %v40, 7
  %v42 = vsub.s32 0, %v41
  %v43 = vrot.slane %v38, %v42
  %vm45 = vcmask 523264
  %v47 = vsel %vm45, %v14, 0
  %v50 = vsel %vm45, %v15, 0
  %v53 = vsel %vm45, %v16, 0
  %v56 = vsel %vm45, %v17, 0
  %v59 = vsel %vm45, %v18, 0
  %v62 = vsel %vm45, %v19, 0
  %v65 = vsel %vm45, %v20, 0
  %v68 = vsel %vm45, %v21, 0
  %v71 = vsel %vm45, %v22, 0
  %v74 = vsel %vm45, %v23, 0
  %v77 = vsel %vm45, %v24, 0
  %v80 = vsel %vm45, %v25, 0
  %v83 = vsel %vm45, %v26, 0
  %v86 = vsel %vm45, %v27, 0
  %v89 = vsel %vm45, %v28, 0
  %v92 = vsel %vm45, %v29, 0
  %94 = vmatprep.subr.mxu0 0.0
  %95 = vmatpush1.msra.mxu0 0.0
  %96 = vmatprep.subr.mxu0 0.0
  %97 = vmatpush1.msra.mxu0 0.0
  %98 = vmatprep.subr.mxu0 0.0
  %99 = vmatpush1.msra.mxu0 0.0
  %100 = vmatprep.subr.mxu0 0.0
  %101 = vmatpush1.msra.mxu0 0.0
  %102 = vmatprep.subr.mxu0 0.0
  %103 = vmatpush1.msra.mxu0 0.0
  %104 = vmatprep.subr.mxu0 0.0
  %105 = vmatpush1.msra.mxu0 0.0
  %106 = vmatprep.subr.mxu0 0.0
  %107 = vmatpush1.msra.mxu0 0.0
  %108 = vmatprep.subr.mxu0 0.0
  %109 = vmatpush1.msra.mxu0 0.0
  %110 = vmatprep.subr.mxu0 0.0
  %111 = vmatpush1.msra.mxu0 %v37
  %112 = vmatprep.subr.mxu0 0.0
  %113 = vmatpush1.msra.mxu0 %v36
  %114 = vmatprep.subr.mxu0 0.0
  %115 = vmatpush1.msra.mxu0 %v35
  %116 = vmatprep.subr.mxu0 0.0
  %117 = vmatpush1.msra.mxu0 %v34
  %118 = vmatprep.subr.mxu0 0.0
  %119 = vmatpush1.msra.mxu0 %v33
  %120 = vmatprep.subr.mxu0 0.0
  %121 = vmatpush1.msra.mxu0 %v32
  %122 = vmatprep.subr.mxu0 0.0
  %123 = vmatpush1.msra.mxu0 %v31
  %124 = vmatprep.subr.mxu0 0.0
  %125 = vmatpush1.msra.mxu0 %v30
  %126 = vmatprep.subr.mxu0 0.0
  %127 = vmatpush2.msra.mxu0 0.0
  %128 = vmatprep.subr.mxu0 0.0
  %129 = vmatpush2.msra.mxu0 0.0
  %130 = vmatprep.subr.mxu0 0.0
  %131 = vmatpush2.msra.mxu0 0.0
  %132 = vmatprep.subr.mxu0 0.0
  %133 = vmatpush2.msra.mxu0 0.0
  %134 = vmatprep.subr.mxu0 0.0
  %135 = vmatpush2.msra.mxu0 0.0
  %136 = vmatprep.subr.mxu0 0.0
  %137 = vmatpush2.msra.mxu0 0.0
  %138 = vmatprep.subr.mxu0 0.0
  %139 = vmatpush2.msra.mxu0 0.0
  %140 = vmatprep.subr.mxu0 0.0
  %141 = vmatpush2.msra.mxu0 0.0
  %142 = vmatprep.subr.mxu0 0.0
  %143 = vmatpush2.msra.mxu0 0.0
  %144 = vmatprep.subr.mxu0 0.0
  %145 = vmatpush2.msra.mxu0 0.0
  %146 = vmatprep.subr.mxu0 0.0
  %147 = vmatpush2.msra.mxu0 0.0
  %148 = vmatprep.subr.mxu0 0.0
  %149 = vmatpush2.msra.mxu0 0.0
  %150 = vmatprep.subr.mxu0 0.0
  %151 = vmatpush2.msra.mxu0 0.0
  %152 = vmatprep.subr.mxu0 0.0
  %153 = vmatpush2.msra.mxu0 0.0
  %154 = vmatprep.subr.mxu0 0.0
  %155 = vmatpush2.msra.mxu0 0.0
  %156 = vmatprep.subr.mxu0 0.0
  %157 = vmatpush2.msra.mxu0 0.0
  %158 = vmatprep.mubr.f32.mxu0 0.0
  %159 = vmatmul.mubr.f32.gmra.mxu0 %v47
  %v160 = vpop.f32.mrf.mxu0
  %v161 = vadd.f32 %v43, %v160
  %v162 = vpop.f32.mrf.mxu0
  %163 = vmatprep.mubr.f32.mxu0 0.0
  %164 = vmatmul.mubr.f32.gmra.mxu0 %v50
  %v165 = vpop.f32.mrf.mxu0
  %v166 = vadd.f32 %v43, %v165
  %v167 = vpop.f32.mrf.mxu0
  %168 = vmatprep.mubr.f32.mxu0 0.0
  %169 = vmatmul.mubr.f32.gmra.mxu0 %v53
  %v170 = vpop.f32.mrf.mxu0
  %v171 = vadd.f32 %v43, %v170
  %v172 = vpop.f32.mrf.mxu0
  %173 = vmatprep.mubr.f32.mxu0 0.0
  %174 = vmatmul.mubr.f32.gmra.mxu0 %v56
  %v175 = vpop.f32.mrf.mxu0
  %v176 = vadd.f32 %v43, %v175
  %v177 = vpop.f32.mrf.mxu0
  %178 = vmatprep.mubr.f32.mxu0 0.0
  %179 = vmatmul.mubr.f32.gmra.mxu0 %v59
  %v180 = vpop.f32.mrf.mxu0
  %v181 = vadd.f32 %v43, %v180
  %v182 = vpop.f32.mrf.mxu0
  %183 = vmatprep.mubr.f32.mxu0 0.0
  %184 = vmatmul.mubr.f32.gmra.mxu0 %v62
  %v185 = vpop.f32.mrf.mxu0
  %v186 = vadd.f32 %v43, %v185
  %v187 = vpop.f32.mrf.mxu0
  %188 = vmatprep.mubr.f32.mxu0 0.0
  %189 = vmatmul.mubr.f32.gmra.mxu0 %v65
  %v190 = vpop.f32.mrf.mxu0
  %v191 = vadd.f32 %v43, %v190
  %v192 = vpop.f32.mrf.mxu0
  %193 = vmatprep.mubr.f32.mxu0 0.0
  %194 = vmatmul.mubr.f32.gmra.mxu0 %v68
  %v195 = vpop.f32.mrf.mxu0
  %v196 = vadd.f32 %v43, %v195
  %v197 = vpop.f32.mrf.mxu0
  %198 = vmatprep.mubr.f32.mxu0 0.0
  %199 = vmatmul.mubr.f32.gmra.mxu0 %v71
  %v200 = vpop.f32.mrf.mxu0
  %v201 = vadd.f32 %v43, %v200
  %v202 = vpop.f32.mrf.mxu0
  %203 = vmatprep.mubr.f32.mxu0 0.0
  %204 = vmatmul.mubr.f32.gmra.mxu0 %v74
  %v205 = vpop.f32.mrf.mxu0
  %v206 = vadd.f32 %v43, %v205
  %v207 = vpop.f32.mrf.mxu0
  %208 = vmatprep.mubr.f32.mxu0 0.0
  %209 = vmatmul.mubr.f32.gmra.mxu0 %v77
  %v210 = vpop.f32.mrf.mxu0
  %v211 = vadd.f32 %v43, %v210
  %v212 = vpop.f32.mrf.mxu0
  %213 = vmatprep.mubr.f32.mxu0 0.0
  %214 = vmatmul.mubr.f32.gmra.mxu0 %v80
  %v215 = vpop.f32.mrf.mxu0
  %v216 = vadd.f32 %v43, %v215
  %v217 = vpop.f32.mrf.mxu0
  %218 = vmatprep.mubr.f32.mxu0 0.0
  %219 = vmatmul.mubr.f32.gmra.mxu0 %v83
  %v220 = vpop.f32.mrf.mxu0
  %v221 = vadd.f32 %v43, %v220
  %v222 = vpop.f32.mrf.mxu0
  %223 = vmatprep.mubr.f32.mxu0 0.0
  %224 = vmatmul.mubr.f32.gmra.mxu0 %v86
  %v225 = vpop.f32.mrf.mxu0
  %v226 = vadd.f32 %v43, %v225
  %v227 = vpop.f32.mrf.mxu0
  %228 = vmatprep.mubr.f32.mxu0 0.0
  %229 = vmatmul.mubr.f32.gmra.mxu0 %v89
  %v230 = vpop.f32.mrf.mxu0
  %v231 = vadd.f32 %v43, %v230
  %v232 = vpop.f32.mrf.mxu0
  %233 = vmatprep.mubr.f32.mxu0 0.0
  %234 = vmatmul.mubr.f32.gmra.mxu0 %v92
  %v235 = vpop.f32.mrf.mxu0
  %v236 = vadd.f32 %v43, %v235
  %v237 = vpop.f32.mrf.mxu0
  %238 = vdwg.mxu0
  %vm239 = vcmask 261120
  %240 = vst.msk [vmem:[%s3] sm:$0xff] %vm239, %v161
  %241 = vst.msk [vmem:[%s3 + $0x8] sm:$0xff] %vm239, %v166
  %242 = vst.msk [vmem:[%s3 + $0x10] sm:$0xff] %vm239, %v171
  %243 = vst.msk [vmem:[%s3 + $0x18] sm:$0xff] %vm239, %v176
  %244 = vst.msk [vmem:[%s3 + $0x20] sm:$0xff] %vm239, %v181
  %245 = vst.msk [vmem:[%s3 + $0x28] sm:$0xff] %vm239, %v186
  %246 = vst.msk [vmem:[%s3 + $0x30] sm:$0xff] %vm239, %v191
  %247 = vst.msk [vmem:[%s3 + $0x38] sm:$0xff] %vm239, %v196
  %248 = vst.msk [vmem:[%s3 + $0x40] sm:$0xff] %vm239, %v201
  %249 = vst.msk [vmem:[%s3 + $0x48] sm:$0xff] %vm239, %v206
  %250 = vst.msk [vmem:[%s3 + $0x50] sm:$0xff] %vm239, %v211
  %251 = vst.msk [vmem:[%s3 + $0x58] sm:$0xff] %vm239, %v216
  %252 = vst.msk [vmem:[%s3 + $0x60] sm:$0xff] %vm239, %v221
  %253 = vst.msk [vmem:[%s3 + $0x68] sm:$0xff] %vm239, %v226
  %254 = vst.msk [vmem:[%s3 + $0x70] sm:$0xff] %vm239, %v231
  %255 = vst.msk [vmem:[%s3 + $0x78] sm:$0xff] %vm239, %v236
  // Predicated region
  $region14: #{_lambda_.12} parent=0 // pred_check
    _
  $region15: #{_lambda_.12} parent=0 // pred_check_branch
    %257 = sbr.rel (0) target = $region17
  $region16: #{_lambda_.12} parent=0 // pred_region
    _
  $region17: #{_lambda_.12} parent=0 // pred_fallthru
    _
  // Predicated region
  $region18: #{_lambda_.12} parent=0 // pred_check
    _
  $region19: #{_lambda_.12} parent=0 // pred_check_branch
    %259 = sbr.rel (0) target = $region21
  $region20: #{_lambda_.12} parent=0 // pred_region
    _
  $region21: #{_lambda_.12} parent=0 // pred_fallthru
    _

// kernel: _lambda_.13
$region0: #{_lambda_.13}
  #allocation0 [shape = 'u32[]', space=smem, size = 0x4, offset = 0x4, fixed_abs, tag = 'smem constant byte address 0x4 - core index']
  #allocation1 [shape = 'u32[144,128]{1,0:T(1,128)}', space=vmem, size = 0x12000, scoped, tag = 'internal scratch']
  %s0 = inlined_call_operand.vmem [shape: f32[450,32], index: 0, kind: input, shape index: {}]
  %s1 = inlined_call_operand.vmem [shape: f32[32,12], index: 1, kind: input, shape index: {}]
  %s2 = inlined_call_operand.vmem [shape: f32[1,12], index: 2, kind: input, shape index: {}]
  %s3 = inlined_call_operand.vmem [shape: f32[450,12], index: 3, kind: output, shape index: {}]
  %s4 = sld [smem:[#allocation0]]
  $region22: #{_lambda_.13} parent=0
    _
  %s6 = ssub.s32 1, %s4
  %s7 = scalar_select 0, %s6, %s4
  // Predicated region
  $region2: #{_lambda_.13} parent=0 // pred_check
    _
  $region3: #{_lambda_.13} parent=0 // pred_check_branch
    %9 = sbr.rel (0) target = $region5
  $region4: #{_lambda_.13} parent=0 // pred_region
    _
  $region5: #{_lambda_.13} parent=0 // pred_fallthru
    _
  // Predicated region
  $region6: #{_lambda_.13} parent=0 // pred_check
    _
  $region7: #{_lambda_.13} parent=0 // pred_check_branch
    %11 = sbr.rel (0) target = $region9
  $region8: #{_lambda_.13} parent=0 // pred_region
    _
  $region9: #{_lambda_.13} parent=0 // pred_fallthru
    _
  // Predicated region
  $region10: #{_lambda_.13} parent=0 // pred_check
    _
  $region11: #{_lambda_.13} parent=0 // pred_check_branch
    %13 = sbr.rel (0) target = $region13
  $region12: #{_lambda_.13} parent=0 // pred_region
    _
  $region13: #{_lambda_.13} parent=0 // pred_fallthru
    _
  %v14 = vld [vmem:[%s0] sm:$0xff]
  %v15 = vld [vmem:[%s0 + $0x8] sm:$0xff]
  %v16 = vld [vmem:[%s0 + $0x10] sm:$0xff]
  %v17 = vld [vmem:[%s0 + $0x18] sm:$0xff]
  %v18 = vld [vmem:[%s0 + $0x20] sm:$0xff]
  %v19 = vld [vmem:[%s0 + $0x28] sm:$0xff]
  %v20 = vld [vmem:[%s0 + $0x30] sm:$0xff]
  %v21 = vld [vmem:[%s0 + $0x38] sm:$0xff]
  %v22 = vld [vmem:[%s0 + $0x40] sm:$0xff]
  %v23 = vld [vmem:[%s0 + $0x48] sm:$0xff]
  %v24 = vld [vmem:[%s0 + $0x50] sm:$0xff]
  %v25 = vld [vmem:[%s0 + $0x58] sm:$0xff]
  %v26 = vld [vmem:[%s0 + $0x60] sm:$0xff]
  %v27 = vld [vmem:[%s0 + $0x68] sm:$0xff]
  %v28 = vld [vmem:[%s0 + $0x70] sm:$0xff]
  %v29 = vld [vmem:[%s0 + $0x78] sm:$0xff]
  %v30 = vld [vmem:[%s0 + $0x80] sm:$0xff]
  %v31 = vld [vmem:[%s0 + $0x88] sm:$0xff]
  %v32 = vld [vmem:[%s0 + $0x90] sm:$0xff]
  %v33 = vld [vmem:[%s0 + $0x98] sm:$0xff]
  %v34 = vld [vmem:[%s0 + $0xa0] sm:$0xff]
  %v35 = vld [vmem:[%s0 + $0xa8] sm:$0xff]
  %v36 = vld [vmem:[%s0 + $0xb0] sm:$0xff]
  %v37 = vld [vmem:[%s0 + $0xb8] sm:$0xff]
  %v38 = vld [vmem:[%s0 + $0xc0] sm:$0xff]
  %v39 = vld [vmem:[%s0 + $0xc8] sm:$0xff]
  %v40 = vld [vmem:[%s0 + $0xd0] sm:$0xff]
  %v41 = vld [vmem:[%s0 + $0xd8] sm:$0xff]
  %v42 = vld [vmem:[%s0 + $0xe0] sm:$0xff]
  %v43 = vld [vmem:[%s0 + $0xe8] sm:$0xff]
  %v44 = vld [vmem:[%s0 + $0xf0] sm:$0xff]
  %v45 = vld [vmem:[%s0 + $0xf8] sm:$0xff]
  %v46 = vld [vmem:[%s0 + $0x100] sm:$0xff]
  %v47 = vld [vmem:[%s0 + $0x108] sm:$0xff]
  %v48 = vld [vmem:[%s0 + $0x110] sm:$0xff]
  %v49 = vld [vmem:[%s0 + $0x118] sm:$0xff]
  %v50 = vld [vmem:[%s0 + $0x120] sm:$0xff]
  %v51 = vld [vmem:[%s0 + $0x128] sm:$0xff]
  %v52 = vld [vmem:[%s0 + $0x130] sm:$0xff]
  %v53 = vld [vmem:[%s0 + $0x138] sm:$0xff]
  %v54 = vld [vmem:[%s0 + $0x140] sm:$0xff]
  %v55 = vld [vmem:[%s0 + $0x148] sm:$0xff]
  %v56 = vld [vmem:[%s0 + $0x150] sm:$0xff]
  %v57 = vld [vmem:[%s0 + $0x158] sm:$0xff]
  %v58 = vld [vmem:[%s0 + $0x160] sm:$0xff]
  %v59 = vld [vmem:[%s0 + $0x168] sm:$0xff]
  %v60 = vld [vmem:[%s0 + $0x170] sm:$0xff]
  %v61 = vld [vmem:[%s0 + $0x178] sm:$0xff]
  %v62 = vld [vmem:[%s0 + $0x180] sm:$0xff]
  %v63 = vld [vmem:[%s0 + $0x188] sm:$0xff]
  %v64 = vld [vmem:[%s0 + $0x190] sm:$0xff]
  %v65 = vld [vmem:[%s0 + $0x198] sm:$0xff]
  %v66 = vld [vmem:[%s0 + $0x1a0] sm:$0xff]
  %v67 = vld [vmem:[%s0 + $0x1a8] sm:$0xff]
  %v68 = vld [vmem:[%s0 + $0x1b0] sm:$0xff]
  %v69 = vld [vmem:[%s0 + $0x1b8] sm:$0xff]
  %v70 = vld [vmem:[%s0 + $0x1c0] sm:$0x3]
  %v71 = vld [vmem:[%s1] sm:$0xff]
  %v72 = vld [vmem:[%s1 + $0x8] sm:$0xff]
  %v73 = vld [vmem:[%s1 + $0x10] sm:$0xff]
  %v74 = vld [vmem:[%s1 + $0x18] sm:$0xff]
  %v75 = vld [vmem:[%s2] sm:$0x1]
  %v77 = vlaneseq
  %v78 = vshrl.u32 %v77, 7
  %v79 = vsub.s32 0, %v78
  %v80 = vrot.slane %v75, %v79
  %vm82 = vcmask 261120
  %v84 = vsel %vm82, %v14, 0
  %v87 = vsel %vm82, %v15, 0
  %v90 = vsel %vm82, %v16, 0
  %v93 = vsel %vm82, %v17, 0
  %v96 = vsel %vm82, %v18, 0
  %v99 = vsel %vm82, %v19, 0
  %v102 = vsel %vm82, %v20, 0
  %v105 = vsel %vm82, %v21, 0
  %v108 = vsel %vm82, %v22, 0
  %v111 = vsel %vm82, %v23, 0
  %v114 = vsel %vm82, %v24, 0
  %v117 = vsel %vm82, %v25, 0
  %v120 = vsel %vm82, %v26, 0
  %v123 = vsel %vm82, %v27, 0
  %v126 = vsel %vm82, %v28, 0
  %v129 = vsel %vm82, %v29, 0
  %v132 = vsel %vm82, %v30, 0
  %v135 = vsel %vm82, %v31, 0
  %v138 = vsel %vm82, %v32, 0
  %v141 = vsel %vm82, %v33, 0
  %v144 = vsel %vm82, %v34, 0
  %v147 = vsel %vm82, %v35, 0
  %v150 = vsel %vm82, %v36, 0
  %v153 = vsel %vm82, %v37, 0
  %v156 = vsel %vm82, %v38, 0
  %v159 = vsel %vm82, %v39, 0
  %v162 = vsel %vm82, %v40, 0
  %v165 = vsel %vm82, %v41, 0
  %v168 = vsel %vm82, %v42, 0
  %v171 = vsel %vm82, %v43, 0
  %v174 = vsel %vm82, %v44, 0
  %v177 = vsel %vm82, %v45, 0
  %v180 = vsel %vm82, %v46, 0
  %v183 = vsel %vm82, %v47, 0
  %v186 = vsel %vm82, %v48, 0
  %v189 = vsel %vm82, %v49, 0
  %v192 = vsel %vm82, %v50, 0
  %v195 = vsel %vm82, %v51, 0
  %v198 = vsel %vm82, %v52, 0
  %v201 = vsel %vm82, %v53, 0
  %v204 = vsel %vm82, %v54, 0
  %v207 = vsel %vm82, %v55, 0
  %v210 = vsel %vm82, %v56, 0
  %v213 = vsel %vm82, %v57, 0
  %v216 = vsel %vm82, %v58, 0
  %v219 = vsel %vm82, %v59, 0
  %v222 = vsel %vm82, %v60, 0
  %v225 = vsel %vm82, %v61, 0
  %v228 = vsel %vm82, %v62, 0
  %v231 = vsel %vm82, %v63, 0
  %v234 = vsel %vm82, %v64, 0
  %v237 = vsel %vm82, %v65, 0
  %v240 = vsel %vm82, %v66, 0
  %v243 = vsel %vm82, %v67, 0
  %v246 = vsel %vm82, %v68, 0
  %v249 = vsel %vm82, %v69, 0
  %v252 = vsel %vm82, %v70, 0
  %254 = vmatprep.subr.mxu0 0.0
  %255 = vmatpush1.msra.mxu0 0.0
  %256 = vmatprep.subr.mxu0 0.0
  %257 = vmatpush1.msra.mxu0 0.0
  %258 = vmatprep.subr.mxu0 0.0
  %259 = vmatpush1.msra.mxu0 0.0
  %260 = vmatprep.subr.mxu0 0.0
  %261 = vmatpush1.msra.mxu0 0.0
  %262 = vmatprep.subr.mxu0 0.0
  %263 = vmatpush1.msra.mxu0 0.0
  %264 = vmatprep.subr.mxu0 0.0
  %265 = vmatpush1.msra.mxu0 0.0
  %266 = vmatprep.subr.mxu0 0.0
  %267 = vmatpush1.msra.mxu0 0.0
  %268 = vmatprep.subr.mxu0 0.0
  %269 = vmatpush1.msra.mxu0 0.0
  %270 = vmatprep.subr.mxu0 0.0
  %271 = vmatpush1.msra.mxu0 0.0
  %272 = vmatprep.subr.mxu0 0.0
  %273 = vmatpush1.msra.mxu0 0.0
  %274 = vmatprep.subr.mxu0 0.0
  %275 = vmatpush1.msra.mxu0 0.0
  %276 = vmatprep.subr.mxu0 0.0
  %277 = vmatpush1.msra.mxu0 0.0
  %278 = vmatprep.subr.mxu0 0.0
  %279 = vmatpush1.msra.mxu0 %v74
  %280 = vmatprep.subr.mxu0 0.0
  %281 = vmatpush1.msra.mxu0 %v73
  %282 = vmatprep.subr.mxu0 0.0
  %283 = vmatpush1.msra.mxu0 %v72
  %284 = vmatprep.subr.mxu0 0.0
  %285 = vmatpush1.msra.mxu0 %v71
  %286 = vmatprep.subr.mxu0 0.0
  %287 = vmatpush2.msra.mxu0 0.0
  %288 = vmatprep.subr.mxu0 0.0
  %289 = vmatpush2.msra.mxu0 0.0
  %290 = vmatprep.subr.mxu0 0.0
  %291 = vmatpush2.msra.mxu0 0.0
  %292 = vmatprep.subr.mxu0 0.0
  %293 = vmatpush2.msra.mxu0 0.0
  %294 = vmatprep.subr.mxu0 0.0
  %295 = vmatpush2.msra.mxu0 0.0
  %296 = vmatprep.subr.mxu0 0.0
  %297 = vmatpush2.msra.mxu0 0.0
  %298 = vmatprep.subr.mxu0 0.0
  %299 = vmatpush2.msra.mxu0 0.0
  %300 = vmatprep.subr.mxu0 0.0
  %301 = vmatpush2.msra.mxu0 0.0
  %302 = vmatprep.subr.mxu0 0.0
  %303 = vmatpush2.msra.mxu0 0.0
  %304 = vmatprep.subr.mxu0 0.0
  %305 = vmatpush2.msra.mxu0 0.0
  %306 = vmatprep.subr.mxu0 0.0
  %307 = vmatpush2.msra.mxu0 0.0
  %308 = vmatprep.subr.mxu0 0.0
  %309 = vmatpush2.msra.mxu0 0.0
  %310 = vmatprep.subr.mxu0 0.0
  %311 = vmatpush2.msra.mxu0 0.0
  %312 = vmatprep.subr.mxu0 0.0
  %313 = vmatpush2.msra.mxu0 0.0
  %314 = vmatprep.subr.mxu0 0.0
  %315 = vmatpush2.msra.mxu0 0.0
  %316 = vmatprep.subr.mxu0 0.0
  %317 = vmatpush2.msra.mxu0 0.0
  %318 = vmatprep.mubr.f32.mxu0 0.0
  %319 = vmatmul.mubr.f32.gmra.mxu0 %v84
  %v320 = vpop.f32.mrf.mxu0
  %v321 = vadd.f32 %v80, %v320
  %v322 = vpop.f32.mrf.mxu0
  %323 = vmatprep.mubr.f32.mxu0 0.0
  %324 = vmatmul.mubr.f32.gmra.mxu0 %v87
  %v325 = vpop.f32.mrf.mxu0
  %v326 = vadd.f32 %v80, %v325
  %v327 = vpop.f32.mrf.mxu0
  %328 = vmatprep.mubr.f32.mxu0 0.0
  %329 = vmatmul.mubr.f32.gmra.mxu0 %v90
  %v330 = vpop.f32.mrf.mxu0
  %v331 = vadd.f32 %v80, %v330
  %v332 = vpop.f32.mrf.mxu0
  %333 = vmatprep.mubr.f32.mxu0 0.0
  %334 = vmatmul.mubr.f32.gmra.mxu0 %v93
  %v335 = vpop.f32.mrf.mxu0
  %v336 = vadd.f32 %v80, %v335
  %v337 = vpop.f32.mrf.mxu0
  %338 = vmatprep.mubr.f32.mxu0 0.0
  %339 = vmatmul.mubr.f32.gmra.mxu0 %v96
  %v340 = vpop.f32.mrf.mxu0
  %v341 = vadd.f32 %v80, %v340
  %v342 = vpop.f32.mrf.mxu0
  %343 = vmatprep.mubr.f32.mxu0 0.0
  %344 = vmatmul.mubr.f32.gmra.mxu0 %v99
  %v345 = vpop.f32.mrf.mxu0
  %v346 = vadd.f32 %v80, %v345
  %v347 = vpop.f32.mrf.mxu0
  %348 = vmatprep.mubr.f32.mxu0 0.0
  %349 = vmatmul.mubr.f32.gmra.mxu0 %v102
  %v350 = vpop.f32.mrf.mxu0
  %v351 = vadd.f32 %v80, %v350
  %v352 = vpop.f32.mrf.mxu0
  %353 = vmatprep.mubr.f32.mxu0 0.0
  %354 = vmatmul.mubr.f32.gmra.mxu0 %v105
  %v355 = vpop.f32.mrf.mxu0
  %v356 = vadd.f32 %v80, %v355
  %v357 = vpop.f32.mrf.mxu0
  %358 = vmatprep.mubr.f32.mxu0 0.0
  %359 = vmatmul.mubr.f32.gmra.mxu0 %v108
  %v360 = vpop.f32.mrf.mxu0
  %v361 = vadd.f32 %v80, %v360
  %v362 = vpop.f32.mrf.mxu0
  %363 = vmatprep.mubr.f32.mxu0 0.0
  %364 = vmatmul.mubr.f32.gmra.mxu0 %v111
  %v365 = vpop.f32.mrf.mxu0
  %v366 = vadd.f32 %v80, %v365
  %v367 = vpop.f32.mrf.mxu0
  %368 = vmatprep.mubr.f32.mxu0 0.0
  %369 = vmatmul.mubr.f32.gmra.mxu0 %v114
  %v370 = vpop.f32.mrf.mxu0
  %v371 = vadd.f32 %v80, %v370
  %v372 = vpop.f32.mrf.mxu0
  %373 = vmatprep.mubr.f32.mxu0 0.0
  %374 = vmatmul.mubr.f32.gmra.mxu0 %v117
  %v375 = vpop.f32.mrf.mxu0
  %v376 = vadd.f32 %v80, %v375
  %v377 = vpop.f32.mrf.mxu0
  %378 = vmatprep.mubr.f32.mxu0 0.0
  %379 = vmatmul.mubr.f32.gmra.mxu0 %v120
  %v380 = vpop.f32.mrf.mxu0
  %v381 = vadd.f32 %v80, %v380
  %v382 = vpop.f32.mrf.mxu0
  %383 = vmatprep.mubr.f32.mxu0 0.0
  %384 = vmatmul.mubr.f32.gmra.mxu0 %v123
  %v385 = vpop.f32.mrf.mxu0
  %v386 = vadd.f32 %v80, %v385
  %v387 = vpop.f32.mrf.mxu0
  %388 = vmatprep.mubr.f32.mxu0 0.0
  %389 = vmatmul.mubr.f32.gmra.mxu0 %v126
  %v390 = vpop.f32.mrf.mxu0
  %v391 = vadd.f32 %v80, %v390
  %v392 = vpop.f32.mrf.mxu0
  %393 = vmatprep.mubr.f32.mxu0 0.0
  %394 = vmatmul.mubr.f32.gmra.mxu0 %v129
  %v395 = vpop.f32.mrf.mxu0
  %v396 = vadd.f32 %v80, %v395
  %v397 = vpop.f32.mrf.mxu0
  %398 = vmatprep.mubr.f32.mxu0 0.0
  %399 = vmatmul.mubr.f32.gmra.mxu0 %v132
  %v400 = vpop.f32.mrf.mxu0
  %v401 = vadd.f32 %v80, %v400
  %v402 = vpop.f32.mrf.mxu0
  %403 = vmatprep.mubr.f32.mxu0 0.0
  %404 = vmatmul.mubr.f32.gmra.mxu0 %v135
  %v405 = vpop.f32.mrf.mxu0
  %v406 = vadd.f32 %v80, %v405
  %v407 = vpop.f32.mrf.mxu0
  %408 = vmatprep.mubr.f32.mxu0 0.0
  %409 = vmatmul.mubr.f32.gmra.mxu0 %v138
  %v410 = vpop.f32.mrf.mxu0
  %v411 = vadd.f32 %v80, %v410
  %v412 = vpop.f32.mrf.mxu0
  %413 = vmatprep.mubr.f32.mxu0 0.0
  %414 = vmatmul.mubr.f32.gmra.mxu0 %v141
  %v415 = vpop.f32.mrf.mxu0
  %v416 = vadd.f32 %v80, %v415
  %v417 = vpop.f32.mrf.mxu0
  %418 = vmatprep.mubr.f32.mxu0 0.0
  %419 = vmatmul.mubr.f32.gmra.mxu0 %v144
  %v420 = vpop.f32.mrf.mxu0
  %v421 = vadd.f32 %v80, %v420
  %v422 = vpop.f32.mrf.mxu0
  %423 = vmatprep.mubr.f32.mxu0 0.0
  %424 = vmatmul.mubr.f32.gmra.mxu0 %v147
  %v425 = vpop.f32.mrf.mxu0
  %v426 = vadd.f32 %v80, %v425
  %v427 = vpop.f32.mrf.mxu0
  %428 = vmatprep.mubr.f32.mxu0 0.0
  %429 = vmatmul.mubr.f32.gmra.mxu0 %v150
  %v430 = vpop.f32.mrf.mxu0
  %v431 = vadd.f32 %v80, %v430
  %v432 = vpop.f32.mrf.mxu0
  %433 = vmatprep.mubr.f32.mxu0 0.0
  %434 = vmatmul.mubr.f32.gmra.mxu0 %v153
  %v435 = vpop.f32.mrf.mxu0
  %v436 = vadd.f32 %v80, %v435
  %v437 = vpop.f32.mrf.mxu0
  %438 = vmatprep.mubr.f32.mxu0 0.0
  %439 = vmatmul.mubr.f32.gmra.mxu0 %v156
  %v440 = vpop.f32.mrf.mxu0
  %v441 = vadd.f32 %v80, %v440
  %v442 = vpop.f32.mrf.mxu0
  %443 = vmatprep.mubr.f32.mxu0 0.0
  %444 = vmatmul.mubr.f32.gmra.mxu0 %v159
  %v445 = vpop.f32.mrf.mxu0
  %v446 = vadd.f32 %v80, %v445
  %v447 = vpop.f32.mrf.mxu0
  %448 = vmatprep.mubr.f32.mxu0 0.0
  %449 = vmatmul.mubr.f32.gmra.mxu0 %v162
  %v450 = vpop.f32.mrf.mxu0
  %v451 = vadd.f32 %v80, %v450
  %v452 = vpop.f32.mrf.mxu0
  %453 = vmatprep.mubr.f32.mxu0 0.0
  %454 = vmatmul.mubr.f32.gmra.mxu0 %v165
  %v455 = vpop.f32.mrf.mxu0
  %v456 = vadd.f32 %v80, %v455
  %v457 = vpop.f32.mrf.mxu0
  %458 = vmatprep.mubr.f32.mxu0 0.0
  %459 = vmatmul.mubr.f32.gmra.mxu0 %v168
  %v460 = vpop.f32.mrf.mxu0
  %v461 = vadd.f32 %v80, %v460
  %v462 = vpop.f32.mrf.mxu0
  %463 = vmatprep.mubr.f32.mxu0 0.0
  %464 = vmatmul.mubr.f32.gmra.mxu0 %v171
  %v465 = vpop.f32.mrf.mxu0
  %v466 = vadd.f32 %v80, %v465
  %v467 = vpop.f32.mrf.mxu0
  %468 = vmatprep.mubr.f32.mxu0 0.0
  %469 = vmatmul.mubr.f32.gmra.mxu0 %v174
  %v470 = vpop.f32.mrf.mxu0
  %v471 = vadd.f32 %v80, %v470
  %v472 = vpop.f32.mrf.mxu0
  %473 = vmatprep.mubr.f32.mxu0 0.0
  %474 = vmatmul.mubr.f32.gmra.mxu0 %v177
  %v475 = vpop.f32.mrf.mxu0
  %v476 = vadd.f32 %v80, %v475
  %v477 = vpop.f32.mrf.mxu0
  %478 = vmatprep.mubr.f32.mxu0 0.0
  %479 = vmatmul.mubr.f32.gmra.mxu0 %v180
  %v480 = vpop.f32.mrf.mxu0
  %v481 = vadd.f32 %v80, %v480
  %v482 = vpop.f32.mrf.mxu0
  %483 = vmatprep.mubr.f32.mxu0 0.0
  %484 = vmatmul.mubr.f32.gmra.mxu0 %v183
  %v485 = vpop.f32.mrf.mxu0
  %v486 = vadd.f32 %v80, %v485
  %v487 = vpop.f32.mrf.mxu0
  %488 = vmatprep.mubr.f32.mxu0 0.0
  %489 = vmatmul.mubr.f32.gmra.mxu0 %v186
  %v490 = vpop.f32.mrf.mxu0
  %v491 = vadd.f32 %v80, %v490
  %v492 = vpop.f32.mrf.mxu0
  %493 = vmatprep.mubr.f32.mxu0 0.0
  %494 = vmatmul.mubr.f32.gmra.mxu0 %v189
  %v495 = vpop.f32.mrf.mxu0
  %v496 = vadd.f32 %v80, %v495
  %v497 = vpop.f32.mrf.mxu0
  %498 = vmatprep.mubr.f32.mxu0 0.0
  %499 = vmatmul.mubr.f32.gmra.mxu0 %v192
  %v500 = vpop.f32.mrf.mxu0
  %v501 = vadd.f32 %v80, %v500
  %v502 = vpop.f32.mrf.mxu0
  %503 = vmatprep.mubr.f32.mxu0 0.0
  %504 = vmatmul.mubr.f32.gmra.mxu0 %v195
  %v505 = vpop.f32.mrf.mxu0
  %v506 = vadd.f32 %v80, %v505
  %v507 = vpop.f32.mrf.mxu0
  %508 = vmatprep.mubr.f32.mxu0 0.0
  %509 = vmatmul.mubr.f32.gmra.mxu0 %v198
  %v510 = vpop.f32.mrf.mxu0
  %v511 = vadd.f32 %v80, %v510
  %v512 = vpop.f32.mrf.mxu0
  %513 = vmatprep.mubr.f32.mxu0 0.0
  %514 = vmatmul.mubr.f32.gmra.mxu0 %v201
  %v515 = vpop.f32.mrf.mxu0
  %v516 = vadd.f32 %v80, %v515
  %v517 = vpop.f32.mrf.mxu0
  %518 = vmatprep.mubr.f32.mxu0 0.0
  %519 = vmatmul.mubr.f32.gmra.mxu0 %v204
  %v520 = vpop.f32.mrf.mxu0
  %v521 = vadd.f32 %v80, %v520
  %v522 = vpop.f32.mrf.mxu0
  %523 = vmatprep.mubr.f32.mxu0 0.0
  %524 = vmatmul.mubr.f32.gmra.mxu0 %v207
  %v525 = vpop.f32.mrf.mxu0
  %v526 = vadd.f32 %v80, %v525
  %v527 = vpop.f32.mrf.mxu0
  %528 = vmatprep.mubr.f32.mxu0 0.0
  %529 = vmatmul.mubr.f32.gmra.mxu0 %v210
  %v530 = vpop.f32.mrf.mxu0
  %v531 = vadd.f32 %v80, %v530
  %v532 = vpop.f32.mrf.mxu0
  %533 = vmatprep.mubr.f32.mxu0 0.0
  %534 = vmatmul.mubr.f32.gmra.mxu0 %v213
  %v535 = vpop.f32.mrf.mxu0
  %v536 = vadd.f32 %v80, %v535
  %v537 = vpop.f32.mrf.mxu0
  %538 = vmatprep.mubr.f32.mxu0 0.0
  %539 = vmatmul.mubr.f32.gmra.mxu0 %v216
  %v540 = vpop.f32.mrf.mxu0
  %v541 = vadd.f32 %v80, %v540
  %v542 = vpop.f32.mrf.mxu0
  %543 = vmatprep.mubr.f32.mxu0 0.0
  %544 = vmatmul.mubr.f32.gmra.mxu0 %v219
  %v545 = vpop.f32.mrf.mxu0
  %v546 = vadd.f32 %v80, %v545
  %v547 = vpop.f32.mrf.mxu0
  %548 = vmatprep.mubr.f32.mxu0 0.0
  %549 = vmatmul.mubr.f32.gmra.mxu0 %v222
  %v550 = vpop.f32.mrf.mxu0
  %v551 = vadd.f32 %v80, %v550
  %v552 = vpop.f32.mrf.mxu0
  %553 = vmatprep.mubr.f32.mxu0 0.0
  %554 = vmatmul.mubr.f32.gmra.mxu0 %v225
  %v555 = vpop.f32.mrf.mxu0
  %v556 = vadd.f32 %v80, %v555
  %v557 = vpop.f32.mrf.mxu0
  %558 = vmatprep.mubr.f32.mxu0 0.0
  %559 = vmatmul.mubr.f32.gmra.mxu0 %v228
  %v560 = vpop.f32.mrf.mxu0
  %v561 = vadd.f32 %v80, %v560
  %v562 = vpop.f32.mrf.mxu0
  %563 = vmatprep.mubr.f32.mxu0 0.0
  %564 = vmatmul.mubr.f32.gmra.mxu0 %v231
  %v565 = vpop.f32.mrf.mxu0
  %v566 = vadd.f32 %v80, %v565
  %v567 = vpop.f32.mrf.mxu0
  %568 = vmatprep.mubr.f32.mxu0 0.0
  %569 = vmatmul.mubr.f32.gmra.mxu0 %v234
  %v570 = vpop.f32.mrf.mxu0
  %v571 = vadd.f32 %v80, %v570
  %v572 = vpop.f32.mrf.mxu0
  %573 = vmatprep.mubr.f32.mxu0 0.0
  %574 = vmatmul.mubr.f32.gmra.mxu0 %v237
  %v575 = vpop.f32.mrf.mxu0
  %v576 = vadd.f32 %v80, %v575
  %v577 = vpop.f32.mrf.mxu0
  %578 = vmatprep.mubr.f32.mxu0 0.0
  %579 = vmatmul.mubr.f32.gmra.mxu0 %v240
  %v580 = vpop.f32.mrf.mxu0
  %v581 = vadd.f32 %v80, %v580
  %v582 = vpop.f32.mrf.mxu0
  %583 = vmatprep.mubr.f32.mxu0 0.0
  %584 = vmatmul.mubr.f32.gmra.mxu0 %v243
  %v585 = vpop.f32.mrf.mxu0
  %v586 = vadd.f32 %v80, %v585
  %v587 = vpop.f32.mrf.mxu0
  %588 = vmatprep.mubr.f32.mxu0 0.0
  %589 = vmatmul.mubr.f32.gmra.mxu0 %v246
  %v590 = vpop.f32.mrf.mxu0
  %v591 = vadd.f32 %v80, %v590
  %v592 = vpop.f32.mrf.mxu0
  %593 = vmatprep.mubr.f32.mxu0 0.0
  %594 = vmatmul.mubr.f32.gmra.mxu0 %v249
  %v595 = vpop.f32.mrf.mxu0
  %v596 = vadd.f32 %v80, %v595
  %v597 = vpop.f32.mrf.mxu0
  %598 = vmatprep.mubr.f32.mxu0 0.0
  %599 = vmatmul.mubr.f32.gmra.mxu0 %v252
  %v600 = vpop.f32.mrf.mxu0
  %v601 = vadd.f32 %v80, %v600
  %v602 = vpop.f32.mrf.mxu0
  %603 = vdwg.mxu0
  %vm604 = vcmask 97280
  %605 = vst.msk [vmem:[%s3] sm:$0xff] %vm604, %v321
  %606 = vst.msk [vmem:[%s3 + $0x8] sm:$0xff] %vm604, %v326
  %607 = vst.msk [vmem:[%s3 + $0x10] sm:$0xff] %vm604, %v331
  %608 = vst.msk [vmem:[%s3 + $0x18] sm:$0xff] %vm604, %v336
  %609 = vst.msk [vmem:[%s3 + $0x20] sm:$0xff] %vm604, %v341
  %610 = vst.msk [vmem:[%s3 + $0x28] sm:$0xff] %vm604, %v346
  %611 = vst.msk [vmem:[%s3 + $0x30] sm:$0xff] %vm604, %v351
  %612 = vst.msk [vmem:[%s3 + $0x38] sm:$0xff] %vm604, %v356
  %613 = vst.msk [vmem:[%s3 + $0x40] sm:$0xff] %vm604, %v361
  %614 = vst.msk [vmem:[%s3 + $0x48] sm:$0xff] %vm604, %v366
  %615 = vst.msk [vmem:[%s3 + $0x50] sm:$0xff] %vm604, %v371
  %616 = vst.msk [vmem:[%s3 + $0x58] sm:$0xff] %vm604, %v376
  %617 = vst.msk [vmem:[%s3 + $0x60] sm:$0xff] %vm604, %v381
  %618 = vst.msk [vmem:[%s3 + $0x68] sm:$0xff] %vm604, %v386
  %619 = vst.msk [vmem:[%s3 + $0x70] sm:$0xff] %vm604, %v391
  %620 = vst.msk [vmem:[%s3 + $0x78] sm:$0xff] %vm604, %v396
  %621 = vst.msk [vmem:[%s3 + $0x80] sm:$0xff] %vm604, %v401
  %622 = vst.msk [vmem:[%s3 + $0x88] sm:$0xff] %vm604, %v406
  %623 = vst.msk [vmem:[%s3 + $0x90] sm:$0xff] %vm604, %v411
  %624 = vst.msk [vmem:[%s3 + $0x98] sm:$0xff] %vm604, %v416
  %625 = vst.msk [vmem:[%s3 + $0xa0] sm:$0xff] %vm604, %v421
  %626 = vst.msk [vmem:[%s3 + $0xa8] sm:$0xff] %vm604, %v426
  %627 = vst.msk [vmem:[%s3 + $0xb0] sm:$0xff] %vm604, %v431
  %628 = vst.msk [vmem:[%s3 + $0xb8] sm:$0xff] %vm604, %v436
  %629 = vst.msk [vmem:[%s3 + $0xc0] sm:$0xff] %vm604, %v441
  %630 = vst.msk [vmem:[%s3 + $0xc8] sm:$0xff] %vm604, %v446
  %631 = vst.msk [vmem:[%s3 + $0xd0] sm:$0xff] %vm604, %v451
  %632 = vst.msk [vmem:[%s3 + $0xd8] sm:$0xff] %vm604, %v456
  %633 = vst.msk [vmem:[%s3 + $0xe0] sm:$0xff] %vm604, %v461
  %634 = vst.msk [vmem:[%s3 + $0xe8] sm:$0xff] %vm604, %v466
  %635 = vst.msk [vmem:[%s3 + $0xf0] sm:$0xff] %vm604, %v471
  %636 = vst.msk [vmem:[%s3 + $0xf8] sm:$0xff] %vm604, %v476
  %637 = vst.msk [vmem:[%s3 + $0x100] sm:$0xff] %vm604, %v481
  %638 = vst.msk [vmem:[%s3 + $0x108] sm:$0xff] %vm604, %v486
  %639 = vst.msk [vmem:[%s3 + $0x110] sm:$0xff] %vm604, %v491
  %640 = vst.msk [vmem:[%s3 + $0x118] sm:$0xff] %vm604, %v496
  %641 = vst.msk [vmem:[%s3 + $0x120] sm:$0xff] %vm604, %v501
  %642 = vst.msk [vmem:[%s3 + $0x128] sm:$0xff] %vm604, %v506
  %643 = vst.msk [vmem:[%s3 + $0x130] sm:$0xff] %vm604, %v511
  %644 = vst.msk [vmem:[%s3 + $0x138] sm:$0xff] %vm604, %v516
  %645 = vst.msk [vmem:[%s3 + $0x140] sm:$0xff] %vm604, %v521
  %646 = vst.msk [vmem:[%s3 + $0x148] sm:$0xff] %vm604, %v526
  %647 = vst.msk [vmem:[%s3 + $0x150] sm:$0xff] %vm604, %v531
  %648 = vst.msk [vmem:[%s3 + $0x158] sm:$0xff] %vm604, %v536
  %649 = vst.msk [vmem:[%s3 + $0x160] sm:$0xff] %vm604, %v541
  %650 = vst.msk [vmem:[%s3 + $0x168] sm:$0xff] %vm604, %v546
  %651 = vst.msk [vmem:[%s3 + $0x170] sm:$0xff] %vm604, %v551
  %652 = vst.msk [vmem:[%s3 + $0x178] sm:$0xff] %vm604, %v556
  %653 = vst.msk [vmem:[%s3 + $0x180] sm:$0xff] %vm604, %v561
  %654 = vst.msk [vmem:[%s3 + $0x188] sm:$0xff] %vm604, %v566
  %655 = vst.msk [vmem:[%s3 + $0x190] sm:$0xff] %vm604, %v571
  %656 = vst.msk [vmem:[%s3 + $0x198] sm:$0xff] %vm604, %v576
  %657 = vst.msk [vmem:[%s3 + $0x1a0] sm:$0xff] %vm604, %v581
  %658 = vst.msk [vmem:[%s3 + $0x1a8] sm:$0xff] %vm604, %v586
  %659 = vst.msk [vmem:[%s3 + $0x1b0] sm:$0xff] %vm604, %v591
  %660 = vst.msk [vmem:[%s3 + $0x1b8] sm:$0xff] %vm604, %v596
  %vm661 = vcmask 91136
  %662 = vst.msk [vmem:[%s3 + $0x1c0] sm:$0x3] %vm661, %v601
  // Predicated region
  $region14: #{_lambda_.13} parent=0 // pred_check
    _
  $region15: #{_lambda_.13} parent=0 // pred_check_branch
    %664 = sbr.rel (0) target = $region17
  $region16: #{_lambda_.13} parent=0 // pred_region
    _
  $region17: #{_lambda_.13} parent=0 // pred_fallthru
    _
  // Predicated region
  $region18: #{_lambda_.13} parent=0 // pred_check
    _
  $region19: #{_lambda_.13} parent=0 // pred_check_branch
    %666 = sbr.rel (0) target = $region21
  $region20: #{_lambda_.13} parent=0 // pred_region
    _
  $region21: #{_lambda_.13} parent=0 // pred_fallthru
    _

</llo_original>
